<compile_context>
chip_gen: v7x
topology: tpu7x:2x2x1
jax: 0.10.0
libtpu: 0.0.40
codegen_flags: <defaults>
</compile_context>

<pallas_src>
import functools

import jax
import jax.numpy as jnp
from jax import lax
from jax.experimental import pallas as pl
from jax.experimental.pallas import tpu as pltpu


def _round_up(x, m):
    return (x + m - 1) // m * m


def bilstm_kernel(x_ref,        # (S, Bt, E)   embedded tokens (batch tile), MXU dtype
                  wih_f_ref,    # (E, 4Hg)     forward input->gate weights (gate-lane padded)
                  bih_f_ref,    # (1, 4Hg)     forward bias (b_ih + b_hh), f32
                  wih_b_ref,    # (E, 4Hg)     backward input->gate weights
                  bih_b_ref,    # (1, 4Hg)     backward bias, f32
                  whh_f_ref,    # (Hg, 4Hg)    forward recurrent weights
                  wlab_f_ref,   # (Hg, Lp)     hidden2label, forward half
                  wlab_b_ref,   # (Hg, Lp)     hidden2label, backward half
                  blab_ref,     # (1, Lp)      label bias, f32
                  logits_ref,   # (Bt, Lp)     out
                  probs_ref,    # (Bt, Lp)     out
                  *, seq_len, hidden_g, batch_tile):
    S, Bt, Hg = seq_len, batch_tile, hidden_g
    E = x_ref.shape[-1]
    mxu_dtype = whh_f_ref.dtype

    # ---- Hoisted input projection: ONE 2-D (S*Bt, E) @ (E, 4Hg) matmul ----------
    # Full MXU row occupancy instead of S batched M=Bt matmuls; forward gates only
    # (the backward half would only ever be read at t = S-1).
    x2d = x_ref[...].reshape(S * Bt, E)                       # time-major rows
    xp_f = (jnp.dot(x2d, wih_f_ref[...],
                    preferred_element_type=jnp.float32)
            + bih_f_ref[...])                                 # (S*Bt, 4Hg), f32
    # NOTE: E (=16 here) underfills the 128-lane K dim; disappears when E >= 128.

    # ---- Forward direction: t = 0 .. S-1 -----------------------------------------
    whh_f = whh_f_ref[...]                                    # loop-invariant load
    h = jnp.zeros((Bt, Hg), jnp.float32)
    c = jnp.zeros((Bt, Hg), jnp.float32)
    # Full unroll is right for short fixed S.
    # TODO(synk): for S in the hundreds, switch to lax.fori_loop(unroll=4..8) with
    # xp_f spilled to a (S, Bt, 4Hg) VMEM scratch to bound vreg live ranges.
    for t in range(S):
        gates = (xp_f[t * Bt:(t + 1) * Bt]                    # static, sublane-aligned
                 + jnp.dot(h.astype(mxu_dtype), whh_f,
                           preferred_element_type=jnp.float32))  # (Bt, 4Hg) f32
        i = jax.nn.sigmoid(gates[:, 0 * Hg:1 * Hg])           # lane-aligned (Hg%128==0)
        f = jax.nn.sigmoid(gates[:, 1 * Hg:2 * Hg])
        g = jnp.tanh(gates[:, 2 * Hg:3 * Hg])
        o = jax.nn.sigmoid(gates[:, 3 * Hg:4 * Hg])
        c = f * c + i * g
        h = o * jnp.tanh(c)
    h_f = h
    # TODO(synk): holding W_hh in MXU weight registers across the unrolled steps
    # (pltpu.matmul_push_rhs once + matmul_acc_lhs/matmul_pop per step) would take
    # the invariant RHS push off the serial critical path; kept as jnp.dot here.

    # ---- Backward direction -------------------------------------------------------
    # lstm_out[-1]'s backward half is the backward LSTM's hidden after its FIRST
    # step (input x[S-1], zero initial h/c): the recurrent matmul and the f*c term
    # vanish, so one projection + elementwise gates suffice.
    xb = x2d[(S - 1) * Bt:S * Bt]                             # (Bt, E) = x[S-1]
    gb = (jnp.dot(xb, wih_b_ref[...], preferred_element_type=jnp.float32)
          + bih_b_ref[...])                                   # (Bt, 4Hg)
    i_b = jax.nn.sigmoid(gb[:, 0 * Hg:1 * Hg])
    g_b = jnp.tanh(gb[:, 2 * Hg:3 * Hg])
    o_b = jax.nn.sigmoid(gb[:, 3 * Hg:4 * Hg])
    h_b = o_b * jnp.tanh(i_b * g_b)

    # ---- hidden2label + sigmoid (split weight -> no lane-axis concat) ------------
    logits = (jnp.dot(h_f.astype(mxu_dtype), wlab_f_ref[...],
                      preferred_element_type=jnp.float32)
              + jnp.dot(h_b.astype(mxu_dtype), wlab_b_ref[...],
                        preferred_element_type=jnp.float32)
              + blab_ref[...])
    logits_ref[...] = logits
    probs_ref[...] = jax.nn.sigmoid(logits)


def _pack_gate_cols(w, H, Hg):
    """(..., 4H) -> (..., 4Hg): gate k occupies lanes [k*Hg, k*Hg+H), rest zero."""
    out = jnp.zeros(w.shape[:-1] + (4 * Hg,), w.dtype)
    for k in range(4):
        out = out.at[..., k * Hg:k * Hg + H].set(w[..., k * H:(k + 1) * H])
    return out


def _pick_batch_tile(B):
    b8 = _round_up(B, 8)
    Bt = min(b8, 256)                       # fill the MXU row dim when batch allows
    if b8 // Bt == 1 and b8 >= 16:          # >=2 tiles so both v7x TCs get work
        Bt = _round_up(b8 // 2, 8)
    return Bt


def bilstm_forward(x, params, *, hidden, mxu_dtype=jnp.bfloat16):
    """x: (S, B, E) float32 embedded input.  Returns (logits, sigmoid(logits)).

    mxu_dtype: dtype fed to the MXU (x + weights).  bf16 (default) gives ~2x MXU
    rate on v6e/v7x and halves HBM/VMEM traffic; all gate math stays f32.
    Use jnp.float32 for exact mode.
    """
    S, B, E = x.shape
    H = hidden
    L = params["w_label"].shape[1]
    f32 = jnp.float32

    Hg = _round_up(H, 128)                  # lane-aligned gate blocks
    Lp = _round_up(L, 128)                  # lane-dense output slab
    Bt = _pick_batch_tile(B)
    B_pad = _round_up(B, Bt)

    # ---- padding & weight packing (wrapper glue, plain XLA) ----------------------
    x_pad = (jnp.zeros((S, B_pad, E), f32).at[:, :B, :].set(x)).astype(mxu_dtype)

    def pack_ih(w):                                            # (E,4H) -> (E,4Hg)
        return _pack_gate_cols(w, H, Hg).astype(mxu_dtype)

    def pack_b(b):                                             # (1,4H) -> (1,4Hg), f32
        return _pack_gate_cols(b, H, Hg).astype(f32)

    whh_f = _pack_gate_cols(
        jnp.zeros((Hg, 4 * H), f32).at[:H, :].set(params["w_hh_f"]),
        H, Hg).astype(mxu_dtype)                               # (Hg, 4Hg)

    wlab = params["w_label"]                                   # (2H, L)
    wlab_f = jnp.zeros((Hg, Lp), f32).at[:H, :L].set(wlab[:H]).astype(mxu_dtype)
    wlab_b = jnp.zeros((Hg, Lp), f32).at[:H, :L].set(wlab[H:]).astype(mxu_dtype)
    blab = jnp.zeros((1, Lp), f32).at[:, :L].set(params["b_label"])

    args = (x_pad, pack_ih(params["w_ih_f"]), pack_b(params["b_f"]),
            pack_ih(params["w_ih_b"]), pack_b(params["b_b"]),
            whh_f, wlab_f, wlab_b, blab)

    kernel = functools.partial(bilstm_kernel, seq_len=S, hidden_g=Hg,
                               batch_tile=Bt)

    # ---- VMEM budget (re-derived so it also fits v7x's 64 MiB) -------------------
    wbytes = jnp.dtype(mxu_dtype).itemsize
    weight_bytes = ((2 * E * 4 * Hg + Hg * 4 * Hg + 2 * Hg * Lp) * wbytes
                    + (2 * 4 * Hg + Lp) * 4)
    x_bytes = 2 * S * Bt * E * wbytes                 # double-buffered x tile
    out_bytes = 2 * 2 * Bt * Lp * 4                   # 2 outputs, double-buffered
    vmem_limit = int(min(64 << 20,
                         max(32 << 20,
                             2 * (2 * weight_bytes + x_bytes + out_bytes))))

    def run(single_buffer_weights):
        if single_buffer_weights:
            def wspec(shape):                         # fetched once -> single buffer
                return pl.BlockSpec(shape, lambda b: (0,) * len(shape),
                                    pipeline_mode=pl.Buffered(1))
        else:
            def wspec(shape):
                return pl.BlockSpec(shape, lambda b: (0,) * len(shape))

        grid_spec = pltpu.PrefetchScalarGridSpec(
            num_scalar_prefetch=0,
            grid=(B_pad // Bt,),                      # batch tiles -> megacore parallel
            in_specs=[
                pl.BlockSpec((S, Bt, E), lambda b: (0, b, 0)),
                wspec((E, 4 * Hg)), wspec((1, 4 * Hg)),
                wspec((E, 4 * Hg)), wspec((1, 4 * Hg)),
                wspec((Hg, 4 * Hg)),
                wspec((Hg, Lp)), wspec((Hg, Lp)), wspec((1, Lp)),
            ],
            out_specs=(pl.BlockSpec((Bt, Lp), lambda b: (b, 0)),
                       pl.BlockSpec((Bt, Lp), lambda b: (b, 0))),
        )
        return pl.pallas_call(
            kernel,
            out_shape=(jax.ShapeDtypeStruct((B_pad, Lp), f32),
                       jax.ShapeDtypeStruct((B_pad, Lp), f32)),
            grid_spec=grid_spec,
            compiler_params=pltpu.CompilerParams(
                dimension_semantics=("parallel",),
                vmem_limit_bytes=vmem_limit),
        )(*args)

    try:
        logits_pad, probs_pad = run(True)
    except Exception:
        # pl.Buffered(1) single-buffering not accepted by this jax build; fall back
        # to the default double-buffered weight specs.
        logits_pad, probs_pad = run(False)

    return logits_pad[:B, :L], probs_pad[:B, :L]


# ----------------------- pure-JAX reference (for checking) -----------------------
def _lstm_dir_ref(x, w_ih, w_hh, b, H):
    B = x.shape[1]
    hp = lax.Precision.HIGHEST

    def step(carry, xt):
        h, c = carry
        gates = jnp.dot(xt, w_ih, precision=hp) + jnp.dot(h, w_hh, precision=hp) + b
        i = jax.nn.sigmoid(gates[:, :H])
        f = jax.nn.sigmoid(gates[:, H:2 * H])
        g = jnp.tanh(gates[:, 2 * H:3 * H])
        o = jax.nn.sigmoid(gates[:, 3 * H:])
        c = f * c + i * g
        h = o * jnp.tanh(c)
        return (h, c), h

    init = (jnp.zeros((B, H), jnp.float32), jnp.zeros((B, H), jnp.float32))
    _, hs = lax.scan(step, init, x)
    return hs  # (S, B, H)


def bilstm_ref(x, params, *, hidden):
    H = hidden
    hs_f = _lstm_dir_ref(x, params["w_ih_f"], params["w_hh_f"], params["b_f"], H)
    hs_b_rev = _lstm_dir_ref(x[::-1], params["w_ih_b"], params["w_hh_b"],
                             params["b_b"], H)
    # lstm_out[-1] = [fwd hidden after last step, bwd hidden after its 1st step]
    y_last = jnp.concatenate([hs_f[-1], hs_b_rev[0]], axis=-1)
    logits = (jnp.dot(y_last, params["w_label"], precision=lax.Precision.HIGHEST)
              + params["b_label"])
    return logits, jax.nn.sigmoid(logits)


if __name__ == "__main__":
    S, B, E, H, L, V = 8, 2, 16, 32, 4, 50   # seq, batch, embed, hidden, labels, vocab

    key = jax.random.PRNGKey(0)
    keys = jax.random.split(key, 12)
    k = 1.0 / jnp.sqrt(jnp.float32(H))

    def u(kk, shape):
        return jax.random.uniform(kk, shape, jnp.float32, -k, k)

    emb_table = jax.random.normal(keys[0], (V, E), jnp.float32)
    params = dict(
        w_ih_f=u(keys[1], (E, 4 * H)), w_hh_f=u(keys[2], (H, 4 * H)),
        b_f=u(keys[3], (1, 4 * H)) + u(keys[4], (1, 4 * H)),     # b_ih + b_hh
        w_ih_b=u(keys[5], (E, 4 * H)), w_hh_b=u(keys[6], (H, 4 * H)),
        b_b=u(keys[7], (1, 4 * H)) + u(keys[8], (1, 4 * H)),
        w_label=u(keys[9], (2 * H, L)), b_label=u(keys[10], (1, L)),
    )

    # sentence: int token ids, shape (S, B) like the PyTorch module expects.
    sentence = jax.random.randint(keys[11], (S, B), 0, V, jnp.int32)
    # Embedding lookup is gather glue (frozen pretrained table); done in plain JAX.
    x = emb_table[sentence]                                      # (S, B, E) f32

    logits, probs = bilstm_forward(x, params, hidden=H)          # bf16 MXU path
    jax.block_until_ready((logits, probs))

    ref_logits, ref_probs = bilstm_ref(x, params, hidden=H)
    assert logits.shape == (B, L) and probs.shape == (B, L)
    assert bool(jnp.all(jnp.isfinite(logits))) and bool(jnp.all(jnp.isfinite(probs)))
    # bf16 MXU operands -> loosened tolerance vs. the f32 reference (per perf review).
    assert jnp.allclose(logits, ref_logits, atol=5e-2, rtol=5e-2)
    assert jnp.allclose(probs, ref_probs, atol=5e-2, rtol=5e-2)

    print("KERNEL_OK")
</pallas_src>

<mosaic_0001>
module attributes {stable_mosaic.version = 11 : i64} {
  func.func @bilstm_kernel(%arg0: i32, %arg1: memref<8x8x16xbf16, #tpu.memory_space<vmem>>, %arg2: memref<16x512xbf16, #tpu.memory_space<vmem>>, %arg3: memref<1x512xf32, #tpu.memory_space<vmem>>, %arg4: memref<16x512xbf16, #tpu.memory_space<vmem>>, %arg5: memref<1x512xf32, #tpu.memory_space<vmem>>, %arg6: memref<128x512xbf16, #tpu.memory_space<vmem>>, %arg7: memref<128x128xbf16, #tpu.memory_space<vmem>>, %arg8: memref<128x128xbf16, #tpu.memory_space<vmem>>, %arg9: memref<1x128xf32, #tpu.memory_space<vmem>>, %arg10: memref<8x128xf32, #tpu.memory_space<vmem>>, %arg11: memref<8x128xf32, #tpu.memory_space<vmem>>) attributes {dimension_semantics = [#tpu.dimension_semantics<parallel>], iteration_bounds = array<i64: 1>, scalar_prefetch = 0 : i64, scratch_operands = 0 : i64, tpu.core_type = #tpu.core_type<tc>, window_params = [{transform_indices = @transform_0, window_bounds = array<i64: 8, 8, 16>}, {pipeline_mode = #tpu.pipeline_mode<synchronous>, transform_indices = @transform_1, window_bounds = array<i64: 16, 512>}, {pipeline_mode = #tpu.pipeline_mode<synchronous>, transform_indices = @transform_2, window_bounds = array<i64: 1, 512>}, {pipeline_mode = #tpu.pipeline_mode<synchronous>, transform_indices = @transform_3, window_bounds = array<i64: 16, 512>}, {pipeline_mode = #tpu.pipeline_mode<synchronous>, transform_indices = @transform_4, window_bounds = array<i64: 1, 512>}, {pipeline_mode = #tpu.pipeline_mode<synchronous>, transform_indices = @transform_5, window_bounds = array<i64: 128, 512>}, {pipeline_mode = #tpu.pipeline_mode<synchronous>, transform_indices = @transform_6, window_bounds = array<i64: 128, 128>}, {pipeline_mode = #tpu.pipeline_mode<synchronous>, transform_indices = @transform_7, window_bounds = array<i64: 128, 128>}, {pipeline_mode = #tpu.pipeline_mode<synchronous>, transform_indices = @transform_8, window_bounds = array<i64: 1, 128>}, {transform_indices = @transform_9, window_bounds = array<i64: 8, 128>}, {transform_indices = @transform_10, window_bounds = array<i64: 8, 128>}]} {
    %c0 = arith.constant 0 : index
    %c0_0 = arith.constant 0 : index
    %c0_1 = arith.constant 0 : index
    %0 = vector.load %arg1[%c0, %c0_0, %c0_1] : memref<8x8x16xbf16, #tpu.memory_space<vmem>>, vector<8x8x16xbf16>
    %1 = vector.shape_cast %0 : vector<8x8x16xbf16> to vector<64x16xbf16>
    %c0_2 = arith.constant 0 : index
    %c0_3 = arith.constant 0 : index
    %2 = vector.load %arg2[%c0_2, %c0_3] : memref<16x512xbf16, #tpu.memory_space<vmem>>, vector<16x512xbf16>
    %cst = arith.constant dense<0.000000e+00> : vector<64x512xf32>
    %3 = tpu.matmul %1, %2, %cst {dimension_numbers = #tpu.dot_dimension_numbers<[1], [0], [0], [1], [0, 0, 1, 1], [], []>} : vector<64x16xbf16>, vector<16x512xbf16>, vector<64x512xf32> -> vector<64x512xf32>
    %c0_4 = arith.constant 0 : index
    %c0_5 = arith.constant 0 : index
    %4 = vector.load %arg3[%c0_4, %c0_5] : memref<1x512xf32, #tpu.memory_space<vmem>>, vector<1x512xf32>
    %5 = vector.broadcast %4 : vector<1x512xf32> to vector<64x512xf32>
    %6 = arith.addf %3, %5 : vector<64x512xf32>
    %c0_6 = arith.constant 0 : index
    %c0_7 = arith.constant 0 : index
    %7 = vector.load %arg6[%c0_6, %c0_7] : memref<128x512xbf16, #tpu.memory_space<vmem>>, vector<128x512xbf16>
    %cst_8 = arith.constant 0.000000e+00 : f32
    %8 = vector.broadcast %cst_8 : f32 to vector<8x128xf32>
    %cst_9 = arith.constant 0.000000e+00 : f32
    %9 = vector.broadcast %cst_9 : f32 to vector<8x128xf32>
    %10 = vector.extract_strided_slice %6 {offsets = [0, 0], sizes = [8, 512], strides = [1, 1]} : vector<64x512xf32> to vector<8x512xf32>
    %11 = arith.truncf %8 : vector<8x128xf32> to vector<8x128xbf16>
    %cst_10 = arith.constant dense<0.000000e+00> : vector<8x512xf32>
    %12 = tpu.matmul %11, %7, %cst_10 {dimension_numbers = #tpu.dot_dimension_numbers<[1], [0], [0], [1], [0, 0, 1, 1], [], []>} : vector<8x128xbf16>, vector<128x512xbf16>, vector<8x512xf32> -> vector<8x512xf32>
    %13 = arith.addf %10, %12 : vector<8x512xf32>
    %14 = vector.extract_strided_slice %13 {offsets = [0, 0], sizes = [8, 128], strides = [1, 1]} : vector<8x512xf32> to vector<8x128xf32>
    %15 = arith.negf %14 : vector<8x128xf32>
    %16 = math.exp %15 : vector<8x128xf32>
    %cst_11 = arith.constant 1.000000e+00 : f32
    %17 = vector.broadcast %cst_11 : f32 to vector<8x128xf32>
    %18 = arith.addf %17, %16 : vector<8x128xf32>
    %19 = arith.divf %17, %18 : vector<8x128xf32>
    %20 = vector.extract_strided_slice %13 {offsets = [0, 128], sizes = [8, 128], strides = [1, 1]} : vector<8x512xf32> to vector<8x128xf32>
    %21 = arith.negf %20 : vector<8x128xf32>
    %22 = math.exp %21 : vector<8x128xf32>
    %cst_12 = arith.constant 1.000000e+00 : f32
    %23 = vector.broadcast %cst_12 : f32 to vector<8x128xf32>
    %24 = arith.addf %23, %22 : vector<8x128xf32>
    %25 = arith.divf %23, %24 : vector<8x128xf32>
    %26 = vector.extract_strided_slice %13 {offsets = [0, 256], sizes = [8, 128], strides = [1, 1]} : vector<8x512xf32> to vector<8x128xf32>
    %27 = math.tanh %26 : vector<8x128xf32>
    %28 = vector.extract_strided_slice %13 {offsets = [0, 384], sizes = [8, 128], strides = [1, 1]} : vector<8x512xf32> to vector<8x128xf32>
    %29 = arith.negf %28 : vector<8x128xf32>
    %30 = math.exp %29 : vector<8x128xf32>
    %cst_13 = arith.constant 1.000000e+00 : f32
    %31 = vector.broadcast %cst_13 : f32 to vector<8x128xf32>
    %32 = arith.addf %31, %30 : vector<8x128xf32>
    %33 = arith.divf %31, %32 : vector<8x128xf32>
    %34 = arith.mulf %25, %9 : vector<8x128xf32>
    %35 = arith.mulf %19, %27 : vector<8x128xf32>
    %36 = arith.addf %34, %35 : vector<8x128xf32>
    %37 = math.tanh %36 : vector<8x128xf32>
    %38 = arith.mulf %33, %37 : vector<8x128xf32>
    %39 = vector.extract_strided_slice %6 {offsets = [8, 0], sizes = [8, 512], strides = [1, 1]} : vector<64x512xf32> to vector<8x512xf32>
    %40 = arith.truncf %38 : vector<8x128xf32> to vector<8x128xbf16>
    %cst_14 = arith.constant dense<0.000000e+00> : vector<8x512xf32>
    %41 = tpu.matmul %40, %7, %cst_14 {dimension_numbers = #tpu.dot_dimension_numbers<[1], [0], [0], [1], [0, 0, 1, 1], [], []>} : vector<8x128xbf16>, vector<128x512xbf16>, vector<8x512xf32> -> vector<8x512xf32>
    %42 = arith.addf %39, %41 : vector<8x512xf32>
    %43 = vector.extract_strided_slice %42 {offsets = [0, 0], sizes = [8, 128], strides = [1, 1]} : vector<8x512xf32> to vector<8x128xf32>
    %44 = arith.negf %43 : vector<8x128xf32>
    %45 = math.exp %44 : vector<8x128xf32>
    %cst_15 = arith.constant 1.000000e+00 : f32
    %46 = vector.broadcast %cst_15 : f32 to vector<8x128xf32>
    %47 = arith.addf %46, %45 : vector<8x128xf32>
    %48 = arith.divf %46, %47 : vector<8x128xf32>
    %49 = vector.extract_strided_slice %42 {offsets = [0, 128], sizes = [8, 128], strides = [1, 1]} : vector<8x512xf32> to vector<8x128xf32>
    %50 = arith.negf %49 : vector<8x128xf32>
    %51 = math.exp %50 : vector<8x128xf32>
    %cst_16 = arith.constant 1.000000e+00 : f32
    %52 = vector.broadcast %cst_16 : f32 to vector<8x128xf32>
    %53 = arith.addf %52, %51 : vector<8x128xf32>
    %54 = arith.divf %52, %53 : vector<8x128xf32>
    %55 = vector.extract_strided_slice %42 {offsets = [0, 256], sizes = [8, 128], strides = [1, 1]} : vector<8x512xf32> to vector<8x128xf32>
    %56 = math.tanh %55 : vector<8x128xf32>
    %57 = vector.extract_strided_slice %42 {offsets = [0, 384], sizes = [8, 128], strides = [1, 1]} : vector<8x512xf32> to vector<8x128xf32>
    %58 = arith.negf %57 : vector<8x128xf32>
    %59 = math.exp %58 : vector<8x128xf32>
    %cst_17 = arith.constant 1.000000e+00 : f32
    %60 = vector.broadcast %cst_17 : f32 to vector<8x128xf32>
    %61 = arith.addf %60, %59 : vector<8x128xf32>
    %62 = arith.divf %60, %61 : vector<8x128xf32>
    %63 = arith.mulf %54, %36 : vector<8x128xf32>
    %64 = arith.mulf %48, %56 : vector<8x128xf32>
    %65 = arith.addf %63, %64 : vector<8x128xf32>
    %66 = math.tanh %65 : vector<8x128xf32>
    %67 = arith.mulf %62, %66 : vector<8x128xf32>
    %68 = vector.extract_strided_slice %6 {offsets = [16, 0], sizes = [8, 512], strides = [1, 1]} : vector<64x512xf32> to vector<8x512xf32>
    %69 = arith.truncf %67 : vector<8x128xf32> to vector<8x128xbf16>
    %cst_18 = arith.constant dense<0.000000e+00> : vector<8x512xf32>
    %70 = tpu.matmul %69, %7, %cst_18 {dimension_numbers = #tpu.dot_dimension_numbers<[1], [0], [0], [1], [0, 0, 1, 1], [], []>} : vector<8x128xbf16>, vector<128x512xbf16>, vector<8x512xf32> -> vector<8x512xf32>
    %71 = arith.addf %68, %70 : vector<8x512xf32>
    %72 = vector.extract_strided_slice %71 {offsets = [0, 0], sizes = [8, 128], strides = [1, 1]} : vector<8x512xf32> to vector<8x128xf32>
    %73 = arith.negf %72 : vector<8x128xf32>
    %74 = math.exp %73 : vector<8x128xf32>
    %cst_19 = arith.constant 1.000000e+00 : f32
    %75 = vector.broadcast %cst_19 : f32 to vector<8x128xf32>
    %76 = arith.addf %75, %74 : vector<8x128xf32>
    %77 = arith.divf %75, %76 : vector<8x128xf32>
    %78 = vector.extract_strided_slice %71 {offsets = [0, 128], sizes = [8, 128], strides = [1, 1]} : vector<8x512xf32> to vector<8x128xf32>
    %79 = arith.negf %78 : vector<8x128xf32>
    %80 = math.exp %79 : vector<8x128xf32>
    %cst_20 = arith.constant 1.000000e+00 : f32
    %81 = vector.broadcast %cst_20 : f32 to vector<8x128xf32>
    %82 = arith.addf %81, %80 : vector<8x128xf32>
    %83 = arith.divf %81, %82 : vector<8x128xf32>
    %84 = vector.extract_strided_slice %71 {offsets = [0, 256], sizes = [8, 128], strides = [1, 1]} : vector<8x512xf32> to vector<8x128xf32>
    %85 = math.tanh %84 : vector<8x128xf32>
    %86 = vector.extract_strided_slice %71 {offsets = [0, 384], sizes = [8, 128], strides = [1, 1]} : vector<8x512xf32> to vector<8x128xf32>
    %87 = arith.negf %86 : vector<8x128xf32>
    %88 = math.exp %87 : vector<8x128xf32>
    %cst_21 = arith.constant 1.000000e+00 : f32
    %89 = vector.broadcast %cst_21 : f32 to vector<8x128xf32>
    %90 = arith.addf %89, %88 : vector<8x128xf32>
    %91 = arith.divf %89, %90 : vector<8x128xf32>
    %92 = arith.mulf %83, %65 : vector<8x128xf32>
    %93 = arith.mulf %77, %85 : vector<8x128xf32>
    %94 = arith.addf %92, %93 : vector<8x128xf32>
    %95 = math.tanh %94 : vector<8x128xf32>
    %96 = arith.mulf %91, %95 : vector<8x128xf32>
    %97 = vector.extract_strided_slice %6 {offsets = [24, 0], sizes = [8, 512], strides = [1, 1]} : vector<64x512xf32> to vector<8x512xf32>
    %98 = arith.truncf %96 : vector<8x128xf32> to vector<8x128xbf16>
    %cst_22 = arith.constant dense<0.000000e+00> : vector<8x512xf32>
    %99 = tpu.matmul %98, %7, %cst_22 {dimension_numbers = #tpu.dot_dimension_numbers<[1], [0], [0], [1], [0, 0, 1, 1], [], []>} : vector<8x128xbf16>, vector<128x512xbf16>, vector<8x512xf32> -> vector<8x512xf32>
    %100 = arith.addf %97, %99 : vector<8x512xf32>
    %101 = vector.extract_strided_slice %100 {offsets = [0, 0], sizes = [8, 128], strides = [1, 1]} : vector<8x512xf32> to vector<8x128xf32>
    %102 = arith.negf %101 : vector<8x128xf32>
    %103 = math.exp %102 : vector<8x128xf32>
    %cst_23 = arith.constant 1.000000e+00 : f32
    %104 = vector.broadcast %cst_23 : f32 to vector<8x128xf32>
    %105 = arith.addf %104, %103 : vector<8x128xf32>
    %106 = arith.divf %104, %105 : vector<8x128xf32>
    %107 = vector.extract_strided_slice %100 {offsets = [0, 128], sizes = [8, 128], strides = [1, 1]} : vector<8x512xf32> to vector<8x128xf32>
    %108 = arith.negf %107 : vector<8x128xf32>
    %109 = math.exp %108 : vector<8x128xf32>
    %cst_24 = arith.constant 1.000000e+00 : f32
    %110 = vector.broadcast %cst_24 : f32 to vector<8x128xf32>
    %111 = arith.addf %110, %109 : vector<8x128xf32>
    %112 = arith.divf %110, %111 : vector<8x128xf32>
    %113 = vector.extract_strided_slice %100 {offsets = [0, 256], sizes = [8, 128], strides = [1, 1]} : vector<8x512xf32> to vector<8x128xf32>
    %114 = math.tanh %113 : vector<8x128xf32>
    %115 = vector.extract_strided_slice %100 {offsets = [0, 384], sizes = [8, 128], strides = [1, 1]} : vector<8x512xf32> to vector<8x128xf32>
    %116 = arith.negf %115 : vector<8x128xf32>
    %117 = math.exp %116 : vector<8x128xf32>
    %cst_25 = arith.constant 1.000000e+00 : f32
    %118 = vector.broadcast %cst_25 : f32 to vector<8x128xf32>
    %119 = arith.addf %118, %117 : vector<8x128xf32>
    %120 = arith.divf %118, %119 : vector<8x128xf32>
    %121 = arith.mulf %112, %94 : vector<8x128xf32>
    %122 = arith.mulf %106, %114 : vector<8x128xf32>
    %123 = arith.addf %121, %122 : vector<8x128xf32>
    %124 = math.tanh %123 : vector<8x128xf32>
    %125 = arith.mulf %120, %124 : vector<8x128xf32>
    %126 = vector.extract_strided_slice %6 {offsets = [32, 0], sizes = [8, 512], strides = [1, 1]} : vector<64x512xf32> to vector<8x512xf32>
    %127 = arith.truncf %125 : vector<8x128xf32> to vector<8x128xbf16>
    %cst_26 = arith.constant dense<0.000000e+00> : vector<8x512xf32>
    %128 = tpu.matmul %127, %7, %cst_26 {dimension_numbers = #tpu.dot_dimension_numbers<[1], [0], [0], [1], [0, 0, 1, 1], [], []>} : vector<8x128xbf16>, vector<128x512xbf16>, vector<8x512xf32> -> vector<8x512xf32>
    %129 = arith.addf %126, %128 : vector<8x512xf32>
    %130 = vector.extract_strided_slice %129 {offsets = [0, 0], sizes = [8, 128], strides = [1, 1]} : vector<8x512xf32> to vector<8x128xf32>
    %131 = arith.negf %130 : vector<8x128xf32>
    %132 = math.exp %131 : vector<8x128xf32>
    %cst_27 = arith.constant 1.000000e+00 : f32
    %133 = vector.broadcast %cst_27 : f32 to vector<8x128xf32>
    %134 = arith.addf %133, %132 : vector<8x128xf32>
    %135 = arith.divf %133, %134 : vector<8x128xf32>
    %136 = vector.extract_strided_slice %129 {offsets = [0, 128], sizes = [8, 128], strides = [1, 1]} : vector<8x512xf32> to vector<8x128xf32>
    %137 = arith.negf %136 : vector<8x128xf32>
    %138 = math.exp %137 : vector<8x128xf32>
    %cst_28 = arith.constant 1.000000e+00 : f32
    %139 = vector.broadcast %cst_28 : f32 to vector<8x128xf32>
    %140 = arith.addf %139, %138 : vector<8x128xf32>
    %141 = arith.divf %139, %140 : vector<8x128xf32>
    %142 = vector.extract_strided_slice %129 {offsets = [0, 256], sizes = [8, 128], strides = [1, 1]} : vector<8x512xf32> to vector<8x128xf32>
    %143 = math.tanh %142 : vector<8x128xf32>
    %144 = vector.extract_strided_slice %129 {offsets = [0, 384], sizes = [8, 128], strides = [1, 1]} : vector<8x512xf32> to vector<8x128xf32>
    %145 = arith.negf %144 : vector<8x128xf32>
    %146 = math.exp %145 : vector<8x128xf32>
    %cst_29 = arith.constant 1.000000e+00 : f32
    %147 = vector.broadcast %cst_29 : f32 to vector<8x128xf32>
    %148 = arith.addf %147, %146 : vector<8x128xf32>
    %149 = arith.divf %147, %148 : vector<8x128xf32>
    %150 = arith.mulf %141, %123 : vector<8x128xf32>
    %151 = arith.mulf %135, %143 : vector<8x128xf32>
    %152 = arith.addf %150, %151 : vector<8x128xf32>
    %153 = math.tanh %152 : vector<8x128xf32>
    %154 = arith.mulf %149, %153 : vector<8x128xf32>
    %155 = vector.extract_strided_slice %6 {offsets = [40, 0], sizes = [8, 512], strides = [1, 1]} : vector<64x512xf32> to vector<8x512xf32>
    %156 = arith.truncf %154 : vector<8x128xf32> to vector<8x128xbf16>
    %cst_30 = arith.constant dense<0.000000e+00> : vector<8x512xf32>
    %157 = tpu.matmul %156, %7, %cst_30 {dimension_numbers = #tpu.dot_dimension_numbers<[1], [0], [0], [1], [0, 0, 1, 1], [], []>} : vector<8x128xbf16>, vector<128x512xbf16>, vector<8x512xf32> -> vector<8x512xf32>
    %158 = arith.addf %155, %157 : vector<8x512xf32>
    %159 = vector.extract_strided_slice %158 {offsets = [0, 0], sizes = [8, 128], strides = [1, 1]} : vector<8x512xf32> to vector<8x128xf32>
    %160 = arith.negf %159 : vector<8x128xf32>
    %161 = math.exp %160 : vector<8x128xf32>
    %cst_31 = arith.constant 1.000000e+00 : f32
    %162 = vector.broadcast %cst_31 : f32 to vector<8x128xf32>
    %163 = arith.addf %162, %161 : vector<8x128xf32>
    %164 = arith.divf %162, %163 : vector<8x128xf32>
    %165 = vector.extract_strided_slice %158 {offsets = [0, 128], sizes = [8, 128], strides = [1, 1]} : vector<8x512xf32> to vector<8x128xf32>
    %166 = arith.negf %165 : vector<8x128xf32>
    %167 = math.exp %166 : vector<8x128xf32>
    %cst_32 = arith.constant 1.000000e+00 : f32
    %168 = vector.broadcast %cst_32 : f32 to vector<8x128xf32>
    %169 = arith.addf %168, %167 : vector<8x128xf32>
    %170 = arith.divf %168, %169 : vector<8x128xf32>
    %171 = vector.extract_strided_slice %158 {offsets = [0, 256], sizes = [8, 128], strides = [1, 1]} : vector<8x512xf32> to vector<8x128xf32>
    %172 = math.tanh %171 : vector<8x128xf32>
    %173 = vector.extract_strided_slice %158 {offsets = [0, 384], sizes = [8, 128], strides = [1, 1]} : vector<8x512xf32> to vector<8x128xf32>
    %174 = arith.negf %173 : vector<8x128xf32>
    %175 = math.exp %174 : vector<8x128xf32>
    %cst_33 = arith.constant 1.000000e+00 : f32
    %176 = vector.broadcast %cst_33 : f32 to vector<8x128xf32>
    %177 = arith.addf %176, %175 : vector<8x128xf32>
    %178 = arith.divf %176, %177 : vector<8x128xf32>
    %179 = arith.mulf %170, %152 : vector<8x128xf32>
    %180 = arith.mulf %164, %172 : vector<8x128xf32>
    %181 = arith.addf %179, %180 : vector<8x128xf32>
    %182 = math.tanh %181 : vector<8x128xf32>
    %183 = arith.mulf %178, %182 : vector<8x128xf32>
    %184 = vector.extract_strided_slice %6 {offsets = [48, 0], sizes = [8, 512], strides = [1, 1]} : vector<64x512xf32> to vector<8x512xf32>
    %185 = arith.truncf %183 : vector<8x128xf32> to vector<8x128xbf16>
    %cst_34 = arith.constant dense<0.000000e+00> : vector<8x512xf32>
    %186 = tpu.matmul %185, %7, %cst_34 {dimension_numbers = #tpu.dot_dimension_numbers<[1], [0], [0], [1], [0, 0, 1, 1], [], []>} : vector<8x128xbf16>, vector<128x512xbf16>, vector<8x512xf32> -> vector<8x512xf32>
    %187 = arith.addf %184, %186 : vector<8x512xf32>
    %188 = vector.extract_strided_slice %187 {offsets = [0, 0], sizes = [8, 128], strides = [1, 1]} : vector<8x512xf32> to vector<8x128xf32>
    %189 = arith.negf %188 : vector<8x128xf32>
    %190 = math.exp %189 : vector<8x128xf32>
    %cst_35 = arith.constant 1.000000e+00 : f32
    %191 = vector.broadcast %cst_35 : f32 to vector<8x128xf32>
    %192 = arith.addf %191, %190 : vector<8x128xf32>
    %193 = arith.divf %191, %192 : vector<8x128xf32>
    %194 = vector.extract_strided_slice %187 {offsets = [0, 128], sizes = [8, 128], strides = [1, 1]} : vector<8x512xf32> to vector<8x128xf32>
    %195 = arith.negf %194 : vector<8x128xf32>
    %196 = math.exp %195 : vector<8x128xf32>
    %cst_36 = arith.constant 1.000000e+00 : f32
    %197 = vector.broadcast %cst_36 : f32 to vector<8x128xf32>
    %198 = arith.addf %197, %196 : vector<8x128xf32>
    %199 = arith.divf %197, %198 : vector<8x128xf32>
    %200 = vector.extract_strided_slice %187 {offsets = [0, 256], sizes = [8, 128], strides = [1, 1]} : vector<8x512xf32> to vector<8x128xf32>
    %201 = math.tanh %200 : vector<8x128xf32>
    %202 = vector.extract_strided_slice %187 {offsets = [0, 384], sizes = [8, 128], strides = [1, 1]} : vector<8x512xf32> to vector<8x128xf32>
    %203 = arith.negf %202 : vector<8x128xf32>
    %204 = math.exp %203 : vector<8x128xf32>
    %cst_37 = arith.constant 1.000000e+00 : f32
    %205 = vector.broadcast %cst_37 : f32 to vector<8x128xf32>
    %206 = arith.addf %205, %204 : vector<8x128xf32>
    %207 = arith.divf %205, %206 : vector<8x128xf32>
    %208 = arith.mulf %199, %181 : vector<8x128xf32>
    %209 = arith.mulf %193, %201 : vector<8x128xf32>
    %210 = arith.addf %208, %209 : vector<8x128xf32>
    %211 = math.tanh %210 : vector<8x128xf32>
    %212 = arith.mulf %207, %211 : vector<8x128xf32>
    %213 = vector.extract_strided_slice %6 {offsets = [56, 0], sizes = [8, 512], strides = [1, 1]} : vector<64x512xf32> to vector<8x512xf32>
    %214 = arith.truncf %212 : vector<8x128xf32> to vector<8x128xbf16>
    %cst_38 = arith.constant dense<0.000000e+00> : vector<8x512xf32>
    %215 = tpu.matmul %214, %7, %cst_38 {dimension_numbers = #tpu.dot_dimension_numbers<[1], [0], [0], [1], [0, 0, 1, 1], [], []>} : vector<8x128xbf16>, vector<128x512xbf16>, vector<8x512xf32> -> vector<8x512xf32>
    %216 = arith.addf %213, %215 : vector<8x512xf32>
    %217 = vector.extract_strided_slice %216 {offsets = [0, 0], sizes = [8, 128], strides = [1, 1]} : vector<8x512xf32> to vector<8x128xf32>
    %218 = arith.negf %217 : vector<8x128xf32>
    %219 = math.exp %218 : vector<8x128xf32>
    %cst_39 = arith.constant 1.000000e+00 : f32
    %220 = vector.broadcast %cst_39 : f32 to vector<8x128xf32>
    %221 = arith.addf %220, %219 : vector<8x128xf32>
    %222 = arith.divf %220, %221 : vector<8x128xf32>
    %223 = vector.extract_strided_slice %216 {offsets = [0, 128], sizes = [8, 128], strides = [1, 1]} : vector<8x512xf32> to vector<8x128xf32>
    %224 = arith.negf %223 : vector<8x128xf32>
    %225 = math.exp %224 : vector<8x128xf32>
    %cst_40 = arith.constant 1.000000e+00 : f32
    %226 = vector.broadcast %cst_40 : f32 to vector<8x128xf32>
    %227 = arith.addf %226, %225 : vector<8x128xf32>
    %228 = arith.divf %226, %227 : vector<8x128xf32>
    %229 = vector.extract_strided_slice %216 {offsets = [0, 256], sizes = [8, 128], strides = [1, 1]} : vector<8x512xf32> to vector<8x128xf32>
    %230 = math.tanh %229 : vector<8x128xf32>
    %231 = vector.extract_strided_slice %216 {offsets = [0, 384], sizes = [8, 128], strides = [1, 1]} : vector<8x512xf32> to vector<8x128xf32>
    %232 = arith.negf %231 : vector<8x128xf32>
    %233 = math.exp %232 : vector<8x128xf32>
    %cst_41 = arith.constant 1.000000e+00 : f32
    %234 = vector.broadcast %cst_41 : f32 to vector<8x128xf32>
    %235 = arith.addf %234, %233 : vector<8x128xf32>
    %236 = arith.divf %234, %235 : vector<8x128xf32>
    %237 = arith.mulf %228, %210 : vector<8x128xf32>
    %238 = arith.mulf %222, %230 : vector<8x128xf32>
    %239 = arith.addf %237, %238 : vector<8x128xf32>
    %240 = math.tanh %239 : vector<8x128xf32>
    %241 = arith.mulf %236, %240 : vector<8x128xf32>
    %242 = vector.extract_strided_slice %1 {offsets = [56, 0], sizes = [8, 16], strides = [1, 1]} : vector<64x16xbf16> to vector<8x16xbf16>
    %c0_42 = arith.constant 0 : index
    %c0_43 = arith.constant 0 : index
    %243 = vector.load %arg4[%c0_42, %c0_43] : memref<16x512xbf16, #tpu.memory_space<vmem>>, vector<16x512xbf16>
    %cst_44 = arith.constant dense<0.000000e+00> : vector<8x512xf32>
    %244 = tpu.matmul %242, %243, %cst_44 {dimension_numbers = #tpu.dot_dimension_numbers<[1], [0], [0], [1], [0, 0, 1, 1], [], []>} : vector<8x16xbf16>, vector<16x512xbf16>, vector<8x512xf32> -> vector<8x512xf32>
    %c0_45 = arith.constant 0 : index
    %c0_46 = arith.constant 0 : index
    %245 = vector.load %arg5[%c0_45, %c0_46] : memref<1x512xf32, #tpu.memory_space<vmem>>, vector<1x512xf32>
    %246 = vector.broadcast %245 : vector<1x512xf32> to vector<8x512xf32>
    %247 = arith.addf %244, %246 : vector<8x512xf32>
    %248 = vector.extract_strided_slice %247 {offsets = [0, 0], sizes = [8, 128], strides = [1, 1]} : vector<8x512xf32> to vector<8x128xf32>
    %249 = arith.negf %248 : vector<8x128xf32>
    %250 = math.exp %249 : vector<8x128xf32>
    %cst_47 = arith.constant 1.000000e+00 : f32
    %251 = vector.broadcast %cst_47 : f32 to vector<8x128xf32>
    %252 = arith.addf %251, %250 : vector<8x128xf32>
    %253 = arith.divf %251, %252 : vector<8x128xf32>
    %254 = vector.extract_strided_slice %247 {offsets = [0, 256], sizes = [8, 128], strides = [1, 1]} : vector<8x512xf32> to vector<8x128xf32>
    %255 = math.tanh %254 : vector<8x128xf32>
    %256 = vector.extract_strided_slice %247 {offsets = [0, 384], sizes = [8, 128], strides = [1, 1]} : vector<8x512xf32> to vector<8x128xf32>
    %257 = arith.negf %256 : vector<8x128xf32>
    %258 = math.exp %257 : vector<8x128xf32>
    %cst_48 = arith.constant 1.000000e+00 : f32
    %259 = vector.broadcast %cst_48 : f32 to vector<8x128xf32>
    %260 = arith.addf %259, %258 : vector<8x128xf32>
    %261 = arith.divf %259, %260 : vector<8x128xf32>
    %262 = arith.mulf %253, %255 : vector<8x128xf32>
    %263 = math.tanh %262 : vector<8x128xf32>
    %264 = arith.mulf %261, %263 : vector<8x128xf32>
    %265 = arith.truncf %241 : vector<8x128xf32> to vector<8x128xbf16>
    %c0_49 = arith.constant 0 : index
    %c0_50 = arith.constant 0 : index
    %266 = vector.load %arg7[%c0_49, %c0_50] : memref<128x128xbf16, #tpu.memory_space<vmem>>, vector<128x128xbf16>
    %cst_51 = arith.constant dense<0.000000e+00> : vector<8x128xf32>
    %267 = tpu.matmul %265, %266, %cst_51 {dimension_numbers = #tpu.dot_dimension_numbers<[1], [0], [0], [1], [0, 0, 1, 1], [], []>} : vector<8x128xbf16>, vector<128x128xbf16>, vector<8x128xf32> -> vector<8x128xf32>
    %268 = arith.truncf %264 : vector<8x128xf32> to vector<8x128xbf16>
    %c0_52 = arith.constant 0 : index
    %c0_53 = arith.constant 0 : index
    %269 = vector.load %arg8[%c0_52, %c0_53] : memref<128x128xbf16, #tpu.memory_space<vmem>>, vector<128x128xbf16>
    %cst_54 = arith.constant dense<0.000000e+00> : vector<8x128xf32>
    %270 = tpu.matmul %268, %269, %cst_54 {dimension_numbers = #tpu.dot_dimension_numbers<[1], [0], [0], [1], [0, 0, 1, 1], [], []>} : vector<8x128xbf16>, vector<128x128xbf16>, vector<8x128xf32> -> vector<8x128xf32>
    %271 = arith.addf %267, %270 : vector<8x128xf32>
    %c0_55 = arith.constant 0 : index
    %c0_56 = arith.constant 0 : index
    %272 = vector.load %arg9[%c0_55, %c0_56] : memref<1x128xf32, #tpu.memory_space<vmem>>, vector<1x128xf32>
    %273 = vector.broadcast %272 : vector<1x128xf32> to vector<8x128xf32>
    %274 = arith.addf %271, %273 : vector<8x128xf32>
    %c0_57 = arith.constant 0 : index
    %c0_58 = arith.constant 0 : index
    %275 = vector.load %arg10[%c0_57, %c0_58] : memref<8x128xf32, #tpu.memory_space<vmem>>, vector<8x128xf32>
    tpu.vector_store %arg10[%c0_57, %c0_58], %274 {strides = array<i32>} : memref<8x128xf32, #tpu.memory_space<vmem>>, vector<8x128xf32>,
    %276 = arith.negf %274 : vector<8x128xf32>
    %277 = math.exp %276 : vector<8x128xf32>
    %cst_59 = arith.constant 1.000000e+00 : f32
    %278 = vector.broadcast %cst_59 : f32 to vector<8x128xf32>
    %279 = arith.addf %278, %277 : vector<8x128xf32>
    %280 = arith.divf %278, %279 : vector<8x128xf32>
    %c0_60 = arith.constant 0 : index
    %c0_61 = arith.constant 0 : index
    %281 = vector.load %arg11[%c0_60, %c0_61] : memref<8x128xf32, #tpu.memory_space<vmem>>, vector<8x128xf32>
    tpu.vector_store %arg11[%c0_60, %c0_61], %280 {strides = array<i32>} : memref<8x128xf32, #tpu.memory_space<vmem>>, vector<8x128xf32>,
    return
  }
  func.func @transform_0(%arg0: i32) -> (i32, i32, i32) {
    %c0_i32 = arith.constant 0 : i32
    %c0_i32_0 = arith.constant 0 : i32
    %c0_i32_1 = arith.constant 0 : i32
    return %c0_i32, %arg0, %c0_i32_0 : i32, i32, i32
  }
  func.func @transform_1(%arg0: i32) -> (i32, i32) {
    %c0_i32 = arith.constant 0 : i32
    %c0_i32_0 = arith.constant 0 : i32
    %c0_i32_1 = arith.constant 0 : i32
    return %c0_i32, %c0_i32_0 : i32, i32
  }
  func.func @transform_2(%arg0: i32) -> (i32, i32) {
    %c0_i32 = arith.constant 0 : i32
    %c0_i32_0 = arith.constant 0 : i32
    %c0_i32_1 = arith.constant 0 : i32
    return %c0_i32, %c0_i32_0 : i32, i32
  }
  func.func @transform_3(%arg0: i32) -> (i32, i32) {
    %c0_i32 = arith.constant 0 : i32
    %c0_i32_0 = arith.constant 0 : i32
    %c0_i32_1 = arith.constant 0 : i32
    return %c0_i32, %c0_i32_0 : i32, i32
  }
  func.func @transform_4(%arg0: i32) -> (i32, i32) {
    %c0_i32 = arith.constant 0 : i32
    %c0_i32_0 = arith.constant 0 : i32
    %c0_i32_1 = arith.constant 0 : i32
    return %c0_i32, %c0_i32_0 : i32, i32
  }
  func.func @transform_5(%arg0: i32) -> (i32, i32) {
    %c0_i32 = arith.constant 0 : i32
    %c0_i32_0 = arith.constant 0 : i32
    %c0_i32_1 = arith.constant 0 : i32
    return %c0_i32, %c0_i32_0 : i32, i32
  }
  func.func @transform_6(%arg0: i32) -> (i32, i32) {
    %c0_i32 = arith.constant 0 : i32
    %c0_i32_0 = arith.constant 0 : i32
    %c0_i32_1 = arith.constant 0 : i32
    return %c0_i32, %c0_i32_0 : i32, i32
  }
  func.func @transform_7(%arg0: i32) -> (i32, i32) {
    %c0_i32 = arith.constant 0 : i32
    %c0_i32_0 = arith.constant 0 : i32
    %c0_i32_1 = arith.constant 0 : i32
    return %c0_i32, %c0_i32_0 : i32, i32
  }
  func.func @transform_8(%arg0: i32) -> (i32, i32) {
    %c0_i32 = arith.constant 0 : i32
    %c0_i32_0 = arith.constant 0 : i32
    %c0_i32_1 = arith.constant 0 : i32
    return %c0_i32, %c0_i32_0 : i32, i32
  }
  func.func @transform_9(%arg0: i32) -> (i32, i32) {
    %c0_i32 = arith.constant 0 : i32
    %c0_i32_0 = arith.constant 0 : i32
    return %arg0, %c0_i32 : i32, i32
  }
  func.func @transform_10(%arg0: i32) -> (i32, i32) {
    %c0_i32 = arith.constant 0 : i32
    %c0_i32_0 = arith.constant 0 : i32
    return %arg0, %c0_i32 : i32, i32
  }
}

module attributes {stable_mosaic.version = 11 : i64} {
  func.func @bilstm_kernel(%arg0: i32, %arg1: memref<8x8x16xbf16, #tpu.memory_space<vmem>>, %arg2: memref<16x512xbf16, #tpu.memory_space<vmem>>, %arg3: memref<1x512xf32, #tpu.memory_space<vmem>>, %arg4: memref<16x512xbf16, #tpu.memory_space<vmem>>, %arg5: memref<1x512xf32, #tpu.memory_space<vmem>>, %arg6: memref<128x512xbf16, #tpu.memory_space<vmem>>, %arg7: memref<128x128xbf16, #tpu.memory_space<vmem>>, %arg8: memref<128x128xbf16, #tpu.memory_space<vmem>>, %arg9: memref<1x128xf32, #tpu.memory_space<vmem>>, %arg10: memref<8x128xf32, #tpu.memory_space<vmem>>, %arg11: memref<8x128xf32, #tpu.memory_space<vmem>>) attributes {dimension_semantics = [#tpu.dimension_semantics<parallel>], iteration_bounds = array<i64: 1>, scalar_prefetch = 0 : i64, scratch_operands = 0 : i64, tpu.core_type = #tpu.core_type<tc>, window_params = [{transform_indices = @transform_0, window_bounds = array<i64: 8, 8, 16>}, {pipeline_mode = #tpu.pipeline_mode<synchronous>, transform_indices = @transform_1, window_bounds = array<i64: 16, 512>}, {pipeline_mode = #tpu.pipeline_mode<synchronous>, transform_indices = @transform_2, window_bounds = array<i64: 1, 512>}, {pipeline_mode = #tpu.pipeline_mode<synchronous>, transform_indices = @transform_3, window_bounds = array<i64: 16, 512>}, {pipeline_mode = #tpu.pipeline_mode<synchronous>, transform_indices = @transform_4, window_bounds = array<i64: 1, 512>}, {pipeline_mode = #tpu.pipeline_mode<synchronous>, transform_indices = @transform_5, window_bounds = array<i64: 128, 512>}, {pipeline_mode = #tpu.pipeline_mode<synchronous>, transform_indices = @transform_6, window_bounds = array<i64: 128, 128>}, {pipeline_mode = #tpu.pipeline_mode<synchronous>, transform_indices = @transform_7, window_bounds = array<i64: 128, 128>}, {pipeline_mode = #tpu.pipeline_mode<synchronous>, transform_indices = @transform_8, window_bounds = array<i64: 1, 128>}, {transform_indices = @transform_9, window_bounds = array<i64: 8, 128>}, {transform_indices = @transform_10, window_bounds = array<i64: 8, 128>}]} {
    %c0 = arith.constant 0 : index
    %c0_0 = arith.constant 0 : index
    %c0_1 = arith.constant 0 : index
    %0 = vector.load %arg1[%c0, %c0_0, %c0_1] : memref<8x8x16xbf16, #tpu.memory_space<vmem>>, vector<8x8x16xbf16>
    %1 = vector.shape_cast %0 : vector<8x8x16xbf16> to vector<64x16xbf16>
    %c0_2 = arith.constant 0 : index
    %c0_3 = arith.constant 0 : index
    %2 = vector.load %arg2[%c0_2, %c0_3] : memref<16x512xbf16, #tpu.memory_space<vmem>>, vector<16x512xbf16>
    %cst = arith.constant dense<0.000000e+00> : vector<64x512xf32>
    %3 = tpu.matmul %1, %2, %cst {dimension_numbers = #tpu.dot_dimension_numbers<[1], [0], [0], [1], [0, 0, 1, 1], [], []>} : vector<64x16xbf16>, vector<16x512xbf16>, vector<64x512xf32> -> vector<64x512xf32>
    %c0_4 = arith.constant 0 : index
    %c0_5 = arith.constant 0 : index
    %4 = vector.load %arg3[%c0_4, %c0_5] : memref<1x512xf32, #tpu.memory_space<vmem>>, vector<1x512xf32>
    %5 = vector.broadcast %4 : vector<1x512xf32> to vector<64x512xf32>
    %6 = arith.addf %3, %5 : vector<64x512xf32>
    %c0_6 = arith.constant 0 : index
    %c0_7 = arith.constant 0 : index
    %7 = vector.load %arg6[%c0_6, %c0_7] : memref<128x512xbf16, #tpu.memory_space<vmem>>, vector<128x512xbf16>
    %cst_8 = arith.constant 0.000000e+00 : f32
    %8 = vector.broadcast %cst_8 : f32 to vector<8x128xf32>
    %cst_9 = arith.constant 0.000000e+00 : f32
    %9 = vector.broadcast %cst_9 : f32 to vector<8x128xf32>
    %10 = vector.extract_strided_slice %6 {offsets = [0, 0], sizes = [8, 512], strides = [1, 1]} : vector<64x512xf32> to vector<8x512xf32>
    %11 = arith.truncf %8 : vector<8x128xf32> to vector<8x128xbf16>
    %cst_10 = arith.constant dense<0.000000e+00> : vector<8x512xf32>
    %12 = tpu.matmul %11, %7, %cst_10 {dimension_numbers = #tpu.dot_dimension_numbers<[1], [0], [0], [1], [0, 0, 1, 1], [], []>} : vector<8x128xbf16>, vector<128x512xbf16>, vector<8x512xf32> -> vector<8x512xf32>
    %13 = arith.addf %10, %12 : vector<8x512xf32>
    %14 = vector.extract_strided_slice %13 {offsets = [0, 0], sizes = [8, 128], strides = [1, 1]} : vector<8x512xf32> to vector<8x128xf32>
    %15 = arith.negf %14 : vector<8x128xf32>
    %16 = math.exp %15 : vector<8x128xf32>
    %cst_11 = arith.constant 1.000000e+00 : f32
    %17 = vector.broadcast %cst_11 : f32 to vector<8x128xf32>
    %18 = arith.addf %17, %16 : vector<8x128xf32>
    %19 = arith.divf %17, %18 : vector<8x128xf32>
    %20 = vector.extract_strided_slice %13 {offsets = [0, 128], sizes = [8, 128], strides = [1, 1]} : vector<8x512xf32> to vector<8x128xf32>
    %21 = arith.negf %20 : vector<8x128xf32>
    %22 = math.exp %21 : vector<8x128xf32>
    %cst_12 = arith.constant 1.000000e+00 : f32
    %23 = vector.broadcast %cst_12 : f32 to vector<8x128xf32>
    %24 = arith.addf %23, %22 : vector<8x128xf32>
    %25 = arith.divf %23, %24 : vector<8x128xf32>
    %26 = vector.extract_strided_slice %13 {offsets = [0, 256], sizes = [8, 128], strides = [1, 1]} : vector<8x512xf32> to vector<8x128xf32>
    %27 = math.tanh %26 : vector<8x128xf32>
    %28 = vector.extract_strided_slice %13 {offsets = [0, 384], sizes = [8, 128], strides = [1, 1]} : vector<8x512xf32> to vector<8x128xf32>
    %29 = arith.negf %28 : vector<8x128xf32>
    %30 = math.exp %29 : vector<8x128xf32>
    %cst_13 = arith.constant 1.000000e+00 : f32
    %31 = vector.broadcast %cst_13 : f32 to vector<8x128xf32>
    %32 = arith.addf %31, %30 : vector<8x128xf32>
    %33 = arith.divf %31, %32 : vector<8x128xf32>
    %34 = arith.mulf %25, %9 : vector<8x128xf32>
    %35 = arith.mulf %19, %27 : vector<8x128xf32>
    %36 = arith.addf %34, %35 : vector<8x128xf32>
    %37 = math.tanh %36 : vector<8x128xf32>
    %38 = arith.mulf %33, %37 : vector<8x128xf32>
    %39 = vector.extract_strided_slice %6 {offsets = [8, 0], sizes = [8, 512], strides = [1, 1]} : vector<64x512xf32> to vector<8x512xf32>
    %40 = arith.truncf %38 : vector<8x128xf32> to vector<8x128xbf16>
    %cst_14 = arith.constant dense<0.000000e+00> : vector<8x512xf32>
    %41 = tpu.matmul %40, %7, %cst_14 {dimension_numbers = #tpu.dot_dimension_numbers<[1], [0], [0], [1], [0, 0, 1, 1], [], []>} : vector<8x128xbf16>, vector<128x512xbf16>, vector<8x512xf32> -> vector<8x512xf32>
    %42 = arith.addf %39, %41 : vector<8x512xf32>
    %43 = vector.extract_strided_slice %42 {offsets = [0, 0], sizes = [8, 128], strides = [1, 1]} : vector<8x512xf32> to vector<8x128xf32>
    %44 = arith.negf %43 : vector<8x128xf32>
    %45 = math.exp %44 : vector<8x128xf32>
    %cst_15 = arith.constant 1.000000e+00 : f32
    %46 = vector.broadcast %cst_15 : f32 to vector<8x128xf32>
    %47 = arith.addf %46, %45 : vector<8x128xf32>
    %48 = arith.divf %46, %47 : vector<8x128xf32>
    %49 = vector.extract_strided_slice %42 {offsets = [0, 128], sizes = [8, 128], strides = [1, 1]} : vector<8x512xf32> to vector<8x128xf32>
    %50 = arith.negf %49 : vector<8x128xf32>
    %51 = math.exp %50 : vector<8x128xf32>
    %cst_16 = arith.constant 1.000000e+00 : f32
    %52 = vector.broadcast %cst_16 : f32 to vector<8x128xf32>
    %53 = arith.addf %52, %51 : vector<8x128xf32>
    %54 = arith.divf %52, %53 : vector<8x128xf32>
    %55 = vector.extract_strided_slice %42 {offsets = [0, 256], sizes = [8, 128], strides = [1, 1]} : vector<8x512xf32> to vector<8x128xf32>
    %56 = math.tanh %55 : vector<8x128xf32>
    %57 = vector.extract_strided_slice %42 {offsets = [0, 384], sizes = [8, 128], strides = [1, 1]} : vector<8x512xf32> to vector<8x128xf32>
    %58 = arith.negf %57 : vector<8x128xf32>
    %59 = math.exp %58 : vector<8x128xf32>
    %cst_17 = arith.constant 1.000000e+00 : f32
    %60 = vector.broadcast %cst_17 : f32 to vector<8x128xf32>
    %61 = arith.addf %60, %59 : vector<8x128xf32>
    %62 = arith.divf %60, %61 : vector<8x128xf32>
    %63 = arith.mulf %54, %36 : vector<8x128xf32>
    %64 = arith.mulf %48, %56 : vector<8x128xf32>
    %65 = arith.addf %63, %64 : vector<8x128xf32>
    %66 = math.tanh %65 : vector<8x128xf32>
    %67 = arith.mulf %62, %66 : vector<8x128xf32>
    %68 = vector.extract_strided_slice %6 {offsets = [16, 0], sizes = [8, 512], strides = [1, 1]} : vector<64x512xf32> to vector<8x512xf32>
    %69 = arith.truncf %67 : vector<8x128xf32> to vector<8x128xbf16>
    %cst_18 = arith.constant dense<0.000000e+00> : vector<8x512xf32>
    %70 = tpu.matmul %69, %7, %cst_18 {dimension_numbers = #tpu.dot_dimension_numbers<[1], [0], [0], [1], [0, 0, 1, 1], [], []>} : vector<8x128xbf16>, vector<128x512xbf16>, vector<8x512xf32> -> vector<8x512xf32>
    %71 = arith.addf %68, %70 : vector<8x512xf32>
    %72 = vector.extract_strided_slice %71 {offsets = [0, 0], sizes = [8, 128], strides = [1, 1]} : vector<8x512xf32> to vector<8x128xf32>
    %73 = arith.negf %72 : vector<8x128xf32>
    %74 = math.exp %73 : vector<8x128xf32>
    %cst_19 = arith.constant 1.000000e+00 : f32
    %75 = vector.broadcast %cst_19 : f32 to vector<8x128xf32>
    %76 = arith.addf %75, %74 : vector<8x128xf32>
    %77 = arith.divf %75, %76 : vector<8x128xf32>
    %78 = vector.extract_strided_slice %71 {offsets = [0, 128], sizes = [8, 128], strides = [1, 1]} : vector<8x512xf32> to vector<8x128xf32>
    %79 = arith.negf %78 : vector<8x128xf32>
    %80 = math.exp %79 : vector<8x128xf32>
    %cst_20 = arith.constant 1.000000e+00 : f32
    %81 = vector.broadcast %cst_20 : f32 to vector<8x128xf32>
    %82 = arith.addf %81, %80 : vector<8x128xf32>
    %83 = arith.divf %81, %82 : vector<8x128xf32>
    %84 = vector.extract_strided_slice %71 {offsets = [0, 256], sizes = [8, 128], strides = [1, 1]} : vector<8x512xf32> to vector<8x128xf32>
    %85 = math.tanh %84 : vector<8x128xf32>
    %86 = vector.extract_strided_slice %71 {offsets = [0, 384], sizes = [8, 128], strides = [1, 1]} : vector<8x512xf32> to vector<8x128xf32>
    %87 = arith.negf %86 : vector<8x128xf32>
    %88 = math.exp %87 : vector<8x128xf32>
    %cst_21 = arith.constant 1.000000e+00 : f32
    %89 = vector.broadcast %cst_21 : f32 to vector<8x128xf32>
    %90 = arith.addf %89, %88 : vector<8x128xf32>
    %91 = arith.divf %89, %90 : vector<8x128xf32>
    %92 = arith.mulf %83, %65 : vector<8x128xf32>
    %93 = arith.mulf %77, %85 : vector<8x128xf32>
    %94 = arith.addf %92, %93 : vector<8x128xf32>
    %95 = math.tanh %94 : vector<8x128xf32>
    %96 = arith.mulf %91, %95 : vector<8x128xf32>
    %97 = vector.extract_strided_slice %6 {offsets = [24, 0], sizes = [8, 512], strides = [1, 1]} : vector<64x512xf32> to vector<8x512xf32>
    %98 = arith.truncf %96 : vector<8x128xf32> to vector<8x128xbf16>
    %cst_22 = arith.constant dense<0.000000e+00> : vector<8x512xf32>
    %99 = tpu.matmul %98, %7, %cst_22 {dimension_numbers = #tpu.dot_dimension_numbers<[1], [0], [0], [1], [0, 0, 1, 1], [], []>} : vector<8x128xbf16>, vector<128x512xbf16>, vector<8x512xf32> -> vector<8x512xf32>
    %100 = arith.addf %97, %99 : vector<8x512xf32>
    %101 = vector.extract_strided_slice %100 {offsets = [0, 0], sizes = [8, 128], strides = [1, 1]} : vector<8x512xf32> to vector<8x128xf32>
    %102 = arith.negf %101 : vector<8x128xf32>
    %103 = math.exp %102 : vector<8x128xf32>
    %cst_23 = arith.constant 1.000000e+00 : f32
    %104 = vector.broadcast %cst_23 : f32 to vector<8x128xf32>
    %105 = arith.addf %104, %103 : vector<8x128xf32>
    %106 = arith.divf %104, %105 : vector<8x128xf32>
    %107 = vector.extract_strided_slice %100 {offsets = [0, 128], sizes = [8, 128], strides = [1, 1]} : vector<8x512xf32> to vector<8x128xf32>
    %108 = arith.negf %107 : vector<8x128xf32>
    %109 = math.exp %108 : vector<8x128xf32>
    %cst_24 = arith.constant 1.000000e+00 : f32
    %110 = vector.broadcast %cst_24 : f32 to vector<8x128xf32>
    %111 = arith.addf %110, %109 : vector<8x128xf32>
    %112 = arith.divf %110, %111 : vector<8x128xf32>
    %113 = vector.extract_strided_slice %100 {offsets = [0, 256], sizes = [8, 128], strides = [1, 1]} : vector<8x512xf32> to vector<8x128xf32>
    %114 = math.tanh %113 : vector<8x128xf32>
    %115 = vector.extract_strided_slice %100 {offsets = [0, 384], sizes = [8, 128], strides = [1, 1]} : vector<8x512xf32> to vector<8x128xf32>
    %116 = arith.negf %115 : vector<8x128xf32>
    %117 = math.exp %116 : vector<8x128xf32>
    %cst_25 = arith.constant 1.000000e+00 : f32
    %118 = vector.broadcast %cst_25 : f32 to vector<8x128xf32>
    %119 = arith.addf %118, %117 : vector<8x128xf32>
    %120 = arith.divf %118, %119 : vector<8x128xf32>
    %121 = arith.mulf %112, %94 : vector<8x128xf32>
    %122 = arith.mulf %106, %114 : vector<8x128xf32>
    %123 = arith.addf %121, %122 : vector<8x128xf32>
    %124 = math.tanh %123 : vector<8x128xf32>
    %125 = arith.mulf %120, %124 : vector<8x128xf32>
    %126 = vector.extract_strided_slice %6 {offsets = [32, 0], sizes = [8, 512], strides = [1, 1]} : vector<64x512xf32> to vector<8x512xf32>
    %127 = arith.truncf %125 : vector<8x128xf32> to vector<8x128xbf16>
    %cst_26 = arith.constant dense<0.000000e+00> : vector<8x512xf32>
    %128 = tpu.matmul %127, %7, %cst_26 {dimension_numbers = #tpu.dot_dimension_numbers<[1], [0], [0], [1], [0, 0, 1, 1], [], []>} : vector<8x128xbf16>, vector<128x512xbf16>, vector<8x512xf32> -> vector<8x512xf32>
    %129 = arith.addf %126, %128 : vector<8x512xf32>
    %130 = vector.extract_strided_slice %129 {offsets = [0, 0], sizes = [8, 128], strides = [1, 1]} : vector<8x512xf32> to vector<8x128xf32>
    %131 = arith.negf %130 : vector<8x128xf32>
    %132 = math.exp %131 : vector<8x128xf32>
    %cst_27 = arith.constant 1.000000e+00 : f32
    %133 = vector.broadcast %cst_27 : f32 to vector<8x128xf32>
    %134 = arith.addf %133, %132 : vector<8x128xf32>
    %135 = arith.divf %133, %134 : vector<8x128xf32>
    %136 = vector.extract_strided_slice %129 {offsets = [0, 128], sizes = [8, 128], strides = [1, 1]} : vector<8x512xf32> to vector<8x128xf32>
    %137 = arith.negf %136 : vector<8x128xf32>
    %138 = math.exp %137 : vector<8x128xf32>
    %cst_28 = arith.constant 1.000000e+00 : f32
    %139 = vector.broadcast %cst_28 : f32 to vector<8x128xf32>
    %140 = arith.addf %139, %138 : vector<8x128xf32>
    %141 = arith.divf %139, %140 : vector<8x128xf32>
    %142 = vector.extract_strided_slice %129 {offsets = [0, 256], sizes = [8, 128], strides = [1, 1]} : vector<8x512xf32> to vector<8x128xf32>
    %143 = math.tanh %142 : vector<8x128xf32>
    %144 = vector.extract_strided_slice %129 {offsets = [0, 384], sizes = [8, 128], strides = [1, 1]} : vector<8x512xf32> to vector<8x128xf32>
    %145 = arith.negf %144 : vector<8x128xf32>
    %146 = math.exp %145 : vector<8x128xf32>
    %cst_29 = arith.constant 1.000000e+00 : f32
    %147 = vector.broadcast %cst_29 : f32 to vector<8x128xf32>
    %148 = arith.addf %147, %146 : vector<8x128xf32>
    %149 = arith.divf %147, %148 : vector<8x128xf32>
    %150 = arith.mulf %141, %123 : vector<8x128xf32>
    %151 = arith.mulf %135, %143 : vector<8x128xf32>
    %152 = arith.addf %150, %151 : vector<8x128xf32>
    %153 = math.tanh %152 : vector<8x128xf32>
    %154 = arith.mulf %149, %153 : vector<8x128xf32>
    %155 = vector.extract_strided_slice %6 {offsets = [40, 0], sizes = [8, 512], strides = [1, 1]} : vector<64x512xf32> to vector<8x512xf32>
    %156 = arith.truncf %154 : vector<8x128xf32> to vector<8x128xbf16>
    %cst_30 = arith.constant dense<0.000000e+00> : vector<8x512xf32>
    %157 = tpu.matmul %156, %7, %cst_30 {dimension_numbers = #tpu.dot_dimension_numbers<[1], [0], [0], [1], [0, 0, 1, 1], [], []>} : vector<8x128xbf16>, vector<128x512xbf16>, vector<8x512xf32> -> vector<8x512xf32>
    %158 = arith.addf %155, %157 : vector<8x512xf32>
    %159 = vector.extract_strided_slice %158 {offsets = [0, 0], sizes = [8, 128], strides = [1, 1]} : vector<8x512xf32> to vector<8x128xf32>
    %160 = arith.negf %159 : vector<8x128xf32>
    %161 = math.exp %160 : vector<8x128xf32>
    %cst_31 = arith.constant 1.000000e+00 : f32
    %162 = vector.broadcast %cst_31 : f32 to vector<8x128xf32>
    %163 = arith.addf %162, %161 : vector<8x128xf32>
    %164 = arith.divf %162, %163 : vector<8x128xf32>
    %165 = vector.extract_strided_slice %158 {offsets = [0, 128], sizes = [8, 128], strides = [1, 1]} : vector<8x512xf32> to vector<8x128xf32>
    %166 = arith.negf %165 : vector<8x128xf32>
    %167 = math.exp %166 : vector<8x128xf32>
    %cst_32 = arith.constant 1.000000e+00 : f32
    %168 = vector.broadcast %cst_32 : f32 to vector<8x128xf32>
    %169 = arith.addf %168, %167 : vector<8x128xf32>
    %170 = arith.divf %168, %169 : vector<8x128xf32>
    %171 = vector.extract_strided_slice %158 {offsets = [0, 256], sizes = [8, 128], strides = [1, 1]} : vector<8x512xf32> to vector<8x128xf32>
    %172 = math.tanh %171 : vector<8x128xf32>
    %173 = vector.extract_strided_slice %158 {offsets = [0, 384], sizes = [8, 128], strides = [1, 1]} : vector<8x512xf32> to vector<8x128xf32>
    %174 = arith.negf %173 : vector<8x128xf32>
    %175 = math.exp %174 : vector<8x128xf32>
    %cst_33 = arith.constant 1.000000e+00 : f32
    %176 = vector.broadcast %cst_33 : f32 to vector<8x128xf32>
    %177 = arith.addf %176, %175 : vector<8x128xf32>
    %178 = arith.divf %176, %177 : vector<8x128xf32>
    %179 = arith.mulf %170, %152 : vector<8x128xf32>
    %180 = arith.mulf %164, %172 : vector<8x128xf32>
    %181 = arith.addf %179, %180 : vector<8x128xf32>
    %182 = math.tanh %181 : vector<8x128xf32>
    %183 = arith.mulf %178, %182 : vector<8x128xf32>
    %184 = vector.extract_strided_slice %6 {offsets = [48, 0], sizes = [8, 512], strides = [1, 1]} : vector<64x512xf32> to vector<8x512xf32>
    %185 = arith.truncf %183 : vector<8x128xf32> to vector<8x128xbf16>
    %cst_34 = arith.constant dense<0.000000e+00> : vector<8x512xf32>
    %186 = tpu.matmul %185, %7, %cst_34 {dimension_numbers = #tpu.dot_dimension_numbers<[1], [0], [0], [1], [0, 0, 1, 1], [], []>} : vector<8x128xbf16>, vector<128x512xbf16>, vector<8x512xf32> -> vector<8x512xf32>
    %187 = arith.addf %184, %186 : vector<8x512xf32>
    %188 = vector.extract_strided_slice %187 {offsets = [0, 0], sizes = [8, 128], strides = [1, 1]} : vector<8x512xf32> to vector<8x128xf32>
    %189 = arith.negf %188 : vector<8x128xf32>
    %190 = math.exp %189 : vector<8x128xf32>
    %cst_35 = arith.constant 1.000000e+00 : f32
    %191 = vector.broadcast %cst_35 : f32 to vector<8x128xf32>
    %192 = arith.addf %191, %190 : vector<8x128xf32>
    %193 = arith.divf %191, %192 : vector<8x128xf32>
    %194 = vector.extract_strided_slice %187 {offsets = [0, 128], sizes = [8, 128], strides = [1, 1]} : vector<8x512xf32> to vector<8x128xf32>
    %195 = arith.negf %194 : vector<8x128xf32>
    %196 = math.exp %195 : vector<8x128xf32>
    %cst_36 = arith.constant 1.000000e+00 : f32
    %197 = vector.broadcast %cst_36 : f32 to vector<8x128xf32>
    %198 = arith.addf %197, %196 : vector<8x128xf32>
    %199 = arith.divf %197, %198 : vector<8x128xf32>
    %200 = vector.extract_strided_slice %187 {offsets = [0, 256], sizes = [8, 128], strides = [1, 1]} : vector<8x512xf32> to vector<8x128xf32>
    %201 = math.tanh %200 : vector<8x128xf32>
    %202 = vector.extract_strided_slice %187 {offsets = [0, 384], sizes = [8, 128], strides = [1, 1]} : vector<8x512xf32> to vector<8x128xf32>
    %203 = arith.negf %202 : vector<8x128xf32>
    %204 = math.exp %203 : vector<8x128xf32>
    %cst_37 = arith.constant 1.000000e+00 : f32
    %205 = vector.broadcast %cst_37 : f32 to vector<8x128xf32>
    %206 = arith.addf %205, %204 : vector<8x128xf32>
    %207 = arith.divf %205, %206 : vector<8x128xf32>
    %208 = arith.mulf %199, %181 : vector<8x128xf32>
    %209 = arith.mulf %193, %201 : vector<8x128xf32>
    %210 = arith.addf %208, %209 : vector<8x128xf32>
    %211 = math.tanh %210 : vector<8x128xf32>
    %212 = arith.mulf %207, %211 : vector<8x128xf32>
    %213 = vector.extract_strided_slice %6 {offsets = [56, 0], sizes = [8, 512], strides = [1, 1]} : vector<64x512xf32> to vector<8x512xf32>
    %214 = arith.truncf %212 : vector<8x128xf32> to vector<8x128xbf16>
    %cst_38 = arith.constant dense<0.000000e+00> : vector<8x512xf32>
    %215 = tpu.matmul %214, %7, %cst_38 {dimension_numbers = #tpu.dot_dimension_numbers<[1], [0], [0], [1], [0, 0, 1, 1], [], []>} : vector<8x128xbf16>, vector<128x512xbf16>, vector<8x512xf32> -> vector<8x512xf32>
    %216 = arith.addf %213, %215 : vector<8x512xf32>
    %217 = vector.extract_strided_slice %216 {offsets = [0, 0], sizes = [8, 128], strides = [1, 1]} : vector<8x512xf32> to vector<8x128xf32>
    %218 = arith.negf %217 : vector<8x128xf32>
    %219 = math.exp %218 : vector<8x128xf32>
    %cst_39 = arith.constant 1.000000e+00 : f32
    %220 = vector.broadcast %cst_39 : f32 to vector<8x128xf32>
    %221 = arith.addf %220, %219 : vector<8x128xf32>
    %222 = arith.divf %220, %221 : vector<8x128xf32>
    %223 = vector.extract_strided_slice %216 {offsets = [0, 128], sizes = [8, 128], strides = [1, 1]} : vector<8x512xf32> to vector<8x128xf32>
    %224 = arith.negf %223 : vector<8x128xf32>
    %225 = math.exp %224 : vector<8x128xf32>
    %cst_40 = arith.constant 1.000000e+00 : f32
    %226 = vector.broadcast %cst_40 : f32 to vector<8x128xf32>
    %227 = arith.addf %226, %225 : vector<8x128xf32>
    %228 = arith.divf %226, %227 : vector<8x128xf32>
    %229 = vector.extract_strided_slice %216 {offsets = [0, 256], sizes = [8, 128], strides = [1, 1]} : vector<8x512xf32> to vector<8x128xf32>
    %230 = math.tanh %229 : vector<8x128xf32>
    %231 = vector.extract_strided_slice %216 {offsets = [0, 384], sizes = [8, 128], strides = [1, 1]} : vector<8x512xf32> to vector<8x128xf32>
    %232 = arith.negf %231 : vector<8x128xf32>
    %233 = math.exp %232 : vector<8x128xf32>
    %cst_41 = arith.constant 1.000000e+00 : f32
    %234 = vector.broadcast %cst_41 : f32 to vector<8x128xf32>
    %235 = arith.addf %234, %233 : vector<8x128xf32>
    %236 = arith.divf %234, %235 : vector<8x128xf32>
    %237 = arith.mulf %228, %210 : vector<8x128xf32>
    %238 = arith.mulf %222, %230 : vector<8x128xf32>
    %239 = arith.addf %237, %238 : vector<8x128xf32>
    %240 = math.tanh %239 : vector<8x128xf32>
    %241 = arith.mulf %236, %240 : vector<8x128xf32>
    %242 = vector.extract_strided_slice %1 {offsets = [56, 0], sizes = [8, 16], strides = [1, 1]} : vector<64x16xbf16> to vector<8x16xbf16>
    %c0_42 = arith.constant 0 : index
    %c0_43 = arith.constant 0 : index
    %243 = vector.load %arg4[%c0_42, %c0_43] : memref<16x512xbf16, #tpu.memory_space<vmem>>, vector<16x512xbf16>
    %cst_44 = arith.constant dense<0.000000e+00> : vector<8x512xf32>
    %244 = tpu.matmul %242, %243, %cst_44 {dimension_numbers = #tpu.dot_dimension_numbers<[1], [0], [0], [1], [0, 0, 1, 1], [], []>} : vector<8x16xbf16>, vector<16x512xbf16>, vector<8x512xf32> -> vector<8x512xf32>
    %c0_45 = arith.constant 0 : index
    %c0_46 = arith.constant 0 : index
    %245 = vector.load %arg5[%c0_45, %c0_46] : memref<1x512xf32, #tpu.memory_space<vmem>>, vector<1x512xf32>
    %246 = vector.broadcast %245 : vector<1x512xf32> to vector<8x512xf32>
    %247 = arith.addf %244, %246 : vector<8x512xf32>
    %248 = vector.extract_strided_slice %247 {offsets = [0, 0], sizes = [8, 128], strides = [1, 1]} : vector<8x512xf32> to vector<8x128xf32>
    %249 = arith.negf %248 : vector<8x128xf32>
    %250 = math.exp %249 : vector<8x128xf32>
    %cst_47 = arith.constant 1.000000e+00 : f32
    %251 = vector.broadcast %cst_47 : f32 to vector<8x128xf32>
    %252 = arith.addf %251, %250 : vector<8x128xf32>
    %253 = arith.divf %251, %252 : vector<8x128xf32>
    %254 = vector.extract_strided_slice %247 {offsets = [0, 256], sizes = [8, 128], strides = [1, 1]} : vector<8x512xf32> to vector<8x128xf32>
    %255 = math.tanh %254 : vector<8x128xf32>
    %256 = vector.extract_strided_slice %247 {offsets = [0, 384], sizes = [8, 128], strides = [1, 1]} : vector<8x512xf32> to vector<8x128xf32>
    %257 = arith.negf %256 : vector<8x128xf32>
    %258 = math.exp %257 : vector<8x128xf32>
    %cst_48 = arith.constant 1.000000e+00 : f32
    %259 = vector.broadcast %cst_48 : f32 to vector<8x128xf32>
    %260 = arith.addf %259, %258 : vector<8x128xf32>
    %261 = arith.divf %259, %260 : vector<8x128xf32>
    %262 = arith.mulf %253, %255 : vector<8x128xf32>
    %263 = math.tanh %262 : vector<8x128xf32>
    %264 = arith.mulf %261, %263 : vector<8x128xf32>
    %265 = arith.truncf %241 : vector<8x128xf32> to vector<8x128xbf16>
    %c0_49 = arith.constant 0 : index
    %c0_50 = arith.constant 0 : index
    %266 = vector.load %arg7[%c0_49, %c0_50] : memref<128x128xbf16, #tpu.memory_space<vmem>>, vector<128x128xbf16>
    %cst_51 = arith.constant dense<0.000000e+00> : vector<8x128xf32>
    %267 = tpu.matmul %265, %266, %cst_51 {dimension_numbers = #tpu.dot_dimension_numbers<[1], [0], [0], [1], [0, 0, 1, 1], [], []>} : vector<8x128xbf16>, vector<128x128xbf16>, vector<8x128xf32> -> vector<8x128xf32>
    %268 = arith.truncf %264 : vector<8x128xf32> to vector<8x128xbf16>
    %c0_52 = arith.constant 0 : index
    %c0_53 = arith.constant 0 : index
    %269 = vector.load %arg8[%c0_52, %c0_53] : memref<128x128xbf16, #tpu.memory_space<vmem>>, vector<128x128xbf16>
    %cst_54 = arith.constant dense<0.000000e+00> : vector<8x128xf32>
    %270 = tpu.matmul %268, %269, %cst_54 {dimension_numbers = #tpu.dot_dimension_numbers<[1], [0], [0], [1], [0, 0, 1, 1], [], []>} : vector<8x128xbf16>, vector<128x128xbf16>, vector<8x128xf32> -> vector<8x128xf32>
    %271 = arith.addf %267, %270 : vector<8x128xf32>
    %c0_55 = arith.constant 0 : index
    %c0_56 = arith.constant 0 : index
    %272 = vector.load %arg9[%c0_55, %c0_56] : memref<1x128xf32, #tpu.memory_space<vmem>>, vector<1x128xf32>
    %273 = vector.broadcast %272 : vector<1x128xf32> to vector<8x128xf32>
    %274 = arith.addf %271, %273 : vector<8x128xf32>
    %c0_57 = arith.constant 0 : index
    %c0_58 = arith.constant 0 : index
    %275 = vector.load %arg10[%c0_57, %c0_58] : memref<8x128xf32, #tpu.memory_space<vmem>>, vector<8x128xf32>
    tpu.vector_store %arg10[%c0_57, %c0_58], %274 {strides = array<i32>} : memref<8x128xf32, #tpu.memory_space<vmem>>, vector<8x128xf32>,
    %276 = arith.negf %274 : vector<8x128xf32>
    %277 = math.exp %276 : vector<8x128xf32>
    %cst_59 = arith.constant 1.000000e+00 : f32
    %278 = vector.broadcast %cst_59 : f32 to vector<8x128xf32>
    %279 = arith.addf %278, %277 : vector<8x128xf32>
    %280 = arith.divf %278, %279 : vector<8x128xf32>
    %c0_60 = arith.constant 0 : index
    %c0_61 = arith.constant 0 : index
    %281 = vector.load %arg11[%c0_60, %c0_61] : memref<8x128xf32, #tpu.memory_space<vmem>>, vector<8x128xf32>
    tpu.vector_store %arg11[%c0_60, %c0_61], %280 {strides = array<i32>} : memref<8x128xf32, #tpu.memory_space<vmem>>, vector<8x128xf32>,
    return
  }
  func.func @transform_0(%arg0: i32) -> (i32, i32, i32) {
    %c0_i32 = arith.constant 0 : i32
    %c0_i32_0 = arith.constant 0 : i32
    %c0_i32_1 = arith.constant 0 : i32
    return %c0_i32, %arg0, %c0_i32_0 : i32, i32, i32
  }
  func.func @transform_1(%arg0: i32) -> (i32, i32) {
    %c0_i32 = arith.constant 0 : i32
    %c0_i32_0 = arith.constant 0 : i32
    %c0_i32_1 = arith.constant 0 : i32
    return %c0_i32, %c0_i32_0 : i32, i32
  }
  func.func @transform_2(%arg0: i32) -> (i32, i32) {
    %c0_i32 = arith.constant 0 : i32
    %c0_i32_0 = arith.constant 0 : i32
    %c0_i32_1 = arith.constant 0 : i32
    return %c0_i32, %c0_i32_0 : i32, i32
  }
  func.func @transform_3(%arg0: i32) -> (i32, i32) {
    %c0_i32 = arith.constant 0 : i32
    %c0_i32_0 = arith.constant 0 : i32
    %c0_i32_1 = arith.constant 0 : i32
    return %c0_i32, %c0_i32_0 : i32, i32
  }
  func.func @transform_4(%arg0: i32) -> (i32, i32) {
    %c0_i32 = arith.constant 0 : i32
    %c0_i32_0 = arith.constant 0 : i32
    %c0_i32_1 = arith.constant 0 : i32
    return %c0_i32, %c0_i32_0 : i32, i32
  }
  func.func @transform_5(%arg0: i32) -> (i32, i32) {
    %c0_i32 = arith.constant 0 : i32
    %c0_i32_0 = arith.constant 0 : i32
    %c0_i32_1 = arith.constant 0 : i32
    return %c0_i32, %c0_i32_0 : i32, i32
  }
  func.func @transform_6(%arg0: i32) -> (i32, i32) {
    %c0_i32 = arith.constant 0 : i32
    %c0_i32_0 = arith.constant 0 : i32
    %c0_i32_1 = arith.constant 0 : i32
    return %c0_i32, %c0_i32_0 : i32, i32
  }
  func.func @transform_7(%arg0: i32) -> (i32, i32) {
    %c0_i32 = arith.constant 0 : i32
    %c0_i32_0 = arith.constant 0 : i32
    %c0_i32_1 = arith.constant 0 : i32
    return %c0_i32, %c0_i32_0 : i32, i32
  }
  func.func @transform_8(%arg0: i32) -> (i32, i32) {
    %c0_i32 = arith.constant 0 : i32
    %c0_i32_0 = arith.constant 0 : i32
    %c0_i32_1 = arith.constant 0 : i32
    return %c0_i32, %c0_i32_0 : i32, i32
  }
  func.func @transform_9(%arg0: i32) -> (i32, i32) {
    %c0_i32 = arith.constant 0 : i32
    %c0_i32_0 = arith.constant 0 : i32
    return %arg0, %c0_i32 : i32, i32
  }
  func.func @transform_10(%arg0: i32) -> (i32, i32) {
    %c0_i32 = arith.constant 0 : i32
    %c0_i32_0 = arith.constant 0 : i32
    return %arg0, %c0_i32 : i32, i32
  }
}

</mosaic_0001>

<llo_original>
// kernel: tpu_custom_call.1
$region0: #{tpu_custom_call.1}
  #allocation0 [shape = 'u32[]', space=smem, size = 0x4, offset = 0x4, fixed_abs, tag = 'smem constant byte address 0x4 - core index']
  #allocation1 [shape = 'u32[144,128]{1,0:T(1,128)}', space=vmem, size = 0x12000, scoped, tag = 'internal scratch']
  %s0 = inlined_call_operand.hbm [shape: bf16[8,8,16], index: 0, kind: input, shape index: {}]
  %s1 = inlined_call_operand.hbm [shape: bf16[16,512], index: 1, kind: input, shape index: {}]
  %s2 = inlined_call_operand.vmem [shape: f32[1,512], index: 2, kind: input, shape index: {}]
  %s3 = inlined_call_operand.hbm [shape: bf16[16,512], index: 3, kind: input, shape index: {}]
  %s4 = inlined_call_operand.vmem [shape: f32[1,512], index: 4, kind: input, shape index: {}]
  %s5 = inlined_call_operand.hbm [shape: bf16[128,512], index: 5, kind: input, shape index: {}]
  %s6 = inlined_call_operand.hbm [shape: bf16[128,128], index: 6, kind: input, shape index: {}]
  %s7 = inlined_call_operand.hbm [shape: bf16[128,128], index: 7, kind: input, shape index: {}]
  %s8 = inlined_call_operand.vmem [shape: f32[1,128], index: 8, kind: input, shape index: {}]
  %s9 = inlined_call_operand.hbm [shape: f32[8,128], index: 9, kind: output, shape index: {0}]
  %s10 = inlined_call_operand.hbm [shape: f32[8,128], index: 10, kind: output, shape index: {1}]
  %11 = xla_tuple %s9, %s10
  %s12 = sld [smem:[#allocation0]]
  $region78: #{tpu_custom_call.1} parent=0
    _
  %s14 = ssub.s32 1, %s12
  %s15 = scalar_select 0, %s14, %s12
  $region1: #{tpu_custom_call.1} parent=0
    #allocation2 [shape = 'u8[16384]{0}', space=vmem, size = 0x4000, scoped, tag = 'input window, operand 0, single buffered']
    #allocation3 [shape = 's32[1]{0}', space=sflag, size = 0x4, scoped, tag = 'scoped memory for tpu_custom_call.1']
    #allocation4 [shape = 's32[1]{0}', space=sflag, size = 0x4, scoped, tag = 'scoped memory for tpu_custom_call.1']
    #allocation5 [shape = 'u8[16384]{0}', space=vmem, size = 0x4000, scoped, tag = 'input window, operand 1, single buffered']
    #allocation6 [shape = 's32[1]{0}', space=sflag, size = 0x4, scoped, tag = 'scoped memory for tpu_custom_call.1']
    #allocation7 [shape = 'u8[16384]{0}', space=vmem, size = 0x4000, scoped, tag = 'input window, operand 3, single buffered']
    #allocation8 [shape = 'u8[131072]{0}', space=vmem, size = 0x20000, scoped, tag = 'input window, operand 5, single buffered']
    #allocation9 [shape = 's32[1]{0}', space=sflag, size = 0x4, scoped, tag = 'scoped memory for tpu_custom_call.1']
    #allocation10 [shape = 'u8[32768]{0}', space=vmem, size = 0x8000, scoped, tag = 'input window, operand 6, single buffered']
    #allocation11 [shape = 'u8[32768]{0}', space=vmem, size = 0x8000, scoped, tag = 'input window, operand 7, single buffered']
    #allocation12 [shape = 's32[1]{0}', space=sflag, size = 0x4, scoped, tag = 'scoped memory for tpu_custom_call.1']
    #allocation13 [shape = 'u8[4096]{0}', space=vmem, size = 0x1000, scoped, tag = 'output window, operand 0, single buffered']
    #allocation14 [shape = 'u8[4096]{0}', space=vmem, size = 0x1000, scoped, tag = 'output window, operand 1, single buffered']
    #allocation15 [shape = 's32[1]{0}', space=sflag, size = 0x4, scoped, tag = 'scoped memory for tpu_custom_call.1']
    %16 = vsyncpa [#allocation3], 0
    %17 = vsyncpa [#allocation6], 0
    %18 = vsyncpa [#allocation9], 0
    %19 = vsyncpa [#allocation12], 0
    %20 = vsyncpa [#allocation4], 0
    %21 = vsyncpa [#allocation15], 0
    // Predicated region
    $region2: #{tpu_custom_call.1} parent=1 // pred_check
      _
    $region3: #{tpu_custom_call.1} parent=1 // pred_check_branch
      %23 = sbr.rel (0) target = $region5
    $region4: #{tpu_custom_call.1} parent=1 // pred_region
      %s25 = ssub.s32 512, 512
      %26 = vsyncadd [#allocation3], %s25
      %s27 = sshll.u32 [#allocation2], 4
      %s28 = int_to_ptr.vmem [resolvable:$true] %s27
      %33 = dma.hbm_to_vmem [thread:$0]  %s0, 512, %s28, [#allocation3], 64, 64, 4
    $region5: #{tpu_custom_call.1} parent=1 // pred_fallthru
      _
    // Predicated region
    $region6: #{tpu_custom_call.1} parent=1 // pred_check
      _
    $region7: #{tpu_custom_call.1} parent=1 // pred_check_branch
      %35 = sbr.rel (0) target = $region9
    $region8: #{tpu_custom_call.1} parent=1 // pred_region
      %s37 = ssub.s32 512, 512
      %38 = vsyncadd [#allocation6], %s37
      %s39 = sshll.u32 [#allocation5], 4
      %s40 = int_to_ptr.vmem [resolvable:$true] %s39
      %45 = dma.hbm_to_vmem [thread:$0]  %s1, 512, %s40, [#allocation6], 256, 256, 16
    $region9: #{tpu_custom_call.1} parent=1 // pred_fallthru
      _
    // Predicated region
    $region10: #{tpu_custom_call.1} parent=1 // pred_check
      _
    $region11: #{tpu_custom_call.1} parent=1 // pred_check_branch
      %47 = sbr.rel (0) target = $region13
    $region12: #{tpu_custom_call.1} parent=1 // pred_region
      _
    $region13: #{tpu_custom_call.1} parent=1 // pred_fallthru
      _
    // Predicated region
    $region14: #{tpu_custom_call.1} parent=1 // pred_check
      _
    $region15: #{tpu_custom_call.1} parent=1 // pred_check_branch
      %49 = sbr.rel (0) target = $region17
    $region16: #{tpu_custom_call.1} parent=1 // pred_region
      %s51 = ssub.s32 512, 512
      %52 = vsyncadd [#allocation6], %s51
      %s53 = sshll.u32 [#allocation7], 4
      %s54 = int_to_ptr.vmem [resolvable:$true] %s53
      %59 = dma.hbm_to_vmem [thread:$0]  %s3, 512, %s54, [#allocation6], 256, 256, 16
    $region17: #{tpu_custom_call.1} parent=1 // pred_fallthru
      _
    // Predicated region
    $region18: #{tpu_custom_call.1} parent=1 // pred_check
      _
    $region19: #{tpu_custom_call.1} parent=1 // pred_check_branch
      %61 = sbr.rel (0) target = $region21
    $region20: #{tpu_custom_call.1} parent=1 // pred_region
      _
    $region21: #{tpu_custom_call.1} parent=1 // pred_fallthru
      _
    // Predicated region
    $region22: #{tpu_custom_call.1} parent=1 // pred_check
      _
    $region23: #{tpu_custom_call.1} parent=1 // pred_check_branch
      %63 = sbr.rel (0) target = $region25
    $region24: #{tpu_custom_call.1} parent=1 // pred_region
      %s65 = ssub.s32 4096, 4096
      %66 = vsyncadd [#allocation9], %s65
      %s67 = sshll.u32 [#allocation8], 4
      %s68 = int_to_ptr.vmem [resolvable:$true] %s67
      %73 = dma.hbm_to_vmem [thread:$0]  %s5, 4096, %s68, [#allocation9], 256, 256, 16
    $region25: #{tpu_custom_call.1} parent=1 // pred_fallthru
      _
    // Predicated region
    $region26: #{tpu_custom_call.1} parent=1 // pred_check
      _
    $region27: #{tpu_custom_call.1} parent=1 // pred_check_branch
      %75 = sbr.rel (0) target = $region29
    $region28: #{tpu_custom_call.1} parent=1 // pred_region
      %s77 = ssub.s32 1024, 1024
      %78 = vsyncadd [#allocation9], %s77
      %s79 = sshll.u32 [#allocation10], 4
      %s80 = int_to_ptr.vmem [resolvable:$true] %s79
      %85 = dma.hbm_to_vmem [thread:$0]  %s6, 1024, %s80, [#allocation9], 64, 64, 4
    $region29: #{tpu_custom_call.1} parent=1 // pred_fallthru
      _
    // Predicated region
    $region30: #{tpu_custom_call.1} parent=1 // pred_check
      _
    $region31: #{tpu_custom_call.1} parent=1 // pred_check_branch
      %87 = sbr.rel (0) target = $region33
    $region32: #{tpu_custom_call.1} parent=1 // pred_region
      %s89 = ssub.s32 1024, 1024
      %90 = vsyncadd [#allocation12], %s89
      %s91 = sshll.u32 [#allocation11], 4
      %s92 = int_to_ptr.vmem [resolvable:$true] %s91
      %97 = dma.hbm_to_vmem [thread:$0]  %s7, 1024, %s92, [#allocation12], 64, 64, 4
    $region33: #{tpu_custom_call.1} parent=1 // pred_fallthru
      _
    // Predicated region
    $region34: #{tpu_custom_call.1} parent=1 // pred_check
      _
    $region35: #{tpu_custom_call.1} parent=1 // pred_check_branch
      %99 = sbr.rel (0) target = $region37
    $region36: #{tpu_custom_call.1} parent=1 // pred_region
      _
    $region37: #{tpu_custom_call.1} parent=1 // pred_fallthru
      _
    // Predicated region
    $region38: #{tpu_custom_call.1} parent=1 // pred_check
      _
    $region39: #{tpu_custom_call.1} parent=1 // pred_check_branch
      %101 = sbr.rel (0) target = $region41
    $region40: #{tpu_custom_call.1} parent=1 // pred_region
      %102 = dma.done [#allocation3], 512
    $region41: #{tpu_custom_call.1} parent=1 // pred_fallthru
      _
    // Predicated region
    $region42: #{tpu_custom_call.1} parent=1 // pred_check
      _
    $region43: #{tpu_custom_call.1} parent=1 // pred_check_branch
      %104 = sbr.rel (0) target = $region45
    $region44: #{tpu_custom_call.1} parent=1 // pred_region
      %105 = dma.done [#allocation6], 512
    $region45: #{tpu_custom_call.1} parent=1 // pred_fallthru
      _
    // Predicated region
    $region46: #{tpu_custom_call.1} parent=1 // pred_check
      _
    $region47: #{tpu_custom_call.1} parent=1 // pred_check_branch
      %107 = sbr.rel (0) target = $region49
    $region48: #{tpu_custom_call.1} parent=1 // pred_region
      %108 = dma.done [#allocation6], 512
    $region49: #{tpu_custom_call.1} parent=1 // pred_fallthru
      _
    // Predicated region
    $region50: #{tpu_custom_call.1} parent=1 // pred_check
      _
    $region51: #{tpu_custom_call.1} parent=1 // pred_check_branch
      %110 = sbr.rel (0) target = $region53
    $region52: #{tpu_custom_call.1} parent=1 // pred_region
      %111 = dma.done [#allocation9], 4096
    $region53: #{tpu_custom_call.1} parent=1 // pred_fallthru
      _
    // Predicated region
    $region54: #{tpu_custom_call.1} parent=1 // pred_check
      _
    $region55: #{tpu_custom_call.1} parent=1 // pred_check_branch
      %113 = sbr.rel (0) target = $region57
    $region56: #{tpu_custom_call.1} parent=1 // pred_region
      %114 = dma.done [#allocation9], 1024
    $region57: #{tpu_custom_call.1} parent=1 // pred_fallthru
      _
    // Predicated region
    $region58: #{tpu_custom_call.1} parent=1 // pred_check
      _
    $region59: #{tpu_custom_call.1} parent=1 // pred_check_branch
      %116 = sbr.rel (0) target = $region61
    $region60: #{tpu_custom_call.1} parent=1 // pred_region
      %117 = dma.done [#allocation12], 1024
    $region61: #{tpu_custom_call.1} parent=1 // pred_fallthru
      _
    %v119 = vld [vmem:[#allocation2] sm:$0xf]
    %v120 = vld [vmem:[#allocation2 + $0x4] sm:$0xf]
    %v121 = vld [vmem:[#allocation2 + $0x8] sm:$0xf]
    %v122 = vld [vmem:[#allocation2 + $0xc] sm:$0xf]
    %v123 = vld [vmem:[#allocation2 + $0x10] sm:$0xf]
    %v124 = vld [vmem:[#allocation2 + $0x14] sm:$0xf]
    %v125 = vld [vmem:[#allocation2 + $0x18] sm:$0xf]
    %v126 = vld [vmem:[#allocation2 + $0x1c] sm:$0xf]
    %v127 = vld [vmem:[#allocation5] sm:$0xff]
    %v128 = vld [vmem:[#allocation5 + $0x8] sm:$0xff]
    %v129 = vld [vmem:[#allocation5 + $0x10] sm:$0xff]
    %v130 = vld [vmem:[#allocation5 + $0x18] sm:$0xff]
    %v131 = vld [vmem:[%s2] sm:$0xf]
    %v133 = vlaneseq
    %v134 = vshrl.u32 %v133, 7
    %v135 = vsub.s32 0, %v134
    %v136 = vrot.slane %v131, %v135
    %v137 = vlaneseq
    %v138 = vshrl.u32 %v137, 7
    %v139 = vsub.s32 1, %v138
    %v140 = vrot.slane %v131, %v139
    %v141 = vlaneseq
    %v142 = vshrl.u32 %v141, 7
    %v143 = vsub.s32 2, %v142
    %v144 = vrot.slane %v131, %v143
    %v145 = vlaneseq
    %v146 = vshrl.u32 %v145, 7
    %v147 = vsub.s32 3, %v146
    %v148 = vrot.slane %v131, %v147
    %v161 = vunpack.c.l.b16 %v119
    %v162 = vunpack.c.l.b16 %v120
    %v163 = vunpack.c.l.b16 %v121
    %v164 = vunpack.c.l.b16 %v122
    %v165 = vunpack.c.l.b16 %v123
    %v166 = vunpack.c.l.b16 %v124
    %v167 = vunpack.c.l.b16 %v125
    %v168 = vunpack.c.l.b16 %v126
    %v169 = vpack.c.b16 %v162, %v161
    %v170 = vpack.c.b16 %v164, %v163
    %v171 = vpack.c.b16 %v166, %v165
    %v172 = vpack.c.b16 %v168, %v167
    %v177 = vunpack.c.l.b16 %v127
    %v178 = vunpack.c.h.b16 %v127
    %v179 = vunpack.c.l.b16 %v128
    %v180 = vunpack.c.h.b16 %v128
    %v181 = vunpack.c.l.b16 %v129
    %v182 = vunpack.c.h.b16 %v129
    %v183 = vunpack.c.l.b16 %v130
    %v184 = vunpack.c.h.b16 %v130
    %v185 = vpack.c.b16 %v181, %v177
    %v186 = vpack.c.b16 %v182, %v178
    %v187 = vpack.c.b16 %v183, %v179
    %v188 = vpack.c.b16 %v184, %v180
    %vm193 = vcmask 130048
    %v195 = vsel %vm193, %v169, 0
    %v198 = vsel %vm193, %v170, 0
    %v201 = vsel %vm193, %v171, 0
    %v204 = vsel %vm193, %v172, 0
    %206 = vmatprep.subr.bf16.mxu0 %v186
    %207 = vmatpush1.bf16.msra.mxu0 %v185
    %208 = vmatprep.subr.bf16.mxu0 0
    %209 = vmatpush1.bf16.msra.mxu0 0
    %210 = vmatprep.subr.bf16.mxu0 0
    %211 = vmatpush1.bf16.msra.mxu0 0
    %212 = vmatprep.subr.bf16.mxu0 0
    %213 = vmatpush1.bf16.msra.mxu0 0
    %214 = vmatprep.subr.bf16.mxu0 0
    %215 = vmatpush1.bf16.msra.mxu0 0
    %216 = vmatprep.subr.bf16.mxu0 0
    %217 = vmatpush1.bf16.msra.mxu0 0
    %218 = vmatprep.subr.bf16.mxu0 0
    %219 = vmatpush1.bf16.msra.mxu0 0
    %220 = vmatprep.subr.bf16.mxu0 0
    %221 = vmatpush1.bf16.msra.mxu0 0
    %222 = vmatprep.subr.bf16.mxu0 0
    %223 = vmatpush1.bf16.msra.mxu0 0
    %224 = vmatprep.subr.bf16.mxu0 0
    %225 = vmatpush1.bf16.msra.mxu0 0
    %226 = vmatprep.subr.bf16.mxu0 0
    %227 = vmatpush1.bf16.msra.mxu0 0
    %228 = vmatprep.subr.bf16.mxu0 0
    %229 = vmatpush1.bf16.msra.mxu0 0
    %230 = vmatprep.subr.bf16.mxu0 0
    %231 = vmatpush1.bf16.msra.mxu0 0
    %232 = vmatprep.subr.bf16.mxu0 0
    %233 = vmatpush1.bf16.msra.mxu0 0
    %234 = vmatprep.subr.bf16.mxu0 0
    %235 = vmatpush1.bf16.msra.mxu0 0
    %236 = vmatprep.subr.bf16.mxu0 0
    %237 = vmatpush1.bf16.msra.mxu0 0
    %238 = vmatprep.mubr.bf16.mxu0 0
    %239 = vmatmul.mubr.bf16.gmra.mrb[0].mxu0 %v195
    %v240 = vpop.f32.mrb[0].mxu0
    %v241 = vadd.f32 %v136, %v240
    %v242 = vpop.f32.mrb[0].mxu0
    %v243 = vadd.f32 %v140, %v242
    %v244 = vpop.f32.mrb[0].mxu0
    %v245 = vadd.f32 %v136, %v244
    %v246 = vpop.f32.mrb[0].mxu0
    %v247 = vadd.f32 %v140, %v246
    %248 = vmatprep.mubr.bf16.mxu0 0
    %249 = vmatmul.mubr.bf16.gmra.mrb[0].mxu0 %v198
    %v250 = vpop.f32.mrb[0].mxu0
    %v251 = vadd.f32 %v136, %v250
    %v252 = vpop.f32.mrb[0].mxu0
    %v253 = vadd.f32 %v140, %v252
    %v254 = vpop.f32.mrb[0].mxu0
    %v255 = vadd.f32 %v136, %v254
    %v256 = vpop.f32.mrb[0].mxu0
    %v257 = vadd.f32 %v140, %v256
    %258 = vmatprep.mubr.bf16.mxu0 0
    %259 = vmatmul.mubr.bf16.gmra.mrb[0].mxu0 %v201
    %v260 = vpop.f32.mrb[0].mxu0
    %v261 = vadd.f32 %v136, %v260
    %v262 = vpop.f32.mrb[0].mxu0
    %v263 = vadd.f32 %v140, %v262
    %v264 = vpop.f32.mrb[0].mxu0
    %v265 = vadd.f32 %v136, %v264
    %v266 = vpop.f32.mrb[0].mxu0
    %v267 = vadd.f32 %v140, %v266
    %268 = vmatprep.mubr.bf16.mxu0 0
    %269 = vmatmul.mubr.bf16.gmra.mrb[0].mxu0 %v204
    %v270 = vpop.f32.mrb[0].mxu0
    %v271 = vadd.f32 %v136, %v270
    %v272 = vpop.f32.mrb[0].mxu0
    %v273 = vadd.f32 %v140, %v272
    %v274 = vpop.f32.mrb[0].mxu0
    %v275 = vadd.f32 %v136, %v274
    %v276 = vpop.f32.mrb[0].mxu0
    %v277 = vadd.f32 %v140, %v276
    %278 = vdwg.mxu0
    %279 = vmatprep.subr.bf16.mxu0 %v188
    %280 = vmatpush1.bf16.msra.mxu0 %v187
    %281 = vmatprep.subr.bf16.mxu0 0
    %282 = vmatpush1.bf16.msra.mxu0 0
    %283 = vmatprep.subr.bf16.mxu0 0
    %284 = vmatpush1.bf16.msra.mxu0 0
    %285 = vmatprep.subr.bf16.mxu0 0
    %286 = vmatpush1.bf16.msra.mxu0 0
    %287 = vmatprep.subr.bf16.mxu0 0
    %288 = vmatpush1.bf16.msra.mxu0 0
    %289 = vmatprep.subr.bf16.mxu0 0
    %290 = vmatpush1.bf16.msra.mxu0 0
    %291 = vmatprep.subr.bf16.mxu0 0
    %292 = vmatpush1.bf16.msra.mxu0 0
    %293 = vmatprep.subr.bf16.mxu0 0
    %294 = vmatpush1.bf16.msra.mxu0 0
    %295 = vmatprep.subr.bf16.mxu0 0
    %296 = vmatpush1.bf16.msra.mxu0 0
    %297 = vmatprep.subr.bf16.mxu0 0
    %298 = vmatpush1.bf16.msra.mxu0 0
    %299 = vmatprep.subr.bf16.mxu0 0
    %300 = vmatpush1.bf16.msra.mxu0 0
    %301 = vmatprep.subr.bf16.mxu0 0
    %302 = vmatpush1.bf16.msra.mxu0 0
    %303 = vmatprep.subr.bf16.mxu0 0
    %304 = vmatpush1.bf16.msra.mxu0 0
    %305 = vmatprep.subr.bf16.mxu0 0
    %306 = vmatpush1.bf16.msra.mxu0 0
    %307 = vmatprep.subr.bf16.mxu0 0
    %308 = vmatpush1.bf16.msra.mxu0 0
    %309 = vmatprep.subr.bf16.mxu0 0
    %310 = vmatpush1.bf16.msra.mxu0 0
    %311 = vmatprep.mubr.bf16.mxu0 0
    %312 = vmatmul.mubr.bf16.gmra.mrb[0].mxu0 %v195
    %v313 = vpop.f32.mrb[0].mxu0
    %v314 = vadd.f32 %v144, %v313
    %v315 = vpop.f32.mrb[0].mxu0
    %v316 = vadd.f32 %v148, %v315
    %v317 = vpop.f32.mrb[0].mxu0
    %v318 = vadd.f32 %v144, %v317
    %v319 = vpop.f32.mrb[0].mxu0
    %v320 = vadd.f32 %v148, %v319
    %321 = vmatprep.mubr.bf16.mxu0 0
    %322 = vmatmul.mubr.bf16.gmra.mrb[0].mxu0 %v198
    %v323 = vpop.f32.mrb[0].mxu0
    %v324 = vadd.f32 %v144, %v323
    %v325 = vpop.f32.mrb[0].mxu0
    %v326 = vadd.f32 %v148, %v325
    %v327 = vpop.f32.mrb[0].mxu0
    %v328 = vadd.f32 %v144, %v327
    %v329 = vpop.f32.mrb[0].mxu0
    %v330 = vadd.f32 %v148, %v329
    %331 = vmatprep.mubr.bf16.mxu0 0
    %332 = vmatmul.mubr.bf16.gmra.mrb[0].mxu0 %v201
    %v333 = vpop.f32.mrb[0].mxu0
    %v334 = vadd.f32 %v144, %v333
    %v335 = vpop.f32.mrb[0].mxu0
    %v336 = vadd.f32 %v148, %v335
    %v337 = vpop.f32.mrb[0].mxu0
    %v338 = vadd.f32 %v144, %v337
    %v339 = vpop.f32.mrb[0].mxu0
    %v340 = vadd.f32 %v148, %v339
    %341 = vmatprep.mubr.bf16.mxu0 0
    %342 = vmatmul.mubr.bf16.gmra.mrb[0].mxu0 %v204
    %v343 = vpop.f32.mrb[0].mxu0
    %v344 = vadd.f32 %v144, %v343
    %v345 = vpop.f32.mrb[0].mxu0
    %v346 = vadd.f32 %v148, %v345
    %v347 = vpop.f32.mrb[0].mxu0
    %v348 = vadd.f32 %v144, %v347
    %v349 = vpop.f32.mrb[0].mxu0
    %v350 = vadd.f32 %v148, %v349
    %351 = vdwg.mxu0
    %v352 = vld [vmem:[#allocation8] sm:$0xff]
    %v353 = vld [vmem:[#allocation8 + $0x8] sm:$0xff]
    %v354 = vld [vmem:[#allocation8 + $0x10] sm:$0xff]
    %v355 = vld [vmem:[#allocation8 + $0x18] sm:$0xff]
    %v356 = vld [vmem:[#allocation8 + $0x20] sm:$0xff]
    %v357 = vld [vmem:[#allocation8 + $0x28] sm:$0xff]
    %v358 = vld [vmem:[#allocation8 + $0x30] sm:$0xff]
    %v359 = vld [vmem:[#allocation8 + $0x38] sm:$0xff]
    %v360 = vld [vmem:[#allocation8 + $0x40] sm:$0xff]
    %v361 = vld [vmem:[#allocation8 + $0x48] sm:$0xff]
    %v362 = vld [vmem:[#allocation8 + $0x50] sm:$0xff]
    %v363 = vld [vmem:[#allocation8 + $0x58] sm:$0xff]
    %v364 = vld [vmem:[#allocation8 + $0x60] sm:$0xff]
    %v365 = vld [vmem:[#allocation8 + $0x68] sm:$0xff]
    %v366 = vld [vmem:[#allocation8 + $0x70] sm:$0xff]
    %v367 = vld [vmem:[#allocation8 + $0x78] sm:$0xff]
    %v368 = vld [vmem:[#allocation8 + $0x80] sm:$0xff]
    %v369 = vld [vmem:[#allocation8 + $0x88] sm:$0xff]
    %v370 = vld [vmem:[#allocation8 + $0x90] sm:$0xff]
    %v371 = vld [vmem:[#allocation8 + $0x98] sm:$0xff]
    %v372 = vld [vmem:[#allocation8 + $0xa0] sm:$0xff]
    %v373 = vld [vmem:[#allocation8 + $0xa8] sm:$0xff]
    %v374 = vld [vmem:[#allocation8 + $0xb0] sm:$0xff]
    %v375 = vld [vmem:[#allocation8 + $0xb8] sm:$0xff]
    %v376 = vld [vmem:[#allocation8 + $0xc0] sm:$0xff]
    %v377 = vld [vmem:[#allocation8 + $0xc8] sm:$0xff]
    %v378 = vld [vmem:[#allocation8 + $0xd0] sm:$0xff]
    %v379 = vld [vmem:[#allocation8 + $0xd8] sm:$0xff]
    %v380 = vld [vmem:[#allocation8 + $0xe0] sm:$0xff]
    %v381 = vld [vmem:[#allocation8 + $0xe8] sm:$0xff]
    %v382 = vld [vmem:[#allocation8 + $0xf0] sm:$0xff]
    %v383 = vld [vmem:[#allocation8 + $0xf8] sm:$0xff]
    %v416 = vunpack.c.l.b16 %v352
    %v417 = vunpack.c.h.b16 %v352
    %v418 = vunpack.c.l.b16 %v353
    %v419 = vunpack.c.h.b16 %v353
    %v420 = vunpack.c.l.b16 %v354
    %v421 = vunpack.c.h.b16 %v354
    %v422 = vunpack.c.l.b16 %v355
    %v423 = vunpack.c.h.b16 %v355
    %v424 = vunpack.c.l.b16 %v356
    %v425 = vunpack.c.h.b16 %v356
    %v426 = vunpack.c.l.b16 %v357
    %v427 = vunpack.c.h.b16 %v357
    %v428 = vunpack.c.l.b16 %v358
    %v429 = vunpack.c.h.b16 %v358
    %v430 = vunpack.c.l.b16 %v359
    %v431 = vunpack.c.h.b16 %v359
    %v432 = vunpack.c.l.b16 %v360
    %v433 = vunpack.c.h.b16 %v360
    %v434 = vunpack.c.l.b16 %v361
    %v435 = vunpack.c.h.b16 %v361
    %v436 = vunpack.c.l.b16 %v362
    %v437 = vunpack.c.h.b16 %v362
    %v438 = vunpack.c.l.b16 %v363
    %v439 = vunpack.c.h.b16 %v363
    %v440 = vunpack.c.l.b16 %v364
    %v441 = vunpack.c.h.b16 %v364
    %v442 = vunpack.c.l.b16 %v365
    %v443 = vunpack.c.h.b16 %v365
    %v444 = vunpack.c.l.b16 %v366
    %v445 = vunpack.c.h.b16 %v366
    %v446 = vunpack.c.l.b16 %v367
    %v447 = vunpack.c.h.b16 %v367
    %v448 = vunpack.c.l.b16 %v368
    %v449 = vunpack.c.h.b16 %v368
    %v450 = vunpack.c.l.b16 %v369
    %v451 = vunpack.c.h.b16 %v369
    %v452 = vunpack.c.l.b16 %v370
    %v453 = vunpack.c.h.b16 %v370
    %v454 = vunpack.c.l.b16 %v371
    %v455 = vunpack.c.h.b16 %v371
    %v456 = vunpack.c.l.b16 %v372
    %v457 = vunpack.c.h.b16 %v372
    %v458 = vunpack.c.l.b16 %v373
    %v459 = vunpack.c.h.b16 %v373
    %v460 = vunpack.c.l.b16 %v374
    %v461 = vunpack.c.h.b16 %v374
    %v462 = vunpack.c.l.b16 %v375
    %v463 = vunpack.c.h.b16 %v375
    %v464 = vunpack.c.l.b16 %v376
    %v465 = vunpack.c.h.b16 %v376
    %v466 = vunpack.c.l.b16 %v377
    %v467 = vunpack.c.h.b16 %v377
    %v468 = vunpack.c.l.b16 %v378
    %v469 = vunpack.c.h.b16 %v378
    %v470 = vunpack.c.l.b16 %v379
    %v471 = vunpack.c.h.b16 %v379
    %v472 = vunpack.c.l.b16 %v380
    %v473 = vunpack.c.h.b16 %v380
    %v474 = vunpack.c.l.b16 %v381
    %v475 = vunpack.c.h.b16 %v381
    %v476 = vunpack.c.l.b16 %v382
    %v477 = vunpack.c.h.b16 %v382
    %v478 = vunpack.c.l.b16 %v383
    %v479 = vunpack.c.h.b16 %v383
    %v480 = vpack.c.b16 %v420, %v416
    %v481 = vpack.c.b16 %v421, %v417
    %v482 = vpack.c.b16 %v422, %v418
    %v483 = vpack.c.b16 %v423, %v419
    %v484 = vpack.c.b16 %v428, %v424
    %v485 = vpack.c.b16 %v429, %v425
    %v486 = vpack.c.b16 %v430, %v426
    %v487 = vpack.c.b16 %v431, %v427
    %v488 = vpack.c.b16 %v436, %v432
    %v489 = vpack.c.b16 %v437, %v433
    %v490 = vpack.c.b16 %v438, %v434
    %v491 = vpack.c.b16 %v439, %v435
    %v492 = vpack.c.b16 %v444, %v440
    %v493 = vpack.c.b16 %v445, %v441
    %v494 = vpack.c.b16 %v446, %v442
    %v495 = vpack.c.b16 %v447, %v443
    %v496 = vpack.c.b16 %v452, %v448
    %v497 = vpack.c.b16 %v453, %v449
    %v498 = vpack.c.b16 %v454, %v450
    %v499 = vpack.c.b16 %v455, %v451
    %v500 = vpack.c.b16 %v460, %v456
    %v501 = vpack.c.b16 %v461, %v457
    %v502 = vpack.c.b16 %v462, %v458
    %v503 = vpack.c.b16 %v463, %v459
    %v504 = vpack.c.b16 %v468, %v464
    %v505 = vpack.c.b16 %v469, %v465
    %v506 = vpack.c.b16 %v470, %v466
    %v507 = vpack.c.b16 %v471, %v467
    %v508 = vpack.c.b16 %v476, %v472
    %v509 = vpack.c.b16 %v477, %v473
    %v510 = vpack.c.b16 %v478, %v474
    %v511 = vpack.c.b16 %v479, %v475
    %544 = vmatprep.subr.bf16.mxu0 %v481
    %545 = vmatpush1.bf16.msra.mxu0 %v480
    %546 = vmatprep.subr.bf16.mxu0 %v485
    %547 = vmatpush1.bf16.msra.mxu0 %v484
    %548 = vmatprep.subr.bf16.mxu0 %v489
    %549 = vmatpush1.bf16.msra.mxu0 %v488
    %550 = vmatprep.subr.bf16.mxu0 %v493
    %551 = vmatpush1.bf16.msra.mxu0 %v492
    %552 = vmatprep.subr.bf16.mxu0 %v497
    %553 = vmatpush1.bf16.msra.mxu0 %v496
    %554 = vmatprep.subr.bf16.mxu0 %v501
    %555 = vmatpush1.bf16.msra.mxu0 %v500
    %556 = vmatprep.subr.bf16.mxu0 %v505
    %557 = vmatpush1.bf16.msra.mxu0 %v504
    %558 = vmatprep.subr.bf16.mxu0 %v509
    %559 = vmatpush1.bf16.msra.mxu0 %v508
    %560 = vmatprep.subr.bf16.mxu0 0
    %561 = vmatpush1.bf16.msra.mxu0 0
    %562 = vmatprep.subr.bf16.mxu0 0
    %563 = vmatpush1.bf16.msra.mxu0 0
    %564 = vmatprep.subr.bf16.mxu0 0
    %565 = vmatpush1.bf16.msra.mxu0 0
    %566 = vmatprep.subr.bf16.mxu0 0
    %567 = vmatpush1.bf16.msra.mxu0 0
    %568 = vmatprep.subr.bf16.mxu0 0
    %569 = vmatpush1.bf16.msra.mxu0 0
    %570 = vmatprep.subr.bf16.mxu0 0
    %571 = vmatpush1.bf16.msra.mxu0 0
    %572 = vmatprep.subr.bf16.mxu0 0
    %573 = vmatpush1.bf16.msra.mxu0 0
    %574 = vmatprep.subr.bf16.mxu0 0
    %575 = vmatpush1.bf16.msra.mxu0 0
    %576 = vmatprep.mubr.bf16.mxu0 0
    %577 = vmatmul.mubr.bf16.gmra.mrb[0].mxu0 0
    %v578 = vpop.f32.mrb[0].mxu0
    %v579 = vadd.f32 0.0, %v578
    %v580 = vpop.f32.mrb[0].mxu0
    %v581 = vadd.f32 0.0, %v580
    %v582 = vpop.f32.mrb[0].mxu0
    %v583 = vpop.f32.mrb[0].mxu0
    %584 = vdwg.mxu0
    %585 = vmatprep.subr.bf16.mxu0 %v483
    %586 = vmatpush1.bf16.msra.mxu0 %v482
    %587 = vmatprep.subr.bf16.mxu0 %v487
    %588 = vmatpush1.bf16.msra.mxu0 %v486
    %589 = vmatprep.subr.bf16.mxu0 %v491
    %590 = vmatpush1.bf16.msra.mxu0 %v490
    %591 = vmatprep.subr.bf16.mxu0 %v495
    %592 = vmatpush1.bf16.msra.mxu0 %v494
    %593 = vmatprep.subr.bf16.mxu0 %v499
    %594 = vmatpush1.bf16.msra.mxu0 %v498
    %595 = vmatprep.subr.bf16.mxu0 %v503
    %596 = vmatpush1.bf16.msra.mxu0 %v502
    %597 = vmatprep.subr.bf16.mxu0 %v507
    %598 = vmatpush1.bf16.msra.mxu0 %v506
    %599 = vmatprep.subr.bf16.mxu0 %v511
    %600 = vmatpush1.bf16.msra.mxu0 %v510
    %601 = vmatprep.subr.bf16.mxu0 0
    %602 = vmatpush1.bf16.msra.mxu0 0
    %603 = vmatprep.subr.bf16.mxu0 0
    %604 = vmatpush1.bf16.msra.mxu0 0
    %605 = vmatprep.subr.bf16.mxu0 0
    %606 = vmatpush1.bf16.msra.mxu0 0
    %607 = vmatprep.subr.bf16.mxu0 0
    %608 = vmatpush1.bf16.msra.mxu0 0
    %609 = vmatprep.subr.bf16.mxu0 0
    %610 = vmatpush1.bf16.msra.mxu0 0
    %611 = vmatprep.subr.bf16.mxu0 0
    %612 = vmatpush1.bf16.msra.mxu0 0
    %613 = vmatprep.subr.bf16.mxu0 0
    %614 = vmatpush1.bf16.msra.mxu0 0
    %615 = vmatprep.subr.bf16.mxu0 0
    %616 = vmatpush1.bf16.msra.mxu0 0
    %617 = vmatprep.mubr.bf16.mxu0 0
    %618 = vmatmul.mubr.bf16.gmra.mrb[0].mxu0 0
    %v619 = vpop.f32.mrb[0].mxu0
    %v620 = vadd.f32 0.0, %v619
    %v621 = vpop.f32.mrb[0].mxu0
    %v622 = vadd.f32 0.0, %v621
    %v623 = vpop.f32.mrb[0].mxu0
    %v624 = vpop.f32.mrb[0].mxu0
    %625 = vdwg.mxu0
    %v626 = vadd.f32 %v241, %v579
    %v627 = vadd.f32 %v243, %v581
    %v628 = vadd.f32 %v314, %v620
    %v629 = vadd.f32 %v316, %v622
    %v630 = vxor.u32 %v626, 2147483648
    %v631 = vmul.f32 %v630, 1.442695
    %v632 = vpow.pop %v631
    %v633 = vadd.f32 %v632, 1.0
    %v634 = vrcp.pop %v633
    %v635 = vmul.f32 1.0, %v634
    %v636 = vxor.u32 %v627, 2147483648
    %v637 = vmul.f32 %v636, 1.442695
    %v638 = vpow.pop %v637
    %v639 = vadd.f32 %v638, 1.0
    %v640 = vrcp.pop %v639
    %v641 = vmul.f32 1.0, %v640
    %v642 = vtanh.pop %v628
    %v643 = vxor.u32 %v629, 2147483648
    %v644 = vmul.f32 %v643, 1.442695
    %v645 = vpow.pop %v644
    %v646 = vadd.f32 %v645, 1.0
    %v647 = vrcp.pop %v646
    %v648 = vmul.f32 1.0, %v647
    %v649 = vmul.f32 %v641, 0.0
    %v650 = vmul.f32 %v635, %v642
    %v651 = vadd.f32 %v649, %v650
    %v652 = vtanh.pop %v651
    %v653 = vmul.f32 %v648, %v652
    %v654 = vpack.c.bf16 %v653, %v653
    %655 = vmatprep.subr.bf16.mxu0 %v481
    %656 = vmatpush1.bf16.msra.mxu0 %v480
    %657 = vmatprep.subr.bf16.mxu0 %v485
    %658 = vmatpush1.bf16.msra.mxu0 %v484
    %659 = vmatprep.subr.bf16.mxu0 %v489
    %660 = vmatpush1.bf16.msra.mxu0 %v488
    %661 = vmatprep.subr.bf16.mxu0 %v493
    %662 = vmatpush1.bf16.msra.mxu0 %v492
    %663 = vmatprep.subr.bf16.mxu0 %v497
    %664 = vmatpush1.bf16.msra.mxu0 %v496
    %665 = vmatprep.subr.bf16.mxu0 %v501
    %666 = vmatpush1.bf16.msra.mxu0 %v500
    %667 = vmatprep.subr.bf16.mxu0 %v505
    %668 = vmatpush1.bf16.msra.mxu0 %v504
    %669 = vmatprep.subr.bf16.mxu0 %v509
    %670 = vmatpush1.bf16.msra.mxu0 %v508
    %671 = vmatprep.subr.bf16.mxu0 0
    %672 = vmatpush1.bf16.msra.mxu0 0
    %673 = vmatprep.subr.bf16.mxu0 0
    %674 = vmatpush1.bf16.msra.mxu0 0
    %675 = vmatprep.subr.bf16.mxu0 0
    %676 = vmatpush1.bf16.msra.mxu0 0
    %677 = vmatprep.subr.bf16.mxu0 0
    %678 = vmatpush1.bf16.msra.mxu0 0
    %679 = vmatprep.subr.bf16.mxu0 0
    %680 = vmatpush1.bf16.msra.mxu0 0
    %681 = vmatprep.subr.bf16.mxu0 0
    %682 = vmatpush1.bf16.msra.mxu0 0
    %683 = vmatprep.subr.bf16.mxu0 0
    %684 = vmatpush1.bf16.msra.mxu0 0
    %685 = vmatprep.subr.bf16.mxu0 0
    %686 = vmatpush1.bf16.msra.mxu0 0
    %687 = vmatprep.mubr.bf16.mxu0 0
    %688 = vmatmul.mubr.bf16.gmra.mrb[0].mxu0 %v654
    %v689 = vpop.f32.mrb[0].mxu0
    %v690 = vadd.f32 0.0, %v689
    %v691 = vpop.f32.mrb[0].mxu0
    %v692 = vadd.f32 0.0, %v691
    %v693 = vpop.f32.mrb[0].mxu0
    %v694 = vpop.f32.mrb[0].mxu0
    %695 = vdwg.mxu0
    %696 = vmatprep.subr.bf16.mxu0 %v483
    %697 = vmatpush1.bf16.msra.mxu0 %v482
    %698 = vmatprep.subr.bf16.mxu0 %v487
    %699 = vmatpush1.bf16.msra.mxu0 %v486
    %700 = vmatprep.subr.bf16.mxu0 %v491
    %701 = vmatpush1.bf16.msra.mxu0 %v490
    %702 = vmatprep.subr.bf16.mxu0 %v495
    %703 = vmatpush1.bf16.msra.mxu0 %v494
    %704 = vmatprep.subr.bf16.mxu0 %v499
    %705 = vmatpush1.bf16.msra.mxu0 %v498
    %706 = vmatprep.subr.bf16.mxu0 %v503
    %707 = vmatpush1.bf16.msra.mxu0 %v502
    %708 = vmatprep.subr.bf16.mxu0 %v507
    %709 = vmatpush1.bf16.msra.mxu0 %v506
    %710 = vmatprep.subr.bf16.mxu0 %v511
    %711 = vmatpush1.bf16.msra.mxu0 %v510
    %712 = vmatprep.subr.bf16.mxu0 0
    %713 = vmatpush1.bf16.msra.mxu0 0
    %714 = vmatprep.subr.bf16.mxu0 0
    %715 = vmatpush1.bf16.msra.mxu0 0
    %716 = vmatprep.subr.bf16.mxu0 0
    %717 = vmatpush1.bf16.msra.mxu0 0
    %718 = vmatprep.subr.bf16.mxu0 0
    %719 = vmatpush1.bf16.msra.mxu0 0
    %720 = vmatprep.subr.bf16.mxu0 0
    %721 = vmatpush1.bf16.msra.mxu0 0
    %722 = vmatprep.subr.bf16.mxu0 0
    %723 = vmatpush1.bf16.msra.mxu0 0
    %724 = vmatprep.subr.bf16.mxu0 0
    %725 = vmatpush1.bf16.msra.mxu0 0
    %726 = vmatprep.subr.bf16.mxu0 0
    %727 = vmatpush1.bf16.msra.mxu0 0
    %728 = vmatprep.mubr.bf16.mxu0 0
    %729 = vmatmul.mubr.bf16.gmra.mrb[0].mxu0 %v654
    %v730 = vpop.f32.mrb[0].mxu0
    %v731 = vadd.f32 0.0, %v730
    %v732 = vpop.f32.mrb[0].mxu0
    %v733 = vadd.f32 0.0, %v732
    %v734 = vpop.f32.mrb[0].mxu0
    %v735 = vpop.f32.mrb[0].mxu0
    %736 = vdwg.mxu0
    %v737 = vadd.f32 %v245, %v690
    %v738 = vadd.f32 %v247, %v692
    %v739 = vadd.f32 %v318, %v731
    %v740 = vadd.f32 %v320, %v733
    %v741 = vxor.u32 %v737, 2147483648
    %v742 = vmul.f32 %v741, 1.442695
    %v743 = vpow.pop %v742
    %v744 = vadd.f32 %v743, 1.0
    %v745 = vrcp.pop %v744
    %v746 = vmul.f32 1.0, %v745
    %v747 = vxor.u32 %v738, 2147483648
    %v748 = vmul.f32 %v747, 1.442695
    %v749 = vpow.pop %v748
    %v750 = vadd.f32 %v749, 1.0
    %v751 = vrcp.pop %v750
    %v752 = vmul.f32 1.0, %v751
    %v753 = vtanh.pop %v739
    %v754 = vxor.u32 %v740, 2147483648
    %v755 = vmul.f32 %v754, 1.442695
    %v756 = vpow.pop %v755
    %v757 = vadd.f32 %v756, 1.0
    %v758 = vrcp.pop %v757
    %v759 = vmul.f32 1.0, %v758
    %v760 = vmul.f32 %v752, %v651
    %v761 = vmul.f32 %v746, %v753
    %v762 = vadd.f32 %v760, %v761
    %v763 = vtanh.pop %v762
    %v764 = vmul.f32 %v759, %v763
    %v765 = vpack.c.bf16 %v764, %v764
    %766 = vmatprep.subr.bf16.mxu0 %v481
    %767 = vmatpush1.bf16.msra.mxu0 %v480
    %768 = vmatprep.subr.bf16.mxu0 %v485
    %769 = vmatpush1.bf16.msra.mxu0 %v484
    %770 = vmatprep.subr.bf16.mxu0 %v489
    %771 = vmatpush1.bf16.msra.mxu0 %v488
    %772 = vmatprep.subr.bf16.mxu0 %v493
    %773 = vmatpush1.bf16.msra.mxu0 %v492
    %774 = vmatprep.subr.bf16.mxu0 %v497
    %775 = vmatpush1.bf16.msra.mxu0 %v496
    %776 = vmatprep.subr.bf16.mxu0 %v501
    %777 = vmatpush1.bf16.msra.mxu0 %v500
    %778 = vmatprep.subr.bf16.mxu0 %v505
    %779 = vmatpush1.bf16.msra.mxu0 %v504
    %780 = vmatprep.subr.bf16.mxu0 %v509
    %781 = vmatpush1.bf16.msra.mxu0 %v508
    %782 = vmatprep.subr.bf16.mxu0 0
    %783 = vmatpush1.bf16.msra.mxu0 0
    %784 = vmatprep.subr.bf16.mxu0 0
    %785 = vmatpush1.bf16.msra.mxu0 0
    %786 = vmatprep.subr.bf16.mxu0 0
    %787 = vmatpush1.bf16.msra.mxu0 0
    %788 = vmatprep.subr.bf16.mxu0 0
    %789 = vmatpush1.bf16.msra.mxu0 0
    %790 = vmatprep.subr.bf16.mxu0 0
    %791 = vmatpush1.bf16.msra.mxu0 0
    %792 = vmatprep.subr.bf16.mxu0 0
    %793 = vmatpush1.bf16.msra.mxu0 0
    %794 = vmatprep.subr.bf16.mxu0 0
    %795 = vmatpush1.bf16.msra.mxu0 0
    %796 = vmatprep.subr.bf16.mxu0 0
    %797 = vmatpush1.bf16.msra.mxu0 0
    %798 = vmatprep.mubr.bf16.mxu0 0
    %799 = vmatmul.mubr.bf16.gmra.mrb[0].mxu0 %v765
    %v800 = vpop.f32.mrb[0].mxu0
    %v801 = vadd.f32 0.0, %v800
    %v802 = vpop.f32.mrb[0].mxu0
    %v803 = vadd.f32 0.0, %v802
    %v804 = vpop.f32.mrb[0].mxu0
    %v805 = vpop.f32.mrb[0].mxu0
    %806 = vdwg.mxu0
    %807 = vmatprep.subr.bf16.mxu0 %v483
    %808 = vmatpush1.bf16.msra.mxu0 %v482
    %809 = vmatprep.subr.bf16.mxu0 %v487
    %810 = vmatpush1.bf16.msra.mxu0 %v486
    %811 = vmatprep.subr.bf16.mxu0 %v491
    %812 = vmatpush1.bf16.msra.mxu0 %v490
    %813 = vmatprep.subr.bf16.mxu0 %v495
    %814 = vmatpush1.bf16.msra.mxu0 %v494
    %815 = vmatprep.subr.bf16.mxu0 %v499
    %816 = vmatpush1.bf16.msra.mxu0 %v498
    %817 = vmatprep.subr.bf16.mxu0 %v503
    %818 = vmatpush1.bf16.msra.mxu0 %v502
    %819 = vmatprep.subr.bf16.mxu0 %v507
    %820 = vmatpush1.bf16.msra.mxu0 %v506
    %821 = vmatprep.subr.bf16.mxu0 %v511
    %822 = vmatpush1.bf16.msra.mxu0 %v510
    %823 = vmatprep.subr.bf16.mxu0 0
    %824 = vmatpush1.bf16.msra.mxu0 0
    %825 = vmatprep.subr.bf16.mxu0 0
    %826 = vmatpush1.bf16.msra.mxu0 0
    %827 = vmatprep.subr.bf16.mxu0 0
    %828 = vmatpush1.bf16.msra.mxu0 0
    %829 = vmatprep.subr.bf16.mxu0 0
    %830 = vmatpush1.bf16.msra.mxu0 0
    %831 = vmatprep.subr.bf16.mxu0 0
    %832 = vmatpush1.bf16.msra.mxu0 0
    %833 = vmatprep.subr.bf16.mxu0 0
    %834 = vmatpush1.bf16.msra.mxu0 0
    %835 = vmatprep.subr.bf16.mxu0 0
    %836 = vmatpush1.bf16.msra.mxu0 0
    %837 = vmatprep.subr.bf16.mxu0 0
    %838 = vmatpush1.bf16.msra.mxu0 0
    %839 = vmatprep.mubr.bf16.mxu0 0
    %840 = vmatmul.mubr.bf16.gmra.mrb[0].mxu0 %v765
    %v841 = vpop.f32.mrb[0].mxu0
    %v842 = vadd.f32 0.0, %v841
    %v843 = vpop.f32.mrb[0].mxu0
    %v844 = vadd.f32 0.0, %v843
    %v845 = vpop.f32.mrb[0].mxu0
    %v846 = vpop.f32.mrb[0].mxu0
    %847 = vdwg.mxu0
    %v848 = vadd.f32 %v251, %v801
    %v849 = vadd.f32 %v253, %v803
    %v850 = vadd.f32 %v324, %v842
    %v851 = vadd.f32 %v326, %v844
    %v852 = vxor.u32 %v848, 2147483648
    %v853 = vmul.f32 %v852, 1.442695
    %v854 = vpow.pop %v853
    %v855 = vadd.f32 %v854, 1.0
    %v856 = vrcp.pop %v855
    %v857 = vmul.f32 1.0, %v856
    %v858 = vxor.u32 %v849, 2147483648
    %v859 = vmul.f32 %v858, 1.442695
    %v860 = vpow.pop %v859
    %v861 = vadd.f32 %v860, 1.0
    %v862 = vrcp.pop %v861
    %v863 = vmul.f32 1.0, %v862
    %v864 = vtanh.pop %v850
    %v865 = vxor.u32 %v851, 2147483648
    %v866 = vmul.f32 %v865, 1.442695
    %v867 = vpow.pop %v866
    %v868 = vadd.f32 %v867, 1.0
    %v869 = vrcp.pop %v868
    %v870 = vmul.f32 1.0, %v869
    %v871 = vmul.f32 %v863, %v762
    %v872 = vmul.f32 %v857, %v864
    %v873 = vadd.f32 %v871, %v872
    %v874 = vtanh.pop %v873
    %v875 = vmul.f32 %v870, %v874
    %v876 = vpack.c.bf16 %v875, %v875
    %877 = vmatprep.subr.bf16.mxu0 %v481
    %878 = vmatpush1.bf16.msra.mxu0 %v480
    %879 = vmatprep.subr.bf16.mxu0 %v485
    %880 = vmatpush1.bf16.msra.mxu0 %v484
    %881 = vmatprep.subr.bf16.mxu0 %v489
    %882 = vmatpush1.bf16.msra.mxu0 %v488
    %883 = vmatprep.subr.bf16.mxu0 %v493
    %884 = vmatpush1.bf16.msra.mxu0 %v492
    %885 = vmatprep.subr.bf16.mxu0 %v497
    %886 = vmatpush1.bf16.msra.mxu0 %v496
    %887 = vmatprep.subr.bf16.mxu0 %v501
    %888 = vmatpush1.bf16.msra.mxu0 %v500
    %889 = vmatprep.subr.bf16.mxu0 %v505
    %890 = vmatpush1.bf16.msra.mxu0 %v504
    %891 = vmatprep.subr.bf16.mxu0 %v509
    %892 = vmatpush1.bf16.msra.mxu0 %v508
    %893 = vmatprep.subr.bf16.mxu0 0
    %894 = vmatpush1.bf16.msra.mxu0 0
    %895 = vmatprep.subr.bf16.mxu0 0
    %896 = vmatpush1.bf16.msra.mxu0 0
    %897 = vmatprep.subr.bf16.mxu0 0
    %898 = vmatpush1.bf16.msra.mxu0 0
    %899 = vmatprep.subr.bf16.mxu0 0
    %900 = vmatpush1.bf16.msra.mxu0 0
    %901 = vmatprep.subr.bf16.mxu0 0
    %902 = vmatpush1.bf16.msra.mxu0 0
    %903 = vmatprep.subr.bf16.mxu0 0
    %904 = vmatpush1.bf16.msra.mxu0 0
    %905 = vmatprep.subr.bf16.mxu0 0
    %906 = vmatpush1.bf16.msra.mxu0 0
    %907 = vmatprep.subr.bf16.mxu0 0
    %908 = vmatpush1.bf16.msra.mxu0 0
    %909 = vmatprep.mubr.bf16.mxu0 0
    %910 = vmatmul.mubr.bf16.gmra.mrb[0].mxu0 %v876
    %v911 = vpop.f32.mrb[0].mxu0
    %v912 = vadd.f32 0.0, %v911
    %v913 = vpop.f32.mrb[0].mxu0
    %v914 = vadd.f32 0.0, %v913
    %v915 = vpop.f32.mrb[0].mxu0
    %v916 = vpop.f32.mrb[0].mxu0
    %917 = vdwg.mxu0
    %918 = vmatprep.subr.bf16.mxu0 %v483
    %919 = vmatpush1.bf16.msra.mxu0 %v482
    %920 = vmatprep.subr.bf16.mxu0 %v487
    %921 = vmatpush1.bf16.msra.mxu0 %v486
    %922 = vmatprep.subr.bf16.mxu0 %v491
    %923 = vmatpush1.bf16.msra.mxu0 %v490
    %924 = vmatprep.subr.bf16.mxu0 %v495
    %925 = vmatpush1.bf16.msra.mxu0 %v494
    %926 = vmatprep.subr.bf16.mxu0 %v499
    %927 = vmatpush1.bf16.msra.mxu0 %v498
    %928 = vmatprep.subr.bf16.mxu0 %v503
    %929 = vmatpush1.bf16.msra.mxu0 %v502
    %930 = vmatprep.subr.bf16.mxu0 %v507
    %931 = vmatpush1.bf16.msra.mxu0 %v506
    %932 = vmatprep.subr.bf16.mxu0 %v511
    %933 = vmatpush1.bf16.msra.mxu0 %v510
    %934 = vmatprep.subr.bf16.mxu0 0
    %935 = vmatpush1.bf16.msra.mxu0 0
    %936 = vmatprep.subr.bf16.mxu0 0
    %937 = vmatpush1.bf16.msra.mxu0 0
    %938 = vmatprep.subr.bf16.mxu0 0
    %939 = vmatpush1.bf16.msra.mxu0 0
    %940 = vmatprep.subr.bf16.mxu0 0
    %941 = vmatpush1.bf16.msra.mxu0 0
    %942 = vmatprep.subr.bf16.mxu0 0
    %943 = vmatpush1.bf16.msra.mxu0 0
    %944 = vmatprep.subr.bf16.mxu0 0
    %945 = vmatpush1.bf16.msra.mxu0 0
    %946 = vmatprep.subr.bf16.mxu0 0
    %947 = vmatpush1.bf16.msra.mxu0 0
    %948 = vmatprep.subr.bf16.mxu0 0
    %949 = vmatpush1.bf16.msra.mxu0 0
    %950 = vmatprep.mubr.bf16.mxu0 0
    %951 = vmatmul.mubr.bf16.gmra.mrb[0].mxu0 %v876
    %v952 = vpop.f32.mrb[0].mxu0
    %v953 = vadd.f32 0.0, %v952
    %v954 = vpop.f32.mrb[0].mxu0
    %v955 = vadd.f32 0.0, %v954
    %v956 = vpop.f32.mrb[0].mxu0
    %v957 = vpop.f32.mrb[0].mxu0
    %958 = vdwg.mxu0
    %v959 = vadd.f32 %v255, %v912
    %v960 = vadd.f32 %v257, %v914
    %v961 = vadd.f32 %v328, %v953
    %v962 = vadd.f32 %v330, %v955
    %v963 = vxor.u32 %v959, 2147483648
    %v964 = vmul.f32 %v963, 1.442695
    %v965 = vpow.pop %v964
    %v966 = vadd.f32 %v965, 1.0
    %v967 = vrcp.pop %v966
    %v968 = vmul.f32 1.0, %v967
    %v969 = vxor.u32 %v960, 2147483648
    %v970 = vmul.f32 %v969, 1.442695
    %v971 = vpow.pop %v970
    %v972 = vadd.f32 %v971, 1.0
    %v973 = vrcp.pop %v972
    %v974 = vmul.f32 1.0, %v973
    %v975 = vtanh.pop %v961
    %v976 = vxor.u32 %v962, 2147483648
    %v977 = vmul.f32 %v976, 1.442695
    %v978 = vpow.pop %v977
    %v979 = vadd.f32 %v978, 1.0
    %v980 = vrcp.pop %v979
    %v981 = vmul.f32 1.0, %v980
    %v982 = vmul.f32 %v974, %v873
    %v983 = vmul.f32 %v968, %v975
    %v984 = vadd.f32 %v982, %v983
    %v985 = vtanh.pop %v984
    %v986 = vmul.f32 %v981, %v985
    %v987 = vpack.c.bf16 %v986, %v986
    %988 = vmatprep.subr.bf16.mxu0 %v481
    %989 = vmatpush1.bf16.msra.mxu0 %v480
    %990 = vmatprep.subr.bf16.mxu0 %v485
    %991 = vmatpush1.bf16.msra.mxu0 %v484
    %992 = vmatprep.subr.bf16.mxu0 %v489
    %993 = vmatpush1.bf16.msra.mxu0 %v488
    %994 = vmatprep.subr.bf16.mxu0 %v493
    %995 = vmatpush1.bf16.msra.mxu0 %v492
    %996 = vmatprep.subr.bf16.mxu0 %v497
    %997 = vmatpush1.bf16.msra.mxu0 %v496
    %998 = vmatprep.subr.bf16.mxu0 %v501
    %999 = vmatpush1.bf16.msra.mxu0 %v500
    %1000 = vmatprep.subr.bf16.mxu0 %v505
    %1001 = vmatpush1.bf16.msra.mxu0 %v504
    %1002 = vmatprep.subr.bf16.mxu0 %v509
    %1003 = vmatpush1.bf16.msra.mxu0 %v508
    %1004 = vmatprep.subr.bf16.mxu0 0
    %1005 = vmatpush1.bf16.msra.mxu0 0
    %1006 = vmatprep.subr.bf16.mxu0 0
    %1007 = vmatpush1.bf16.msra.mxu0 0
    %1008 = vmatprep.subr.bf16.mxu0 0
    %1009 = vmatpush1.bf16.msra.mxu0 0
    %1010 = vmatprep.subr.bf16.mxu0 0
    %1011 = vmatpush1.bf16.msra.mxu0 0
    %1012 = vmatprep.subr.bf16.mxu0 0
    %1013 = vmatpush1.bf16.msra.mxu0 0
    %1014 = vmatprep.subr.bf16.mxu0 0
    %1015 = vmatpush1.bf16.msra.mxu0 0
    %1016 = vmatprep.subr.bf16.mxu0 0
    %1017 = vmatpush1.bf16.msra.mxu0 0
    %1018 = vmatprep.subr.bf16.mxu0 0
    %1019 = vmatpush1.bf16.msra.mxu0 0
    %1020 = vmatprep.mubr.bf16.mxu0 0
    %1021 = vmatmul.mubr.bf16.gmra.mrb[0].mxu0 %v987
    %v1022 = vpop.f32.mrb[0].mxu0
    %v1023 = vadd.f32 0.0, %v1022
    %v1024 = vpop.f32.mrb[0].mxu0
    %v1025 = vadd.f32 0.0, %v1024
    %v1026 = vpop.f32.mrb[0].mxu0
    %v1027 = vpop.f32.mrb[0].mxu0
    %1028 = vdwg.mxu0
    %1029 = vmatprep.subr.bf16.mxu0 %v483
    %1030 = vmatpush1.bf16.msra.mxu0 %v482
    %1031 = vmatprep.subr.bf16.mxu0 %v487
    %1032 = vmatpush1.bf16.msra.mxu0 %v486
    %1033 = vmatprep.subr.bf16.mxu0 %v491
    %1034 = vmatpush1.bf16.msra.mxu0 %v490
    %1035 = vmatprep.subr.bf16.mxu0 %v495
    %1036 = vmatpush1.bf16.msra.mxu0 %v494
    %1037 = vmatprep.subr.bf16.mxu0 %v499
    %1038 = vmatpush1.bf16.msra.mxu0 %v498
    %1039 = vmatprep.subr.bf16.mxu0 %v503
    %1040 = vmatpush1.bf16.msra.mxu0 %v502
    %1041 = vmatprep.subr.bf16.mxu0 %v507
    %1042 = vmatpush1.bf16.msra.mxu0 %v506
    %1043 = vmatprep.subr.bf16.mxu0 %v511
    %1044 = vmatpush1.bf16.msra.mxu0 %v510
    %1045 = vmatprep.subr.bf16.mxu0 0
    %1046 = vmatpush1.bf16.msra.mxu0 0
    %1047 = vmatprep.subr.bf16.mxu0 0
    %1048 = vmatpush1.bf16.msra.mxu0 0
    %1049 = vmatprep.subr.bf16.mxu0 0
    %1050 = vmatpush1.bf16.msra.mxu0 0
    %1051 = vmatprep.subr.bf16.mxu0 0
    %1052 = vmatpush1.bf16.msra.mxu0 0
    %1053 = vmatprep.subr.bf16.mxu0 0
    %1054 = vmatpush1.bf16.msra.mxu0 0
    %1055 = vmatprep.subr.bf16.mxu0 0
    %1056 = vmatpush1.bf16.msra.mxu0 0
    %1057 = vmatprep.subr.bf16.mxu0 0
    %1058 = vmatpush1.bf16.msra.mxu0 0
    %1059 = vmatprep.subr.bf16.mxu0 0
    %1060 = vmatpush1.bf16.msra.mxu0 0
    %1061 = vmatprep.mubr.bf16.mxu0 0
    %1062 = vmatmul.mubr.bf16.gmra.mrb[0].mxu0 %v987
    %v1063 = vpop.f32.mrb[0].mxu0
    %v1064 = vadd.f32 0.0, %v1063
    %v1065 = vpop.f32.mrb[0].mxu0
    %v1066 = vadd.f32 0.0, %v1065
    %v1067 = vpop.f32.mrb[0].mxu0
    %v1068 = vpop.f32.mrb[0].mxu0
    %1069 = vdwg.mxu0
    %v1070 = vadd.f32 %v261, %v1023
    %v1071 = vadd.f32 %v263, %v1025
    %v1072 = vadd.f32 %v334, %v1064
    %v1073 = vadd.f32 %v336, %v1066
    %v1074 = vxor.u32 %v1070, 2147483648
    %v1075 = vmul.f32 %v1074, 1.442695
    %v1076 = vpow.pop %v1075
    %v1077 = vadd.f32 %v1076, 1.0
    %v1078 = vrcp.pop %v1077
    %v1079 = vmul.f32 1.0, %v1078
    %v1080 = vxor.u32 %v1071, 2147483648
    %v1081 = vmul.f32 %v1080, 1.442695
    %v1082 = vpow.pop %v1081
    %v1083 = vadd.f32 %v1082, 1.0
    %v1084 = vrcp.pop %v1083
    %v1085 = vmul.f32 1.0, %v1084
    %v1086 = vtanh.pop %v1072
    %v1087 = vxor.u32 %v1073, 2147483648
    %v1088 = vmul.f32 %v1087, 1.442695
    %v1089 = vpow.pop %v1088
    %v1090 = vadd.f32 %v1089, 1.0
    %v1091 = vrcp.pop %v1090
    %v1092 = vmul.f32 1.0, %v1091
    %v1093 = vmul.f32 %v1085, %v984
    %v1094 = vmul.f32 %v1079, %v1086
    %v1095 = vadd.f32 %v1093, %v1094
    %v1096 = vtanh.pop %v1095
    %v1097 = vmul.f32 %v1092, %v1096
    %v1098 = vpack.c.bf16 %v1097, %v1097
    %1099 = vmatprep.subr.bf16.mxu0 %v481
    %1100 = vmatpush1.bf16.msra.mxu0 %v480
    %1101 = vmatprep.subr.bf16.mxu0 %v485
    %1102 = vmatpush1.bf16.msra.mxu0 %v484
    %1103 = vmatprep.subr.bf16.mxu0 %v489
    %1104 = vmatpush1.bf16.msra.mxu0 %v488
    %1105 = vmatprep.subr.bf16.mxu0 %v493
    %1106 = vmatpush1.bf16.msra.mxu0 %v492
    %1107 = vmatprep.subr.bf16.mxu0 %v497
    %1108 = vmatpush1.bf16.msra.mxu0 %v496
    %1109 = vmatprep.subr.bf16.mxu0 %v501
    %1110 = vmatpush1.bf16.msra.mxu0 %v500
    %1111 = vmatprep.subr.bf16.mxu0 %v505
    %1112 = vmatpush1.bf16.msra.mxu0 %v504
    %1113 = vmatprep.subr.bf16.mxu0 %v509
    %1114 = vmatpush1.bf16.msra.mxu0 %v508
    %1115 = vmatprep.subr.bf16.mxu0 0
    %1116 = vmatpush1.bf16.msra.mxu0 0
    %1117 = vmatprep.subr.bf16.mxu0 0
    %1118 = vmatpush1.bf16.msra.mxu0 0
    %1119 = vmatprep.subr.bf16.mxu0 0
    %1120 = vmatpush1.bf16.msra.mxu0 0
    %1121 = vmatprep.subr.bf16.mxu0 0
    %1122 = vmatpush1.bf16.msra.mxu0 0
    %1123 = vmatprep.subr.bf16.mxu0 0
    %1124 = vmatpush1.bf16.msra.mxu0 0
    %1125 = vmatprep.subr.bf16.mxu0 0
    %1126 = vmatpush1.bf16.msra.mxu0 0
    %1127 = vmatprep.subr.bf16.mxu0 0
    %1128 = vmatpush1.bf16.msra.mxu0 0
    %1129 = vmatprep.subr.bf16.mxu0 0
    %1130 = vmatpush1.bf16.msra.mxu0 0
    %1131 = vmatprep.mubr.bf16.mxu0 0
    %1132 = vmatmul.mubr.bf16.gmra.mrb[0].mxu0 %v1098
    %v1133 = vpop.f32.mrb[0].mxu0
    %v1134 = vadd.f32 0.0, %v1133
    %v1135 = vpop.f32.mrb[0].mxu0
    %v1136 = vadd.f32 0.0, %v1135
    %v1137 = vpop.f32.mrb[0].mxu0
    %v1138 = vpop.f32.mrb[0].mxu0
    %1139 = vdwg.mxu0
    %1140 = vmatprep.subr.bf16.mxu0 %v483
    %1141 = vmatpush1.bf16.msra.mxu0 %v482
    %1142 = vmatprep.subr.bf16.mxu0 %v487
    %1143 = vmatpush1.bf16.msra.mxu0 %v486
    %1144 = vmatprep.subr.bf16.mxu0 %v491
    %1145 = vmatpush1.bf16.msra.mxu0 %v490
    %1146 = vmatprep.subr.bf16.mxu0 %v495
    %1147 = vmatpush1.bf16.msra.mxu0 %v494
    %1148 = vmatprep.subr.bf16.mxu0 %v499
    %1149 = vmatpush1.bf16.msra.mxu0 %v498
    %1150 = vmatprep.subr.bf16.mxu0 %v503
    %1151 = vmatpush1.bf16.msra.mxu0 %v502
    %1152 = vmatprep.subr.bf16.mxu0 %v507
    %1153 = vmatpush1.bf16.msra.mxu0 %v506
    %1154 = vmatprep.subr.bf16.mxu0 %v511
    %1155 = vmatpush1.bf16.msra.mxu0 %v510
    %1156 = vmatprep.subr.bf16.mxu0 0
    %1157 = vmatpush1.bf16.msra.mxu0 0
    %1158 = vmatprep.subr.bf16.mxu0 0
    %1159 = vmatpush1.bf16.msra.mxu0 0
    %1160 = vmatprep.subr.bf16.mxu0 0
    %1161 = vmatpush1.bf16.msra.mxu0 0
    %1162 = vmatprep.subr.bf16.mxu0 0
    %1163 = vmatpush1.bf16.msra.mxu0 0
    %1164 = vmatprep.subr.bf16.mxu0 0
    %1165 = vmatpush1.bf16.msra.mxu0 0
    %1166 = vmatprep.subr.bf16.mxu0 0
    %1167 = vmatpush1.bf16.msra.mxu0 0
    %1168 = vmatprep.subr.bf16.mxu0 0
    %1169 = vmatpush1.bf16.msra.mxu0 0
    %1170 = vmatprep.subr.bf16.mxu0 0
    %1171 = vmatpush1.bf16.msra.mxu0 0
    %1172 = vmatprep.mubr.bf16.mxu0 0
    %1173 = vmatmul.mubr.bf16.gmra.mrb[0].mxu0 %v1098
    %v1174 = vpop.f32.mrb[0].mxu0
    %v1175 = vadd.f32 0.0, %v1174
    %v1176 = vpop.f32.mrb[0].mxu0
    %v1177 = vadd.f32 0.0, %v1176
    %v1178 = vpop.f32.mrb[0].mxu0
    %v1179 = vpop.f32.mrb[0].mxu0
    %1180 = vdwg.mxu0
    %v1181 = vadd.f32 %v265, %v1134
    %v1182 = vadd.f32 %v267, %v1136
    %v1183 = vadd.f32 %v338, %v1175
    %v1184 = vadd.f32 %v340, %v1177
    %v1185 = vxor.u32 %v1181, 2147483648
    %v1186 = vmul.f32 %v1185, 1.442695
    %v1187 = vpow.pop %v1186
    %v1188 = vadd.f32 %v1187, 1.0
    %v1189 = vrcp.pop %v1188
    %v1190 = vmul.f32 1.0, %v1189
    %v1191 = vxor.u32 %v1182, 2147483648
    %v1192 = vmul.f32 %v1191, 1.442695
    %v1193 = vpow.pop %v1192
    %v1194 = vadd.f32 %v1193, 1.0
    %v1195 = vrcp.pop %v1194
    %v1196 = vmul.f32 1.0, %v1195
    %v1197 = vtanh.pop %v1183
    %v1198 = vxor.u32 %v1184, 2147483648
    %v1199 = vmul.f32 %v1198, 1.442695
    %v1200 = vpow.pop %v1199
    %v1201 = vadd.f32 %v1200, 1.0
    %v1202 = vrcp.pop %v1201
    %v1203 = vmul.f32 1.0, %v1202
    %v1204 = vmul.f32 %v1196, %v1095
    %v1205 = vmul.f32 %v1190, %v1197
    %v1206 = vadd.f32 %v1204, %v1205
    %v1207 = vtanh.pop %v1206
    %v1208 = vmul.f32 %v1203, %v1207
    %v1209 = vpack.c.bf16 %v1208, %v1208
    %1210 = vmatprep.subr.bf16.mxu0 %v481
    %1211 = vmatpush1.bf16.msra.mxu0 %v480
    %1212 = vmatprep.subr.bf16.mxu0 %v485
    %1213 = vmatpush1.bf16.msra.mxu0 %v484
    %1214 = vmatprep.subr.bf16.mxu0 %v489
    %1215 = vmatpush1.bf16.msra.mxu0 %v488
    %1216 = vmatprep.subr.bf16.mxu0 %v493
    %1217 = vmatpush1.bf16.msra.mxu0 %v492
    %1218 = vmatprep.subr.bf16.mxu0 %v497
    %1219 = vmatpush1.bf16.msra.mxu0 %v496
    %1220 = vmatprep.subr.bf16.mxu0 %v501
    %1221 = vmatpush1.bf16.msra.mxu0 %v500
    %1222 = vmatprep.subr.bf16.mxu0 %v505
    %1223 = vmatpush1.bf16.msra.mxu0 %v504
    %1224 = vmatprep.subr.bf16.mxu0 %v509
    %1225 = vmatpush1.bf16.msra.mxu0 %v508
    %1226 = vmatprep.subr.bf16.mxu0 0
    %1227 = vmatpush1.bf16.msra.mxu0 0
    %1228 = vmatprep.subr.bf16.mxu0 0
    %1229 = vmatpush1.bf16.msra.mxu0 0
    %1230 = vmatprep.subr.bf16.mxu0 0
    %1231 = vmatpush1.bf16.msra.mxu0 0
    %1232 = vmatprep.subr.bf16.mxu0 0
    %1233 = vmatpush1.bf16.msra.mxu0 0
    %1234 = vmatprep.subr.bf16.mxu0 0
    %1235 = vmatpush1.bf16.msra.mxu0 0
    %1236 = vmatprep.subr.bf16.mxu0 0
    %1237 = vmatpush1.bf16.msra.mxu0 0
    %1238 = vmatprep.subr.bf16.mxu0 0
    %1239 = vmatpush1.bf16.msra.mxu0 0
    %1240 = vmatprep.subr.bf16.mxu0 0
    %1241 = vmatpush1.bf16.msra.mxu0 0
    %1242 = vmatprep.mubr.bf16.mxu0 0
    %1243 = vmatmul.mubr.bf16.gmra.mrb[0].mxu0 %v1209
    %v1244 = vpop.f32.mrb[0].mxu0
    %v1245 = vadd.f32 0.0, %v1244
    %v1246 = vpop.f32.mrb[0].mxu0
    %v1247 = vadd.f32 0.0, %v1246
    %v1248 = vpop.f32.mrb[0].mxu0
    %v1249 = vpop.f32.mrb[0].mxu0
    %1250 = vdwg.mxu0
    %1251 = vmatprep.subr.bf16.mxu0 %v483
    %1252 = vmatpush1.bf16.msra.mxu0 %v482
    %1253 = vmatprep.subr.bf16.mxu0 %v487
    %1254 = vmatpush1.bf16.msra.mxu0 %v486
    %1255 = vmatprep.subr.bf16.mxu0 %v491
    %1256 = vmatpush1.bf16.msra.mxu0 %v490
    %1257 = vmatprep.subr.bf16.mxu0 %v495
    %1258 = vmatpush1.bf16.msra.mxu0 %v494
    %1259 = vmatprep.subr.bf16.mxu0 %v499
    %1260 = vmatpush1.bf16.msra.mxu0 %v498
    %1261 = vmatprep.subr.bf16.mxu0 %v503
    %1262 = vmatpush1.bf16.msra.mxu0 %v502
    %1263 = vmatprep.subr.bf16.mxu0 %v507
    %1264 = vmatpush1.bf16.msra.mxu0 %v506
    %1265 = vmatprep.subr.bf16.mxu0 %v511
    %1266 = vmatpush1.bf16.msra.mxu0 %v510
    %1267 = vmatprep.subr.bf16.mxu0 0
    %1268 = vmatpush1.bf16.msra.mxu0 0
    %1269 = vmatprep.subr.bf16.mxu0 0
    %1270 = vmatpush1.bf16.msra.mxu0 0
    %1271 = vmatprep.subr.bf16.mxu0 0
    %1272 = vmatpush1.bf16.msra.mxu0 0
    %1273 = vmatprep.subr.bf16.mxu0 0
    %1274 = vmatpush1.bf16.msra.mxu0 0
    %1275 = vmatprep.subr.bf16.mxu0 0
    %1276 = vmatpush1.bf16.msra.mxu0 0
    %1277 = vmatprep.subr.bf16.mxu0 0
    %1278 = vmatpush1.bf16.msra.mxu0 0
    %1279 = vmatprep.subr.bf16.mxu0 0
    %1280 = vmatpush1.bf16.msra.mxu0 0
    %1281 = vmatprep.subr.bf16.mxu0 0
    %1282 = vmatpush1.bf16.msra.mxu0 0
    %1283 = vmatprep.mubr.bf16.mxu0 0
    %1284 = vmatmul.mubr.bf16.gmra.mrb[0].mxu0 %v1209
    %v1285 = vpop.f32.mrb[0].mxu0
    %v1286 = vadd.f32 0.0, %v1285
    %v1287 = vpop.f32.mrb[0].mxu0
    %v1288 = vadd.f32 0.0, %v1287
    %v1289 = vpop.f32.mrb[0].mxu0
    %v1290 = vpop.f32.mrb[0].mxu0
    %1291 = vdwg.mxu0
    %v1292 = vadd.f32 %v271, %v1245
    %v1293 = vadd.f32 %v273, %v1247
    %v1294 = vadd.f32 %v344, %v1286
    %v1295 = vadd.f32 %v346, %v1288
    %v1296 = vxor.u32 %v1292, 2147483648
    %v1297 = vmul.f32 %v1296, 1.442695
    %v1298 = vpow.pop %v1297
    %v1299 = vadd.f32 %v1298, 1.0
    %v1300 = vrcp.pop %v1299
    %v1301 = vmul.f32 1.0, %v1300
    %v1302 = vxor.u32 %v1293, 2147483648
    %v1303 = vmul.f32 %v1302, 1.442695
    %v1304 = vpow.pop %v1303
    %v1305 = vadd.f32 %v1304, 1.0
    %v1306 = vrcp.pop %v1305
    %v1307 = vmul.f32 1.0, %v1306
    %v1308 = vtanh.pop %v1294
    %v1309 = vxor.u32 %v1295, 2147483648
    %v1310 = vmul.f32 %v1309, 1.442695
    %v1311 = vpow.pop %v1310
    %v1312 = vadd.f32 %v1311, 1.0
    %v1313 = vrcp.pop %v1312
    %v1314 = vmul.f32 1.0, %v1313
    %v1315 = vmul.f32 %v1307, %v1206
    %v1316 = vmul.f32 %v1301, %v1308
    %v1317 = vadd.f32 %v1315, %v1316
    %v1318 = vtanh.pop %v1317
    %v1319 = vmul.f32 %v1314, %v1318
    %v1320 = vpack.c.bf16 %v1319, %v1319
    %1321 = vmatprep.subr.bf16.mxu0 %v481
    %1322 = vmatpush1.bf16.msra.mxu0 %v480
    %1323 = vmatprep.subr.bf16.mxu0 %v485
    %1324 = vmatpush1.bf16.msra.mxu0 %v484
    %1325 = vmatprep.subr.bf16.mxu0 %v489
    %1326 = vmatpush1.bf16.msra.mxu0 %v488
    %1327 = vmatprep.subr.bf16.mxu0 %v493
    %1328 = vmatpush1.bf16.msra.mxu0 %v492
    %1329 = vmatprep.subr.bf16.mxu0 %v497
    %1330 = vmatpush1.bf16.msra.mxu0 %v496
    %1331 = vmatprep.subr.bf16.mxu0 %v501
    %1332 = vmatpush1.bf16.msra.mxu0 %v500
    %1333 = vmatprep.subr.bf16.mxu0 %v505
    %1334 = vmatpush1.bf16.msra.mxu0 %v504
    %1335 = vmatprep.subr.bf16.mxu0 %v509
    %1336 = vmatpush1.bf16.msra.mxu0 %v508
    %1337 = vmatprep.subr.bf16.mxu0 0
    %1338 = vmatpush1.bf16.msra.mxu0 0
    %1339 = vmatprep.subr.bf16.mxu0 0
    %1340 = vmatpush1.bf16.msra.mxu0 0
    %1341 = vmatprep.subr.bf16.mxu0 0
    %1342 = vmatpush1.bf16.msra.mxu0 0
    %1343 = vmatprep.subr.bf16.mxu0 0
    %1344 = vmatpush1.bf16.msra.mxu0 0
    %1345 = vmatprep.subr.bf16.mxu0 0
    %1346 = vmatpush1.bf16.msra.mxu0 0
    %1347 = vmatprep.subr.bf16.mxu0 0
    %1348 = vmatpush1.bf16.msra.mxu0 0
    %1349 = vmatprep.subr.bf16.mxu0 0
    %1350 = vmatpush1.bf16.msra.mxu0 0
    %1351 = vmatprep.subr.bf16.mxu0 0
    %1352 = vmatpush1.bf16.msra.mxu0 0
    %1353 = vmatprep.mubr.bf16.mxu0 0
    %1354 = vmatmul.mubr.bf16.gmra.mrb[0].mxu0 %v1320
    %v1355 = vpop.f32.mrb[0].mxu0
    %v1356 = vadd.f32 0.0, %v1355
    %v1357 = vpop.f32.mrb[0].mxu0
    %v1358 = vadd.f32 0.0, %v1357
    %v1359 = vpop.f32.mrb[0].mxu0
    %v1360 = vpop.f32.mrb[0].mxu0
    %1361 = vdwg.mxu0
    %1362 = vmatprep.subr.bf16.mxu0 %v483
    %1363 = vmatpush1.bf16.msra.mxu0 %v482
    %1364 = vmatprep.subr.bf16.mxu0 %v487
    %1365 = vmatpush1.bf16.msra.mxu0 %v486
    %1366 = vmatprep.subr.bf16.mxu0 %v491
    %1367 = vmatpush1.bf16.msra.mxu0 %v490
    %1368 = vmatprep.subr.bf16.mxu0 %v495
    %1369 = vmatpush1.bf16.msra.mxu0 %v494
    %1370 = vmatprep.subr.bf16.mxu0 %v499
    %1371 = vmatpush1.bf16.msra.mxu0 %v498
    %1372 = vmatprep.subr.bf16.mxu0 %v503
    %1373 = vmatpush1.bf16.msra.mxu0 %v502
    %1374 = vmatprep.subr.bf16.mxu0 %v507
    %1375 = vmatpush1.bf16.msra.mxu0 %v506
    %1376 = vmatprep.subr.bf16.mxu0 %v511
    %1377 = vmatpush1.bf16.msra.mxu0 %v510
    %1378 = vmatprep.subr.bf16.mxu0 0
    %1379 = vmatpush1.bf16.msra.mxu0 0
    %1380 = vmatprep.subr.bf16.mxu0 0
    %1381 = vmatpush1.bf16.msra.mxu0 0
    %1382 = vmatprep.subr.bf16.mxu0 0
    %1383 = vmatpush1.bf16.msra.mxu0 0
    %1384 = vmatprep.subr.bf16.mxu0 0
    %1385 = vmatpush1.bf16.msra.mxu0 0
    %1386 = vmatprep.subr.bf16.mxu0 0
    %1387 = vmatpush1.bf16.msra.mxu0 0
    %1388 = vmatprep.subr.bf16.mxu0 0
    %1389 = vmatpush1.bf16.msra.mxu0 0
    %1390 = vmatprep.subr.bf16.mxu0 0
    %1391 = vmatpush1.bf16.msra.mxu0 0
    %1392 = vmatprep.subr.bf16.mxu0 0
    %1393 = vmatpush1.bf16.msra.mxu0 0
    %1394 = vmatprep.mubr.bf16.mxu0 0
    %1395 = vmatmul.mubr.bf16.gmra.mrb[0].mxu0 %v1320
    %v1396 = vpop.f32.mrb[0].mxu0
    %v1397 = vadd.f32 0.0, %v1396
    %v1398 = vpop.f32.mrb[0].mxu0
    %v1399 = vadd.f32 0.0, %v1398
    %v1400 = vpop.f32.mrb[0].mxu0
    %v1401 = vpop.f32.mrb[0].mxu0
    %1402 = vdwg.mxu0
    %v1403 = vadd.f32 %v275, %v1356
    %v1404 = vadd.f32 %v277, %v1358
    %v1405 = vadd.f32 %v348, %v1397
    %v1406 = vadd.f32 %v350, %v1399
    %v1407 = vxor.u32 %v1403, 2147483648
    %v1408 = vmul.f32 %v1407, 1.442695
    %v1409 = vpow.pop %v1408
    %v1410 = vadd.f32 %v1409, 1.0
    %v1411 = vrcp.pop %v1410
    %v1412 = vmul.f32 1.0, %v1411
    %v1413 = vxor.u32 %v1404, 2147483648
    %v1414 = vmul.f32 %v1413, 1.442695
    %v1415 = vpow.pop %v1414
    %v1416 = vadd.f32 %v1415, 1.0
    %v1417 = vrcp.pop %v1416
    %v1418 = vmul.f32 1.0, %v1417
    %v1419 = vtanh.pop %v1405
    %v1420 = vxor.u32 %v1406, 2147483648
    %v1421 = vmul.f32 %v1420, 1.442695
    %v1422 = vpow.pop %v1421
    %v1423 = vadd.f32 %v1422, 1.0
    %v1424 = vrcp.pop %v1423
    %v1425 = vmul.f32 1.0, %v1424
    %v1426 = vmul.f32 %v1418, %v1317
    %v1427 = vmul.f32 %v1412, %v1419
    %v1428 = vadd.f32 %v1426, %v1427
    %v1429 = vtanh.pop %v1428
    %v1430 = vmul.f32 %v1425, %v1429
    %v1431 = vld [vmem:[#allocation7] sm:$0xff]
    %v1432 = vld [vmem:[#allocation7 + $0x8] sm:$0xff]
    %v1433 = vld [vmem:[#allocation7 + $0x10] sm:$0xff]
    %v1434 = vld [vmem:[#allocation7 + $0x18] sm:$0xff]
    %v1435 = vld [vmem:[%s4] sm:$0xf]
    %v1437 = vlaneseq
    %v1438 = vshrl.u32 %v1437, 7
    %v1439 = vsub.s32 0, %v1438
    %v1440 = vrot.slane %v1435, %v1439
    %v1441 = vlaneseq
    %v1442 = vshrl.u32 %v1441, 7
    %v1443 = vsub.s32 2, %v1442
    %v1444 = vrot.slane %v1435, %v1443
    %v1445 = vlaneseq
    %v1446 = vshrl.u32 %v1445, 7
    %v1447 = vsub.s32 3, %v1446
    %v1448 = vrot.slane %v1435, %v1447
    %v1456 = vunpack.c.l.b16 %v1431
    %v1457 = vunpack.c.h.b16 %v1431
    %v1458 = vunpack.c.l.b16 %v1432
    %v1459 = vunpack.c.h.b16 %v1432
    %v1460 = vunpack.c.l.b16 %v1433
    %v1461 = vunpack.c.h.b16 %v1433
    %v1462 = vunpack.c.l.b16 %v1434
    %v1463 = vunpack.c.h.b16 %v1434
    %v1464 = vpack.c.b16 %v1460, %v1456
    %v1465 = vpack.c.b16 %v1461, %v1457
    %v1466 = vpack.c.b16 %v1462, %v1458
    %v1467 = vpack.c.b16 %v1463, %v1459
    %v1473 = vsel %vm193, %v126, 0
    %1475 = vmatprep.subr.bf16.mxu0 %v1465
    %1476 = vmatpush1.bf16.msra.mxu0 %v1464
    %1477 = vmatprep.subr.bf16.mxu0 0
    %1478 = vmatpush1.bf16.msra.mxu0 0
    %1479 = vmatprep.subr.bf16.mxu0 0
    %1480 = vmatpush1.bf16.msra.mxu0 0
    %1481 = vmatprep.subr.bf16.mxu0 0
    %1482 = vmatpush1.bf16.msra.mxu0 0
    %1483 = vmatprep.subr.bf16.mxu0 0
    %1484 = vmatpush1.bf16.msra.mxu0 0
    %1485 = vmatprep.subr.bf16.mxu0 0
    %1486 = vmatpush1.bf16.msra.mxu0 0
    %1487 = vmatprep.subr.bf16.mxu0 0
    %1488 = vmatpush1.bf16.msra.mxu0 0
    %1489 = vmatprep.subr.bf16.mxu0 0
    %1490 = vmatpush1.bf16.msra.mxu0 0
    %1491 = vmatprep.subr.bf16.mxu0 0
    %1492 = vmatpush1.bf16.msra.mxu0 0
    %1493 = vmatprep.subr.bf16.mxu0 0
    %1494 = vmatpush1.bf16.msra.mxu0 0
    %1495 = vmatprep.subr.bf16.mxu0 0
    %1496 = vmatpush1.bf16.msra.mxu0 0
    %1497 = vmatprep.subr.bf16.mxu0 0
    %1498 = vmatpush1.bf16.msra.mxu0 0
    %1499 = vmatprep.subr.bf16.mxu0 0
    %1500 = vmatpush1.bf16.msra.mxu0 0
    %1501 = vmatprep.subr.bf16.mxu0 0
    %1502 = vmatpush1.bf16.msra.mxu0 0
    %1503 = vmatprep.subr.bf16.mxu0 0
    %1504 = vmatpush1.bf16.msra.mxu0 0
    %1505 = vmatprep.subr.bf16.mxu0 0
    %1506 = vmatpush1.bf16.msra.mxu0 0
    %1507 = vmatprep.mubr.bf16.mxu0 0
    %1508 = vmatmul.mubr.bf16.gmra.mrb[0].mxu0 %v1473
    %v1509 = vpop.f32.mrb[0].mxu0
    %v1510 = vadd.f32 %v1440, %v1509
    %v1511 = vpop.f32.mrb[0].mxu0
    %v1512 = vpop.f32.mrb[0].mxu0
    %v1513 = vpop.f32.mrb[0].mxu0
    %1514 = vdwg.mxu0
    %1515 = vmatprep.subr.bf16.mxu0 %v1467
    %1516 = vmatpush1.bf16.msra.mxu0 %v1466
    %1517 = vmatprep.subr.bf16.mxu0 0
    %1518 = vmatpush1.bf16.msra.mxu0 0
    %1519 = vmatprep.subr.bf16.mxu0 0
    %1520 = vmatpush1.bf16.msra.mxu0 0
    %1521 = vmatprep.subr.bf16.mxu0 0
    %1522 = vmatpush1.bf16.msra.mxu0 0
    %1523 = vmatprep.subr.bf16.mxu0 0
    %1524 = vmatpush1.bf16.msra.mxu0 0
    %1525 = vmatprep.subr.bf16.mxu0 0
    %1526 = vmatpush1.bf16.msra.mxu0 0
    %1527 = vmatprep.subr.bf16.mxu0 0
    %1528 = vmatpush1.bf16.msra.mxu0 0
    %1529 = vmatprep.subr.bf16.mxu0 0
    %1530 = vmatpush1.bf16.msra.mxu0 0
    %1531 = vmatprep.subr.bf16.mxu0 0
    %1532 = vmatpush1.bf16.msra.mxu0 0
    %1533 = vmatprep.subr.bf16.mxu0 0
    %1534 = vmatpush1.bf16.msra.mxu0 0
    %1535 = vmatprep.subr.bf16.mxu0 0
    %1536 = vmatpush1.bf16.msra.mxu0 0
    %1537 = vmatprep.subr.bf16.mxu0 0
    %1538 = vmatpush1.bf16.msra.mxu0 0
    %1539 = vmatprep.subr.bf16.mxu0 0
    %1540 = vmatpush1.bf16.msra.mxu0 0
    %1541 = vmatprep.subr.bf16.mxu0 0
    %1542 = vmatpush1.bf16.msra.mxu0 0
    %1543 = vmatprep.subr.bf16.mxu0 0
    %1544 = vmatpush1.bf16.msra.mxu0 0
    %1545 = vmatprep.subr.bf16.mxu0 0
    %1546 = vmatpush1.bf16.msra.mxu0 0
    %1547 = vmatprep.mubr.bf16.mxu0 0
    %1548 = vmatmul.mubr.bf16.gmra.mrb[0].mxu0 %v1473
    %v1549 = vpop.f32.mrb[0].mxu0
    %v1550 = vadd.f32 %v1444, %v1549
    %v1551 = vpop.f32.mrb[0].mxu0
    %v1552 = vadd.f32 %v1448, %v1551
    %v1553 = vpop.f32.mrb[0].mxu0
    %v1554 = vpop.f32.mrb[0].mxu0
    %1555 = vdwg.mxu0
    %v1556 = vxor.u32 %v1510, 2147483648
    %v1557 = vmul.f32 %v1556, 1.442695
    %v1558 = vpow.pop %v1557
    %v1559 = vadd.f32 %v1558, 1.0
    %v1560 = vrcp.pop %v1559
    %v1561 = vmul.f32 1.0, %v1560
    %v1562 = vtanh.pop %v1550
    %v1563 = vxor.u32 %v1552, 2147483648
    %v1564 = vmul.f32 %v1563, 1.442695
    %v1565 = vpow.pop %v1564
    %v1566 = vadd.f32 %v1565, 1.0
    %v1567 = vrcp.pop %v1566
    %v1568 = vmul.f32 1.0, %v1567
    %v1569 = vmul.f32 %v1561, %v1562
    %v1570 = vtanh.pop %v1569
    %v1571 = vmul.f32 %v1568, %v1570
    %v1572 = vpack.c.bf16 %v1430, %v1430
    %v1573 = vld [vmem:[#allocation10] sm:$0xf]
    %v1574 = vld [vmem:[#allocation10 + $0x4] sm:$0xf]
    %v1575 = vld [vmem:[#allocation10 + $0x8] sm:$0xf]
    %v1576 = vld [vmem:[#allocation10 + $0xc] sm:$0xf]
    %v1577 = vld [vmem:[#allocation10 + $0x10] sm:$0xf]
    %v1578 = vld [vmem:[#allocation10 + $0x14] sm:$0xf]
    %v1579 = vld [vmem:[#allocation10 + $0x18] sm:$0xf]
    %v1580 = vld [vmem:[#allocation10 + $0x1c] sm:$0xf]
    %v1581 = vld [vmem:[#allocation10 + $0x20] sm:$0xf]
    %v1582 = vld [vmem:[#allocation10 + $0x24] sm:$0xf]
    %v1583 = vld [vmem:[#allocation10 + $0x28] sm:$0xf]
    %v1584 = vld [vmem:[#allocation10 + $0x2c] sm:$0xf]
    %v1585 = vld [vmem:[#allocation10 + $0x30] sm:$0xf]
    %v1586 = vld [vmem:[#allocation10 + $0x34] sm:$0xf]
    %v1587 = vld [vmem:[#allocation10 + $0x38] sm:$0xf]
    %v1588 = vld [vmem:[#allocation10 + $0x3c] sm:$0xf]
    %v1589 = vpack.c.bf16 %v1571, %v1571
    %v1590 = vld [vmem:[#allocation11] sm:$0xf]
    %v1591 = vld [vmem:[#allocation11 + $0x4] sm:$0xf]
    %v1592 = vld [vmem:[#allocation11 + $0x8] sm:$0xf]
    %v1593 = vld [vmem:[#allocation11 + $0xc] sm:$0xf]
    %v1594 = vld [vmem:[#allocation11 + $0x10] sm:$0xf]
    %v1595 = vld [vmem:[#allocation11 + $0x14] sm:$0xf]
    %v1596 = vld [vmem:[#allocation11 + $0x18] sm:$0xf]
    %v1597 = vld [vmem:[#allocation11 + $0x1c] sm:$0xf]
    %v1598 = vld [vmem:[#allocation11 + $0x20] sm:$0xf]
    %v1599 = vld [vmem:[#allocation11 + $0x24] sm:$0xf]
    %v1600 = vld [vmem:[#allocation11 + $0x28] sm:$0xf]
    %v1601 = vld [vmem:[#allocation11 + $0x2c] sm:$0xf]
    %v1602 = vld [vmem:[#allocation11 + $0x30] sm:$0xf]
    %v1603 = vld [vmem:[#allocation11 + $0x34] sm:$0xf]
    %v1604 = vld [vmem:[#allocation11 + $0x38] sm:$0xf]
    %v1605 = vld [vmem:[#allocation11 + $0x3c] sm:$0xf]
    %v1622 = vunpack.c.l.b16 %v1590
    %v1623 = vunpack.c.l.b16 %v1591
    %v1624 = vunpack.c.l.b16 %v1592
    %v1625 = vunpack.c.l.b16 %v1593
    %v1626 = vunpack.c.l.b16 %v1594
    %v1627 = vunpack.c.l.b16 %v1595
    %v1628 = vunpack.c.l.b16 %v1596
    %v1629 = vunpack.c.l.b16 %v1597
    %v1630 = vunpack.c.l.b16 %v1598
    %v1631 = vunpack.c.l.b16 %v1599
    %v1632 = vunpack.c.l.b16 %v1600
    %v1633 = vunpack.c.l.b16 %v1601
    %v1634 = vunpack.c.l.b16 %v1602
    %v1635 = vunpack.c.l.b16 %v1603
    %v1636 = vunpack.c.l.b16 %v1604
    %v1637 = vunpack.c.l.b16 %v1605
    %v1638 = vpack.c.b16 %v1623, %v1622
    %v1639 = vpack.c.b16 %v1625, %v1624
    %v1640 = vpack.c.b16 %v1627, %v1626
    %v1641 = vpack.c.b16 %v1629, %v1628
    %v1642 = vpack.c.b16 %v1631, %v1630
    %v1643 = vpack.c.b16 %v1633, %v1632
    %v1644 = vpack.c.b16 %v1635, %v1634
    %v1645 = vpack.c.b16 %v1637, %v1636
    %1654 = vmatprep.subr.bf16.mxu0 0
    %1655 = vmatpush1.bf16.msra.mxu0 %v1638
    %1656 = vmatprep.subr.bf16.mxu0 0
    %1657 = vmatpush1.bf16.msra.mxu0 %v1639
    %1658 = vmatprep.subr.bf16.mxu0 0
    %1659 = vmatpush1.bf16.msra.mxu0 %v1640
    %1660 = vmatprep.subr.bf16.mxu0 0
    %1661 = vmatpush1.bf16.msra.mxu0 %v1641
    %1662 = vmatprep.subr.bf16.mxu0 0
    %1663 = vmatpush1.bf16.msra.mxu0 %v1642
    %1664 = vmatprep.subr.bf16.mxu0 0
    %1665 = vmatpush1.bf16.msra.mxu0 %v1643
    %1666 = vmatprep.subr.bf16.mxu0 0
    %1667 = vmatpush1.bf16.msra.mxu0 %v1644
    %1668 = vmatprep.subr.bf16.mxu0 0
    %1669 = vmatpush1.bf16.msra.mxu0 %v1645
    %1670 = vmatprep.subr.bf16.mxu0 0
    %1671 = vmatpush1.bf16.msra.mxu0 0
    %1672 = vmatprep.subr.bf16.mxu0 0
    %1673 = vmatpush1.bf16.msra.mxu0 0
    %1674 = vmatprep.subr.bf16.mxu0 0
    %1675 = vmatpush1.bf16.msra.mxu0 0
    %1676 = vmatprep.subr.bf16.mxu0 0
    %1677 = vmatpush1.bf16.msra.mxu0 0
    %1678 = vmatprep.subr.bf16.mxu0 0
    %1679 = vmatpush1.bf16.msra.mxu0 0
    %1680 = vmatprep.subr.bf16.mxu0 0
    %1681 = vmatpush1.bf16.msra.mxu0 0
    %1682 = vmatprep.subr.bf16.mxu0 0
    %1683 = vmatpush1.bf16.msra.mxu0 0
    %1684 = vmatprep.subr.bf16.mxu0 0
    %1685 = vmatpush1.bf16.msra.mxu0 0
    %1686 = vmatprep.mubr.bf16.mxu0 0
    %1687 = vmatmul.mubr.bf16.gmra.mrb[0].mxu0 %v1589
    %v1688 = vpop.f32.mrb[0].mxu0
    %v1689 = vadd.f32 0.0, %v1688
    %v1690 = vpop.f32.mrb[0].mxu0
    %v1691 = vpop.f32.mrb[0].mxu0
    %v1692 = vpop.f32.mrb[0].mxu0
    %1693 = vdwg.mxu0
    %v1710 = vunpack.c.l.b16 %v1573
    %v1711 = vunpack.c.l.b16 %v1574
    %v1712 = vunpack.c.l.b16 %v1575
    %v1713 = vunpack.c.l.b16 %v1576
    %v1714 = vunpack.c.l.b16 %v1577
    %v1715 = vunpack.c.l.b16 %v1578
    %v1716 = vunpack.c.l.b16 %v1579
    %v1717 = vunpack.c.l.b16 %v1580
    %v1718 = vunpack.c.l.b16 %v1581
    %v1719 = vunpack.c.l.b16 %v1582
    %v1720 = vunpack.c.l.b16 %v1583
    %v1721 = vunpack.c.l.b16 %v1584
    %v1722 = vunpack.c.l.b16 %v1585
    %v1723 = vunpack.c.l.b16 %v1586
    %v1724 = vunpack.c.l.b16 %v1587
    %v1725 = vunpack.c.l.b16 %v1588
    %v1726 = vpack.c.b16 %v1711, %v1710
    %v1727 = vpack.c.b16 %v1713, %v1712
    %v1728 = vpack.c.b16 %v1715, %v1714
    %v1729 = vpack.c.b16 %v1717, %v1716
    %v1730 = vpack.c.b16 %v1719, %v1718
    %v1731 = vpack.c.b16 %v1721, %v1720
    %v1732 = vpack.c.b16 %v1723, %v1722
    %v1733 = vpack.c.b16 %v1725, %v1724
    %1742 = vmatprep.subr.bf16.mxu0 0
    %1743 = vmatpush1.bf16.msra.mxu0 %v1726
    %1744 = vmatprep.subr.bf16.mxu0 0
    %1745 = vmatpush1.bf16.msra.mxu0 %v1727
    %1746 = vmatprep.subr.bf16.mxu0 0
    %1747 = vmatpush1.bf16.msra.mxu0 %v1728
    %1748 = vmatprep.subr.bf16.mxu0 0
    %1749 = vmatpush1.bf16.msra.mxu0 %v1729
    %1750 = vmatprep.subr.bf16.mxu0 0
    %1751 = vmatpush1.bf16.msra.mxu0 %v1730
    %1752 = vmatprep.subr.bf16.mxu0 0
    %1753 = vmatpush1.bf16.msra.mxu0 %v1731
    %1754 = vmatprep.subr.bf16.mxu0 0
    %1755 = vmatpush1.bf16.msra.mxu0 %v1732
    %1756 = vmatprep.subr.bf16.mxu0 0
    %1757 = vmatpush1.bf16.msra.mxu0 %v1733
    %1758 = vmatprep.subr.bf16.mxu0 0
    %1759 = vmatpush1.bf16.msra.mxu0 0
    %1760 = vmatprep.subr.bf16.mxu0 0
    %1761 = vmatpush1.bf16.msra.mxu0 0
    %1762 = vmatprep.subr.bf16.mxu0 0
    %1763 = vmatpush1.bf16.msra.mxu0 0
    %1764 = vmatprep.subr.bf16.mxu0 0
    %1765 = vmatpush1.bf16.msra.mxu0 0
    %1766 = vmatprep.subr.bf16.mxu0 0
    %1767 = vmatpush1.bf16.msra.mxu0 0
    %1768 = vmatprep.subr.bf16.mxu0 0
    %1769 = vmatpush1.bf16.msra.mxu0 0
    %1770 = vmatprep.subr.bf16.mxu0 0
    %1771 = vmatpush1.bf16.msra.mxu0 0
    %1772 = vmatprep.subr.bf16.mxu0 0
    %1773 = vmatpush1.bf16.msra.mxu0 0
    %1774 = vmatprep.mubr.bf16.mxu0 0
    %1775 = vmatmul.mubr.bf16.gmra.mrb[0].mxu0 %v1572
    %v1776 = vpop.f32.mrb[0].mxu0
    %v1777 = vadd.f32 %v1689, %v1776
    %v1778 = vpop.f32.mrb[0].mxu0
    %v1779 = vpop.f32.mrb[0].mxu0
    %v1780 = vpop.f32.mrb[0].mxu0
    %1781 = vdwg.mxu0
    %v1782 = vld [vmem:[%s8] sm:$0x1]
    %v1784 = vlaneseq
    %v1785 = vshrl.u32 %v1784, 7
    %v1786 = vsub.s32 0, %v1785
    %v1787 = vrot.slane %v1782, %v1786
    %v1789 = vadd.f32 %v1777, %v1787
    %1790 = vst [vmem:[#allocation13] sm:$0xff] %v1789
    %v1791 = vxor.u32 %v1789, 2147483648
    %v1792 = vmul.f32 %v1791, 1.442695
    %v1793 = vpow.pop %v1792
    %v1794 = vadd.f32 %v1793, 1.0
    %v1795 = vrcp.pop %v1794
    %v1796 = vmul.f32 1.0, %v1795
    %1797 = vst [vmem:[#allocation14] sm:$0xff] %v1796
    // Predicated region
    $region62: #{tpu_custom_call.1} parent=1 // pred_check
      _
    $region63: #{tpu_custom_call.1} parent=1 // pred_check_branch
      %1799 = sbr.rel (0) target = $region65
    $region64: #{tpu_custom_call.1} parent=1 // pred_region
      %s1801 = ssub.s32 128, 128
      %1802 = vsyncadd [#allocation4], %s1801
      %s1804 = sshll.u32 [#allocation13], 4
      %s1805 = int_to_ptr.vmem [resolvable:$true] %s1804
      %1807 = dma.vmem_to_hbm [thread:$0]  %s1805, 128, %s9, [#allocation4]
    $region65: #{tpu_custom_call.1} parent=1 // pred_fallthru
      _
    // Predicated region
    $region66: #{tpu_custom_call.1} parent=1 // pred_check
      _
    $region67: #{tpu_custom_call.1} parent=1 // pred_check_branch
      %1809 = sbr.rel (0) target = $region69
    $region68: #{tpu_custom_call.1} parent=1 // pred_region
      %s1811 = ssub.s32 128, 128
      %1812 = vsyncadd [#allocation15], %s1811
      %s1814 = sshll.u32 [#allocation14], 4
      %s1815 = int_to_ptr.vmem [resolvable:$true] %s1814
      %1817 = dma.vmem_to_hbm [thread:$0]  %s1815, 128, %s10, [#allocation15]
    $region69: #{tpu_custom_call.1} parent=1 // pred_fallthru
      _
    // Predicated region
    $region70: #{tpu_custom_call.1} parent=1 // pred_check
      _
    $region71: #{tpu_custom_call.1} parent=1 // pred_check_branch
      %1819 = sbr.rel (0) target = $region73
    $region72: #{tpu_custom_call.1} parent=1 // pred_region
      %1820 = dma.done [#allocation4], 128
    $region73: #{tpu_custom_call.1} parent=1 // pred_fallthru
      _
    // Predicated region
    $region74: #{tpu_custom_call.1} parent=1 // pred_check
      _
    $region75: #{tpu_custom_call.1} parent=1 // pred_check_branch
      %1822 = sbr.rel (0) target = $region77
    $region76: #{tpu_custom_call.1} parent=1 // pred_region
      %1823 = dma.done [#allocation15], 128
    $region77: #{tpu_custom_call.1} parent=1 // pred_fallthru
      _
    %1824 = vsyncpa [#allocation3], 1
    %1825 = vsyncpa [#allocation6], 1
    %1826 = vsyncpa [#allocation9], 1
    %1827 = vsyncpa [#allocation12], 1
    %1828 = vsyncpa [#allocation4], 1
    %1829 = vsyncpa [#allocation15], 1

// kernel: tpu_custom_call.1
$region0: #{tpu_custom_call.1}
  #allocation0 [shape = 'u32[]', space=smem, size = 0x4, offset = 0x4, fixed_abs, tag = 'smem constant byte address 0x4 - core index']
  #allocation1 [shape = 'u32[144,128]{1,0:T(1,128)}', space=vmem, size = 0x12000, scoped, tag = 'internal scratch']
  %s0 = inlined_call_operand.hbm [shape: bf16[8,8,16], index: 0, kind: input, shape index: {}]
  %s1 = inlined_call_operand.hbm [shape: bf16[16,512], index: 1, kind: input, shape index: {}]
  %s2 = inlined_call_operand.vmem [shape: f32[1,512], index: 2, kind: input, shape index: {}]
  %s3 = inlined_call_operand.hbm [shape: bf16[16,512], index: 3, kind: input, shape index: {}]
  %s4 = inlined_call_operand.vmem [shape: f32[1,512], index: 4, kind: input, shape index: {}]
  %s5 = inlined_call_operand.hbm [shape: bf16[128,512], index: 5, kind: input, shape index: {}]
  %s6 = inlined_call_operand.hbm [shape: bf16[128,128], index: 6, kind: input, shape index: {}]
  %s7 = inlined_call_operand.hbm [shape: bf16[128,128], index: 7, kind: input, shape index: {}]
  %s8 = inlined_call_operand.vmem [shape: f32[1,128], index: 8, kind: input, shape index: {}]
  %s9 = inlined_call_operand.hbm [shape: f32[8,128], index: 9, kind: output, shape index: {0}]
  %s10 = inlined_call_operand.hbm [shape: f32[8,128], index: 10, kind: output, shape index: {1}]
  %11 = xla_tuple %s9, %s10
  %s12 = sld [smem:[#allocation0]]
  $region78: #{tpu_custom_call.1} parent=0
    _
  %s14 = ssub.s32 1, %s12
  %s15 = scalar_select 0, %s14, %s12
  $region1: #{tpu_custom_call.1} parent=0
    #allocation2 [shape = 'u8[16384]{0}', space=vmem, size = 0x4000, scoped, tag = 'input window, operand 0, single buffered']
    #allocation3 [shape = 's32[1]{0}', space=sflag, size = 0x4, scoped, tag = 'scoped memory for tpu_custom_call.1']
    #allocation4 [shape = 's32[1]{0}', space=sflag, size = 0x4, scoped, tag = 'scoped memory for tpu_custom_call.1']
    #allocation5 [shape = 'u8[16384]{0}', space=vmem, size = 0x4000, scoped, tag = 'input window, operand 1, single buffered']
    #allocation6 [shape = 's32[1]{0}', space=sflag, size = 0x4, scoped, tag = 'scoped memory for tpu_custom_call.1']
    #allocation7 [shape = 'u8[16384]{0}', space=vmem, size = 0x4000, scoped, tag = 'input window, operand 3, single buffered']
    #allocation8 [shape = 'u8[131072]{0}', space=vmem, size = 0x20000, scoped, tag = 'input window, operand 5, single buffered']
    #allocation9 [shape = 's32[1]{0}', space=sflag, size = 0x4, scoped, tag = 'scoped memory for tpu_custom_call.1']
    #allocation10 [shape = 'u8[32768]{0}', space=vmem, size = 0x8000, scoped, tag = 'input window, operand 6, single buffered']
    #allocation11 [shape = 'u8[32768]{0}', space=vmem, size = 0x8000, scoped, tag = 'input window, operand 7, single buffered']
    #allocation12 [shape = 's32[1]{0}', space=sflag, size = 0x4, scoped, tag = 'scoped memory for tpu_custom_call.1']
    #allocation13 [shape = 'u8[4096]{0}', space=vmem, size = 0x1000, scoped, tag = 'output window, operand 0, single buffered']
    #allocation14 [shape = 'u8[4096]{0}', space=vmem, size = 0x1000, scoped, tag = 'output window, operand 1, single buffered']
    #allocation15 [shape = 's32[1]{0}', space=sflag, size = 0x4, scoped, tag = 'scoped memory for tpu_custom_call.1']
    %16 = vsyncpa [#allocation3], 0
    %17 = vsyncpa [#allocation6], 0
    %18 = vsyncpa [#allocation9], 0
    %19 = vsyncpa [#allocation12], 0
    %20 = vsyncpa [#allocation4], 0
    %21 = vsyncpa [#allocation15], 0
    // Predicated region
    $region2: #{tpu_custom_call.1} parent=1 // pred_check
      _
    $region3: #{tpu_custom_call.1} parent=1 // pred_check_branch
      %23 = sbr.rel (0) target = $region5
    $region4: #{tpu_custom_call.1} parent=1 // pred_region
      %s25 = ssub.s32 512, 512
      %26 = vsyncadd [#allocation3], %s25
      %s27 = sshll.u32 [#allocation2], 4
      %s28 = int_to_ptr.vmem [resolvable:$true] %s27
      %33 = dma.hbm_to_vmem [thread:$0]  %s0, 512, %s28, [#allocation3], 64, 64, 4
    $region5: #{tpu_custom_call.1} parent=1 // pred_fallthru
      _
    // Predicated region
    $region6: #{tpu_custom_call.1} parent=1 // pred_check
      _
    $region7: #{tpu_custom_call.1} parent=1 // pred_check_branch
      %35 = sbr.rel (0) target = $region9
    $region8: #{tpu_custom_call.1} parent=1 // pred_region
      %s37 = ssub.s32 512, 512
      %38 = vsyncadd [#allocation6], %s37
      %s39 = sshll.u32 [#allocation5], 4
      %s40 = int_to_ptr.vmem [resolvable:$true] %s39
      %45 = dma.hbm_to_vmem [thread:$0]  %s1, 512, %s40, [#allocation6], 256, 256, 16
    $region9: #{tpu_custom_call.1} parent=1 // pred_fallthru
      _
    // Predicated region
    $region10: #{tpu_custom_call.1} parent=1 // pred_check
      _
    $region11: #{tpu_custom_call.1} parent=1 // pred_check_branch
      %47 = sbr.rel (0) target = $region13
    $region12: #{tpu_custom_call.1} parent=1 // pred_region
      _
    $region13: #{tpu_custom_call.1} parent=1 // pred_fallthru
      _
    // Predicated region
    $region14: #{tpu_custom_call.1} parent=1 // pred_check
      _
    $region15: #{tpu_custom_call.1} parent=1 // pred_check_branch
      %49 = sbr.rel (0) target = $region17
    $region16: #{tpu_custom_call.1} parent=1 // pred_region
      %s51 = ssub.s32 512, 512
      %52 = vsyncadd [#allocation6], %s51
      %s53 = sshll.u32 [#allocation7], 4
      %s54 = int_to_ptr.vmem [resolvable:$true] %s53
      %59 = dma.hbm_to_vmem [thread:$0]  %s3, 512, %s54, [#allocation6], 256, 256, 16
    $region17: #{tpu_custom_call.1} parent=1 // pred_fallthru
      _
    // Predicated region
    $region18: #{tpu_custom_call.1} parent=1 // pred_check
      _
    $region19: #{tpu_custom_call.1} parent=1 // pred_check_branch
      %61 = sbr.rel (0) target = $region21
    $region20: #{tpu_custom_call.1} parent=1 // pred_region
      _
    $region21: #{tpu_custom_call.1} parent=1 // pred_fallthru
      _
    // Predicated region
    $region22: #{tpu_custom_call.1} parent=1 // pred_check
      _
    $region23: #{tpu_custom_call.1} parent=1 // pred_check_branch
      %63 = sbr.rel (0) target = $region25
    $region24: #{tpu_custom_call.1} parent=1 // pred_region
      %s65 = ssub.s32 4096, 4096
      %66 = vsyncadd [#allocation9], %s65
      %s67 = sshll.u32 [#allocation8], 4
      %s68 = int_to_ptr.vmem [resolvable:$true] %s67
      %73 = dma.hbm_to_vmem [thread:$0]  %s5, 4096, %s68, [#allocation9], 256, 256, 16
    $region25: #{tpu_custom_call.1} parent=1 // pred_fallthru
      _
    // Predicated region
    $region26: #{tpu_custom_call.1} parent=1 // pred_check
      _
    $region27: #{tpu_custom_call.1} parent=1 // pred_check_branch
      %75 = sbr.rel (0) target = $region29
    $region28: #{tpu_custom_call.1} parent=1 // pred_region
      %s77 = ssub.s32 1024, 1024
      %78 = vsyncadd [#allocation9], %s77
      %s79 = sshll.u32 [#allocation10], 4
      %s80 = int_to_ptr.vmem [resolvable:$true] %s79
      %85 = dma.hbm_to_vmem [thread:$0]  %s6, 1024, %s80, [#allocation9], 64, 64, 4
    $region29: #{tpu_custom_call.1} parent=1 // pred_fallthru
      _
    // Predicated region
    $region30: #{tpu_custom_call.1} parent=1 // pred_check
      _
    $region31: #{tpu_custom_call.1} parent=1 // pred_check_branch
      %87 = sbr.rel (0) target = $region33
    $region32: #{tpu_custom_call.1} parent=1 // pred_region
      %s89 = ssub.s32 1024, 1024
      %90 = vsyncadd [#allocation12], %s89
      %s91 = sshll.u32 [#allocation11], 4
      %s92 = int_to_ptr.vmem [resolvable:$true] %s91
      %97 = dma.hbm_to_vmem [thread:$0]  %s7, 1024, %s92, [#allocation12], 64, 64, 4
    $region33: #{tpu_custom_call.1} parent=1 // pred_fallthru
      _
    // Predicated region
    $region34: #{tpu_custom_call.1} parent=1 // pred_check
      _
    $region35: #{tpu_custom_call.1} parent=1 // pred_check_branch
      %99 = sbr.rel (0) target = $region37
    $region36: #{tpu_custom_call.1} parent=1 // pred_region
      _
    $region37: #{tpu_custom_call.1} parent=1 // pred_fallthru
      _
    // Predicated region
    $region38: #{tpu_custom_call.1} parent=1 // pred_check
      _
    $region39: #{tpu_custom_call.1} parent=1 // pred_check_branch
      %101 = sbr.rel (0) target = $region41
    $region40: #{tpu_custom_call.1} parent=1 // pred_region
      %102 = dma.done [#allocation3], 512
    $region41: #{tpu_custom_call.1} parent=1 // pred_fallthru
      _
    // Predicated region
    $region42: #{tpu_custom_call.1} parent=1 // pred_check
      _
    $region43: #{tpu_custom_call.1} parent=1 // pred_check_branch
      %104 = sbr.rel (0) target = $region45
    $region44: #{tpu_custom_call.1} parent=1 // pred_region
      %105 = dma.done [#allocation6], 512
    $region45: #{tpu_custom_call.1} parent=1 // pred_fallthru
      _
    // Predicated region
    $region46: #{tpu_custom_call.1} parent=1 // pred_check
      _
    $region47: #{tpu_custom_call.1} parent=1 // pred_check_branch
      %107 = sbr.rel (0) target = $region49
    $region48: #{tpu_custom_call.1} parent=1 // pred_region
      %108 = dma.done [#allocation6], 512
    $region49: #{tpu_custom_call.1} parent=1 // pred_fallthru
      _
    // Predicated region
    $region50: #{tpu_custom_call.1} parent=1 // pred_check
      _
    $region51: #{tpu_custom_call.1} parent=1 // pred_check_branch
      %110 = sbr.rel (0) target = $region53
    $region52: #{tpu_custom_call.1} parent=1 // pred_region
      %111 = dma.done [#allocation9], 4096
    $region53: #{tpu_custom_call.1} parent=1 // pred_fallthru
      _
    // Predicated region
    $region54: #{tpu_custom_call.1} parent=1 // pred_check
      _
    $region55: #{tpu_custom_call.1} parent=1 // pred_check_branch
      %113 = sbr.rel (0) target = $region57
    $region56: #{tpu_custom_call.1} parent=1 // pred_region
      %114 = dma.done [#allocation9], 1024
    $region57: #{tpu_custom_call.1} parent=1 // pred_fallthru
      _
    // Predicated region
    $region58: #{tpu_custom_call.1} parent=1 // pred_check
      _
    $region59: #{tpu_custom_call.1} parent=1 // pred_check_branch
      %116 = sbr.rel (0) target = $region61
    $region60: #{tpu_custom_call.1} parent=1 // pred_region
      %117 = dma.done [#allocation12], 1024
    $region61: #{tpu_custom_call.1} parent=1 // pred_fallthru
      _
    %v119 = vld [vmem:[#allocation2] sm:$0xf]
    %v120 = vld [vmem:[#allocation2 + $0x4] sm:$0xf]
    %v121 = vld [vmem:[#allocation2 + $0x8] sm:$0xf]
    %v122 = vld [vmem:[#allocation2 + $0xc] sm:$0xf]
    %v123 = vld [vmem:[#allocation2 + $0x10] sm:$0xf]
    %v124 = vld [vmem:[#allocation2 + $0x14] sm:$0xf]
    %v125 = vld [vmem:[#allocation2 + $0x18] sm:$0xf]
    %v126 = vld [vmem:[#allocation2 + $0x1c] sm:$0xf]
    %v127 = vld [vmem:[#allocation5] sm:$0xff]
    %v128 = vld [vmem:[#allocation5 + $0x8] sm:$0xff]
    %v129 = vld [vmem:[#allocation5 + $0x10] sm:$0xff]
    %v130 = vld [vmem:[#allocation5 + $0x18] sm:$0xff]
    %v131 = vld [vmem:[%s2] sm:$0xf]
    %v133 = vlaneseq
    %v134 = vshrl.u32 %v133, 7
    %v135 = vsub.s32 0, %v134
    %v136 = vrot.slane %v131, %v135
    %v137 = vlaneseq
    %v138 = vshrl.u32 %v137, 7
    %v139 = vsub.s32 1, %v138
    %v140 = vrot.slane %v131, %v139
    %v141 = vlaneseq
    %v142 = vshrl.u32 %v141, 7
    %v143 = vsub.s32 2, %v142
    %v144 = vrot.slane %v131, %v143
    %v145 = vlaneseq
    %v146 = vshrl.u32 %v145, 7
    %v147 = vsub.s32 3, %v146
    %v148 = vrot.slane %v131, %v147
    %v161 = vunpack.c.l.b16 %v119
    %v162 = vunpack.c.l.b16 %v120
    %v163 = vunpack.c.l.b16 %v121
    %v164 = vunpack.c.l.b16 %v122
    %v165 = vunpack.c.l.b16 %v123
    %v166 = vunpack.c.l.b16 %v124
    %v167 = vunpack.c.l.b16 %v125
    %v168 = vunpack.c.l.b16 %v126
    %v169 = vpack.c.b16 %v162, %v161
    %v170 = vpack.c.b16 %v164, %v163
    %v171 = vpack.c.b16 %v166, %v165
    %v172 = vpack.c.b16 %v168, %v167
    %v177 = vunpack.c.l.b16 %v127
    %v178 = vunpack.c.h.b16 %v127
    %v179 = vunpack.c.l.b16 %v128
    %v180 = vunpack.c.h.b16 %v128
    %v181 = vunpack.c.l.b16 %v129
    %v182 = vunpack.c.h.b16 %v129
    %v183 = vunpack.c.l.b16 %v130
    %v184 = vunpack.c.h.b16 %v130
    %v185 = vpack.c.b16 %v181, %v177
    %v186 = vpack.c.b16 %v182, %v178
    %v187 = vpack.c.b16 %v183, %v179
    %v188 = vpack.c.b16 %v184, %v180
    %vm193 = vcmask 130048
    %v195 = vsel %vm193, %v169, 0
    %v198 = vsel %vm193, %v170, 0
    %v201 = vsel %vm193, %v171, 0
    %v204 = vsel %vm193, %v172, 0
    %206 = vmatprep.subr.bf16.mxu0 %v186
    %207 = vmatpush1.bf16.msra.mxu0 %v185
    %208 = vmatprep.subr.bf16.mxu0 0
    %209 = vmatpush1.bf16.msra.mxu0 0
    %210 = vmatprep.subr.bf16.mxu0 0
    %211 = vmatpush1.bf16.msra.mxu0 0
    %212 = vmatprep.subr.bf16.mxu0 0
    %213 = vmatpush1.bf16.msra.mxu0 0
    %214 = vmatprep.subr.bf16.mxu0 0
    %215 = vmatpush1.bf16.msra.mxu0 0
    %216 = vmatprep.subr.bf16.mxu0 0
    %217 = vmatpush1.bf16.msra.mxu0 0
    %218 = vmatprep.subr.bf16.mxu0 0
    %219 = vmatpush1.bf16.msra.mxu0 0
    %220 = vmatprep.subr.bf16.mxu0 0
    %221 = vmatpush1.bf16.msra.mxu0 0
    %222 = vmatprep.subr.bf16.mxu0 0
    %223 = vmatpush1.bf16.msra.mxu0 0
    %224 = vmatprep.subr.bf16.mxu0 0
    %225 = vmatpush1.bf16.msra.mxu0 0
    %226 = vmatprep.subr.bf16.mxu0 0
    %227 = vmatpush1.bf16.msra.mxu0 0
    %228 = vmatprep.subr.bf16.mxu0 0
    %229 = vmatpush1.bf16.msra.mxu0 0
    %230 = vmatprep.subr.bf16.mxu0 0
    %231 = vmatpush1.bf16.msra.mxu0 0
    %232 = vmatprep.subr.bf16.mxu0 0
    %233 = vmatpush1.bf16.msra.mxu0 0
    %234 = vmatprep.subr.bf16.mxu0 0
    %235 = vmatpush1.bf16.msra.mxu0 0
    %236 = vmatprep.subr.bf16.mxu0 0
    %237 = vmatpush1.bf16.msra.mxu0 0
    %238 = vmatprep.mubr.bf16.mxu0 0
    %239 = vmatmul.mubr.bf16.gmra.mrb[0].mxu0 %v195
    %v240 = vpop.f32.mrb[0].mxu0
    %v241 = vadd.f32 %v136, %v240
    %v242 = vpop.f32.mrb[0].mxu0
    %v243 = vadd.f32 %v140, %v242
    %v244 = vpop.f32.mrb[0].mxu0
    %v245 = vadd.f32 %v136, %v244
    %v246 = vpop.f32.mrb[0].mxu0
    %v247 = vadd.f32 %v140, %v246
    %248 = vmatprep.mubr.bf16.mxu0 0
    %249 = vmatmul.mubr.bf16.gmra.mrb[0].mxu0 %v198
    %v250 = vpop.f32.mrb[0].mxu0
    %v251 = vadd.f32 %v136, %v250
    %v252 = vpop.f32.mrb[0].mxu0
    %v253 = vadd.f32 %v140, %v252
    %v254 = vpop.f32.mrb[0].mxu0
    %v255 = vadd.f32 %v136, %v254
    %v256 = vpop.f32.mrb[0].mxu0
    %v257 = vadd.f32 %v140, %v256
    %258 = vmatprep.mubr.bf16.mxu0 0
    %259 = vmatmul.mubr.bf16.gmra.mrb[0].mxu0 %v201
    %v260 = vpop.f32.mrb[0].mxu0
    %v261 = vadd.f32 %v136, %v260
    %v262 = vpop.f32.mrb[0].mxu0
    %v263 = vadd.f32 %v140, %v262
    %v264 = vpop.f32.mrb[0].mxu0
    %v265 = vadd.f32 %v136, %v264
    %v266 = vpop.f32.mrb[0].mxu0
    %v267 = vadd.f32 %v140, %v266
    %268 = vmatprep.mubr.bf16.mxu0 0
    %269 = vmatmul.mubr.bf16.gmra.mrb[0].mxu0 %v204
    %v270 = vpop.f32.mrb[0].mxu0
    %v271 = vadd.f32 %v136, %v270
    %v272 = vpop.f32.mrb[0].mxu0
    %v273 = vadd.f32 %v140, %v272
    %v274 = vpop.f32.mrb[0].mxu0
    %v275 = vadd.f32 %v136, %v274
    %v276 = vpop.f32.mrb[0].mxu0
    %v277 = vadd.f32 %v140, %v276
    %278 = vdwg.mxu0
    %279 = vmatprep.subr.bf16.mxu0 %v188
    %280 = vmatpush1.bf16.msra.mxu0 %v187
    %281 = vmatprep.subr.bf16.mxu0 0
    %282 = vmatpush1.bf16.msra.mxu0 0
    %283 = vmatprep.subr.bf16.mxu0 0
    %284 = vmatpush1.bf16.msra.mxu0 0
    %285 = vmatprep.subr.bf16.mxu0 0
    %286 = vmatpush1.bf16.msra.mxu0 0
    %287 = vmatprep.subr.bf16.mxu0 0
    %288 = vmatpush1.bf16.msra.mxu0 0
    %289 = vmatprep.subr.bf16.mxu0 0
    %290 = vmatpush1.bf16.msra.mxu0 0
    %291 = vmatprep.subr.bf16.mxu0 0
    %292 = vmatpush1.bf16.msra.mxu0 0
    %293 = vmatprep.subr.bf16.mxu0 0
    %294 = vmatpush1.bf16.msra.mxu0 0
    %295 = vmatprep.subr.bf16.mxu0 0
    %296 = vmatpush1.bf16.msra.mxu0 0
    %297 = vmatprep.subr.bf16.mxu0 0
    %298 = vmatpush1.bf16.msra.mxu0 0
    %299 = vmatprep.subr.bf16.mxu0 0
    %300 = vmatpush1.bf16.msra.mxu0 0
    %301 = vmatprep.subr.bf16.mxu0 0
    %302 = vmatpush1.bf16.msra.mxu0 0
    %303 = vmatprep.subr.bf16.mxu0 0
    %304 = vmatpush1.bf16.msra.mxu0 0
    %305 = vmatprep.subr.bf16.mxu0 0
    %306 = vmatpush1.bf16.msra.mxu0 0
    %307 = vmatprep.subr.bf16.mxu0 0
    %308 = vmatpush1.bf16.msra.mxu0 0
    %309 = vmatprep.subr.bf16.mxu0 0
    %310 = vmatpush1.bf16.msra.mxu0 0
    %311 = vmatprep.mubr.bf16.mxu0 0
    %312 = vmatmul.mubr.bf16.gmra.mrb[0].mxu0 %v195
    %v313 = vpop.f32.mrb[0].mxu0
    %v314 = vadd.f32 %v144, %v313
    %v315 = vpop.f32.mrb[0].mxu0
    %v316 = vadd.f32 %v148, %v315
    %v317 = vpop.f32.mrb[0].mxu0
    %v318 = vadd.f32 %v144, %v317
    %v319 = vpop.f32.mrb[0].mxu0
    %v320 = vadd.f32 %v148, %v319
    %321 = vmatprep.mubr.bf16.mxu0 0
    %322 = vmatmul.mubr.bf16.gmra.mrb[0].mxu0 %v198
    %v323 = vpop.f32.mrb[0].mxu0
    %v324 = vadd.f32 %v144, %v323
    %v325 = vpop.f32.mrb[0].mxu0
    %v326 = vadd.f32 %v148, %v325
    %v327 = vpop.f32.mrb[0].mxu0
    %v328 = vadd.f32 %v144, %v327
    %v329 = vpop.f32.mrb[0].mxu0
    %v330 = vadd.f32 %v148, %v329
    %331 = vmatprep.mubr.bf16.mxu0 0
    %332 = vmatmul.mubr.bf16.gmra.mrb[0].mxu0 %v201
    %v333 = vpop.f32.mrb[0].mxu0
    %v334 = vadd.f32 %v144, %v333
    %v335 = vpop.f32.mrb[0].mxu0
    %v336 = vadd.f32 %v148, %v335
    %v337 = vpop.f32.mrb[0].mxu0
    %v338 = vadd.f32 %v144, %v337
    %v339 = vpop.f32.mrb[0].mxu0
    %v340 = vadd.f32 %v148, %v339
    %341 = vmatprep.mubr.bf16.mxu0 0
    %342 = vmatmul.mubr.bf16.gmra.mrb[0].mxu0 %v204
    %v343 = vpop.f32.mrb[0].mxu0
    %v344 = vadd.f32 %v144, %v343
    %v345 = vpop.f32.mrb[0].mxu0
    %v346 = vadd.f32 %v148, %v345
    %v347 = vpop.f32.mrb[0].mxu0
    %v348 = vadd.f32 %v144, %v347
    %v349 = vpop.f32.mrb[0].mxu0
    %v350 = vadd.f32 %v148, %v349
    %351 = vdwg.mxu0
    %v352 = vld [vmem:[#allocation8] sm:$0xff]
    %v353 = vld [vmem:[#allocation8 + $0x8] sm:$0xff]
    %v354 = vld [vmem:[#allocation8 + $0x10] sm:$0xff]
    %v355 = vld [vmem:[#allocation8 + $0x18] sm:$0xff]
    %v356 = vld [vmem:[#allocation8 + $0x20] sm:$0xff]
    %v357 = vld [vmem:[#allocation8 + $0x28] sm:$0xff]
    %v358 = vld [vmem:[#allocation8 + $0x30] sm:$0xff]
    %v359 = vld [vmem:[#allocation8 + $0x38] sm:$0xff]
    %v360 = vld [vmem:[#allocation8 + $0x40] sm:$0xff]
    %v361 = vld [vmem:[#allocation8 + $0x48] sm:$0xff]
    %v362 = vld [vmem:[#allocation8 + $0x50] sm:$0xff]
    %v363 = vld [vmem:[#allocation8 + $0x58] sm:$0xff]
    %v364 = vld [vmem:[#allocation8 + $0x60] sm:$0xff]
    %v365 = vld [vmem:[#allocation8 + $0x68] sm:$0xff]
    %v366 = vld [vmem:[#allocation8 + $0x70] sm:$0xff]
    %v367 = vld [vmem:[#allocation8 + $0x78] sm:$0xff]
    %v368 = vld [vmem:[#allocation8 + $0x80] sm:$0xff]
    %v369 = vld [vmem:[#allocation8 + $0x88] sm:$0xff]
    %v370 = vld [vmem:[#allocation8 + $0x90] sm:$0xff]
    %v371 = vld [vmem:[#allocation8 + $0x98] sm:$0xff]
    %v372 = vld [vmem:[#allocation8 + $0xa0] sm:$0xff]
    %v373 = vld [vmem:[#allocation8 + $0xa8] sm:$0xff]
    %v374 = vld [vmem:[#allocation8 + $0xb0] sm:$0xff]
    %v375 = vld [vmem:[#allocation8 + $0xb8] sm:$0xff]
    %v376 = vld [vmem:[#allocation8 + $0xc0] sm:$0xff]
    %v377 = vld [vmem:[#allocation8 + $0xc8] sm:$0xff]
    %v378 = vld [vmem:[#allocation8 + $0xd0] sm:$0xff]
    %v379 = vld [vmem:[#allocation8 + $0xd8] sm:$0xff]
    %v380 = vld [vmem:[#allocation8 + $0xe0] sm:$0xff]
    %v381 = vld [vmem:[#allocation8 + $0xe8] sm:$0xff]
    %v382 = vld [vmem:[#allocation8 + $0xf0] sm:$0xff]
    %v383 = vld [vmem:[#allocation8 + $0xf8] sm:$0xff]
    %v416 = vunpack.c.l.b16 %v352
    %v417 = vunpack.c.h.b16 %v352
    %v418 = vunpack.c.l.b16 %v353
    %v419 = vunpack.c.h.b16 %v353
    %v420 = vunpack.c.l.b16 %v354
    %v421 = vunpack.c.h.b16 %v354
    %v422 = vunpack.c.l.b16 %v355
    %v423 = vunpack.c.h.b16 %v355
    %v424 = vunpack.c.l.b16 %v356
    %v425 = vunpack.c.h.b16 %v356
    %v426 = vunpack.c.l.b16 %v357
    %v427 = vunpack.c.h.b16 %v357
    %v428 = vunpack.c.l.b16 %v358
    %v429 = vunpack.c.h.b16 %v358
    %v430 = vunpack.c.l.b16 %v359
    %v431 = vunpack.c.h.b16 %v359
    %v432 = vunpack.c.l.b16 %v360
    %v433 = vunpack.c.h.b16 %v360
    %v434 = vunpack.c.l.b16 %v361
    %v435 = vunpack.c.h.b16 %v361
    %v436 = vunpack.c.l.b16 %v362
    %v437 = vunpack.c.h.b16 %v362
    %v438 = vunpack.c.l.b16 %v363
    %v439 = vunpack.c.h.b16 %v363
    %v440 = vunpack.c.l.b16 %v364
    %v441 = vunpack.c.h.b16 %v364
    %v442 = vunpack.c.l.b16 %v365
    %v443 = vunpack.c.h.b16 %v365
    %v444 = vunpack.c.l.b16 %v366
    %v445 = vunpack.c.h.b16 %v366
    %v446 = vunpack.c.l.b16 %v367
    %v447 = vunpack.c.h.b16 %v367
    %v448 = vunpack.c.l.b16 %v368
    %v449 = vunpack.c.h.b16 %v368
    %v450 = vunpack.c.l.b16 %v369
    %v451 = vunpack.c.h.b16 %v369
    %v452 = vunpack.c.l.b16 %v370
    %v453 = vunpack.c.h.b16 %v370
    %v454 = vunpack.c.l.b16 %v371
    %v455 = vunpack.c.h.b16 %v371
    %v456 = vunpack.c.l.b16 %v372
    %v457 = vunpack.c.h.b16 %v372
    %v458 = vunpack.c.l.b16 %v373
    %v459 = vunpack.c.h.b16 %v373
    %v460 = vunpack.c.l.b16 %v374
    %v461 = vunpack.c.h.b16 %v374
    %v462 = vunpack.c.l.b16 %v375
    %v463 = vunpack.c.h.b16 %v375
    %v464 = vunpack.c.l.b16 %v376
    %v465 = vunpack.c.h.b16 %v376
    %v466 = vunpack.c.l.b16 %v377
    %v467 = vunpack.c.h.b16 %v377
    %v468 = vunpack.c.l.b16 %v378
    %v469 = vunpack.c.h.b16 %v378
    %v470 = vunpack.c.l.b16 %v379
    %v471 = vunpack.c.h.b16 %v379
    %v472 = vunpack.c.l.b16 %v380
    %v473 = vunpack.c.h.b16 %v380
    %v474 = vunpack.c.l.b16 %v381
    %v475 = vunpack.c.h.b16 %v381
    %v476 = vunpack.c.l.b16 %v382
    %v477 = vunpack.c.h.b16 %v382
    %v478 = vunpack.c.l.b16 %v383
    %v479 = vunpack.c.h.b16 %v383
    %v480 = vpack.c.b16 %v420, %v416
    %v481 = vpack.c.b16 %v421, %v417
    %v482 = vpack.c.b16 %v422, %v418
    %v483 = vpack.c.b16 %v423, %v419
    %v484 = vpack.c.b16 %v428, %v424
    %v485 = vpack.c.b16 %v429, %v425
    %v486 = vpack.c.b16 %v430, %v426
    %v487 = vpack.c.b16 %v431, %v427
    %v488 = vpack.c.b16 %v436, %v432
    %v489 = vpack.c.b16 %v437, %v433
    %v490 = vpack.c.b16 %v438, %v434
    %v491 = vpack.c.b16 %v439, %v435
    %v492 = vpack.c.b16 %v444, %v440
    %v493 = vpack.c.b16 %v445, %v441
    %v494 = vpack.c.b16 %v446, %v442
    %v495 = vpack.c.b16 %v447, %v443
    %v496 = vpack.c.b16 %v452, %v448
    %v497 = vpack.c.b16 %v453, %v449
    %v498 = vpack.c.b16 %v454, %v450
    %v499 = vpack.c.b16 %v455, %v451
    %v500 = vpack.c.b16 %v460, %v456
    %v501 = vpack.c.b16 %v461, %v457
    %v502 = vpack.c.b16 %v462, %v458
    %v503 = vpack.c.b16 %v463, %v459
    %v504 = vpack.c.b16 %v468, %v464
    %v505 = vpack.c.b16 %v469, %v465
    %v506 = vpack.c.b16 %v470, %v466
    %v507 = vpack.c.b16 %v471, %v467
    %v508 = vpack.c.b16 %v476, %v472
    %v509 = vpack.c.b16 %v477, %v473
    %v510 = vpack.c.b16 %v478, %v474
    %v511 = vpack.c.b16 %v479, %v475
    %544 = vmatprep.subr.bf16.mxu0 %v481
    %545 = vmatpush1.bf16.msra.mxu0 %v480
    %546 = vmatprep.subr.bf16.mxu0 %v485
    %547 = vmatpush1.bf16.msra.mxu0 %v484
    %548 = vmatprep.subr.bf16.mxu0 %v489
    %549 = vmatpush1.bf16.msra.mxu0 %v488
    %550 = vmatprep.subr.bf16.mxu0 %v493
    %551 = vmatpush1.bf16.msra.mxu0 %v492
    %552 = vmatprep.subr.bf16.mxu0 %v497
    %553 = vmatpush1.bf16.msra.mxu0 %v496
    %554 = vmatprep.subr.bf16.mxu0 %v501
    %555 = vmatpush1.bf16.msra.mxu0 %v500
    %556 = vmatprep.subr.bf16.mxu0 %v505
    %557 = vmatpush1.bf16.msra.mxu0 %v504
    %558 = vmatprep.subr.bf16.mxu0 %v509
    %559 = vmatpush1.bf16.msra.mxu0 %v508
    %560 = vmatprep.subr.bf16.mxu0 0
    %561 = vmatpush1.bf16.msra.mxu0 0
    %562 = vmatprep.subr.bf16.mxu0 0
    %563 = vmatpush1.bf16.msra.mxu0 0
    %564 = vmatprep.subr.bf16.mxu0 0
    %565 = vmatpush1.bf16.msra.mxu0 0
    %566 = vmatprep.subr.bf16.mxu0 0
    %567 = vmatpush1.bf16.msra.mxu0 0
    %568 = vmatprep.subr.bf16.mxu0 0
    %569 = vmatpush1.bf16.msra.mxu0 0
    %570 = vmatprep.subr.bf16.mxu0 0
    %571 = vmatpush1.bf16.msra.mxu0 0
    %572 = vmatprep.subr.bf16.mxu0 0
    %573 = vmatpush1.bf16.msra.mxu0 0
    %574 = vmatprep.subr.bf16.mxu0 0
    %575 = vmatpush1.bf16.msra.mxu0 0
    %576 = vmatprep.mubr.bf16.mxu0 0
    %577 = vmatmul.mubr.bf16.gmra.mrb[0].mxu0 0
    %v578 = vpop.f32.mrb[0].mxu0
    %v579 = vadd.f32 0.0, %v578
    %v580 = vpop.f32.mrb[0].mxu0
    %v581 = vadd.f32 0.0, %v580
    %v582 = vpop.f32.mrb[0].mxu0
    %v583 = vpop.f32.mrb[0].mxu0
    %584 = vdwg.mxu0
    %585 = vmatprep.subr.bf16.mxu0 %v483
    %586 = vmatpush1.bf16.msra.mxu0 %v482
    %587 = vmatprep.subr.bf16.mxu0 %v487
    %588 = vmatpush1.bf16.msra.mxu0 %v486
    %589 = vmatprep.subr.bf16.mxu0 %v491
    %590 = vmatpush1.bf16.msra.mxu0 %v490
    %591 = vmatprep.subr.bf16.mxu0 %v495
    %592 = vmatpush1.bf16.msra.mxu0 %v494
    %593 = vmatprep.subr.bf16.mxu0 %v499
    %594 = vmatpush1.bf16.msra.mxu0 %v498
    %595 = vmatprep.subr.bf16.mxu0 %v503
    %596 = vmatpush1.bf16.msra.mxu0 %v502
    %597 = vmatprep.subr.bf16.mxu0 %v507
    %598 = vmatpush1.bf16.msra.mxu0 %v506
    %599 = vmatprep.subr.bf16.mxu0 %v511
    %600 = vmatpush1.bf16.msra.mxu0 %v510
    %601 = vmatprep.subr.bf16.mxu0 0
    %602 = vmatpush1.bf16.msra.mxu0 0
    %603 = vmatprep.subr.bf16.mxu0 0
    %604 = vmatpush1.bf16.msra.mxu0 0
    %605 = vmatprep.subr.bf16.mxu0 0
    %606 = vmatpush1.bf16.msra.mxu0 0
    %607 = vmatprep.subr.bf16.mxu0 0
    %608 = vmatpush1.bf16.msra.mxu0 0
    %609 = vmatprep.subr.bf16.mxu0 0
    %610 = vmatpush1.bf16.msra.mxu0 0
    %611 = vmatprep.subr.bf16.mxu0 0
    %612 = vmatpush1.bf16.msra.mxu0 0
    %613 = vmatprep.subr.bf16.mxu0 0
    %614 = vmatpush1.bf16.msra.mxu0 0
    %615 = vmatprep.subr.bf16.mxu0 0
    %616 = vmatpush1.bf16.msra.mxu0 0
    %617 = vmatprep.mubr.bf16.mxu0 0
    %618 = vmatmul.mubr.bf16.gmra.mrb[0].mxu0 0
    %v619 = vpop.f32.mrb[0].mxu0
    %v620 = vadd.f32 0.0, %v619
    %v621 = vpop.f32.mrb[0].mxu0
    %v622 = vadd.f32 0.0, %v621
    %v623 = vpop.f32.mrb[0].mxu0
    %v624 = vpop.f32.mrb[0].mxu0
    %625 = vdwg.mxu0
    %v626 = vadd.f32 %v241, %v579
    %v627 = vadd.f32 %v243, %v581
    %v628 = vadd.f32 %v314, %v620
    %v629 = vadd.f32 %v316, %v622
    %v630 = vxor.u32 %v626, 2147483648
    %v631 = vmul.f32 %v630, 1.442695
    %v632 = vpow.pop %v631
    %v633 = vadd.f32 %v632, 1.0
    %v634 = vrcp.pop %v633
    %v635 = vmul.f32 1.0, %v634
    %v636 = vxor.u32 %v627, 2147483648
    %v637 = vmul.f32 %v636, 1.442695
    %v638 = vpow.pop %v637
    %v639 = vadd.f32 %v638, 1.0
    %v640 = vrcp.pop %v639
    %v641 = vmul.f32 1.0, %v640
    %v642 = vtanh.pop %v628
    %v643 = vxor.u32 %v629, 2147483648
    %v644 = vmul.f32 %v643, 1.442695
    %v645 = vpow.pop %v644
    %v646 = vadd.f32 %v645, 1.0
    %v647 = vrcp.pop %v646
    %v648 = vmul.f32 1.0, %v647
    %v649 = vmul.f32 %v641, 0.0
    %v650 = vmul.f32 %v635, %v642
    %v651 = vadd.f32 %v649, %v650
    %v652 = vtanh.pop %v651
    %v653 = vmul.f32 %v648, %v652
    %v654 = vpack.c.bf16 %v653, %v653
    %655 = vmatprep.subr.bf16.mxu0 %v481
    %656 = vmatpush1.bf16.msra.mxu0 %v480
    %657 = vmatprep.subr.bf16.mxu0 %v485
    %658 = vmatpush1.bf16.msra.mxu0 %v484
    %659 = vmatprep.subr.bf16.mxu0 %v489
    %660 = vmatpush1.bf16.msra.mxu0 %v488
    %661 = vmatprep.subr.bf16.mxu0 %v493
    %662 = vmatpush1.bf16.msra.mxu0 %v492
    %663 = vmatprep.subr.bf16.mxu0 %v497
    %664 = vmatpush1.bf16.msra.mxu0 %v496
    %665 = vmatprep.subr.bf16.mxu0 %v501
    %666 = vmatpush1.bf16.msra.mxu0 %v500
    %667 = vmatprep.subr.bf16.mxu0 %v505
    %668 = vmatpush1.bf16.msra.mxu0 %v504
    %669 = vmatprep.subr.bf16.mxu0 %v509
    %670 = vmatpush1.bf16.msra.mxu0 %v508
    %671 = vmatprep.subr.bf16.mxu0 0
    %672 = vmatpush1.bf16.msra.mxu0 0
    %673 = vmatprep.subr.bf16.mxu0 0
    %674 = vmatpush1.bf16.msra.mxu0 0
    %675 = vmatprep.subr.bf16.mxu0 0
    %676 = vmatpush1.bf16.msra.mxu0 0
    %677 = vmatprep.subr.bf16.mxu0 0
    %678 = vmatpush1.bf16.msra.mxu0 0
    %679 = vmatprep.subr.bf16.mxu0 0
    %680 = vmatpush1.bf16.msra.mxu0 0
    %681 = vmatprep.subr.bf16.mxu0 0
    %682 = vmatpush1.bf16.msra.mxu0 0
    %683 = vmatprep.subr.bf16.mxu0 0
    %684 = vmatpush1.bf16.msra.mxu0 0
    %685 = vmatprep.subr.bf16.mxu0 0
    %686 = vmatpush1.bf16.msra.mxu0 0
    %687 = vmatprep.mubr.bf16.mxu0 0
    %688 = vmatmul.mubr.bf16.gmra.mrb[0].mxu0 %v654
    %v689 = vpop.f32.mrb[0].mxu0
    %v690 = vadd.f32 0.0, %v689
    %v691 = vpop.f32.mrb[0].mxu0
    %v692 = vadd.f32 0.0, %v691
    %v693 = vpop.f32.mrb[0].mxu0
    %v694 = vpop.f32.mrb[0].mxu0
    %695 = vdwg.mxu0
    %696 = vmatprep.subr.bf16.mxu0 %v483
    %697 = vmatpush1.bf16.msra.mxu0 %v482
    %698 = vmatprep.subr.bf16.mxu0 %v487
    %699 = vmatpush1.bf16.msra.mxu0 %v486
    %700 = vmatprep.subr.bf16.mxu0 %v491
    %701 = vmatpush1.bf16.msra.mxu0 %v490
    %702 = vmatprep.subr.bf16.mxu0 %v495
    %703 = vmatpush1.bf16.msra.mxu0 %v494
    %704 = vmatprep.subr.bf16.mxu0 %v499
    %705 = vmatpush1.bf16.msra.mxu0 %v498
    %706 = vmatprep.subr.bf16.mxu0 %v503
    %707 = vmatpush1.bf16.msra.mxu0 %v502
    %708 = vmatprep.subr.bf16.mxu0 %v507
    %709 = vmatpush1.bf16.msra.mxu0 %v506
    %710 = vmatprep.subr.bf16.mxu0 %v511
    %711 = vmatpush1.bf16.msra.mxu0 %v510
    %712 = vmatprep.subr.bf16.mxu0 0
    %713 = vmatpush1.bf16.msra.mxu0 0
    %714 = vmatprep.subr.bf16.mxu0 0
    %715 = vmatpush1.bf16.msra.mxu0 0
    %716 = vmatprep.subr.bf16.mxu0 0
    %717 = vmatpush1.bf16.msra.mxu0 0
    %718 = vmatprep.subr.bf16.mxu0 0
    %719 = vmatpush1.bf16.msra.mxu0 0
    %720 = vmatprep.subr.bf16.mxu0 0
    %721 = vmatpush1.bf16.msra.mxu0 0
    %722 = vmatprep.subr.bf16.mxu0 0
    %723 = vmatpush1.bf16.msra.mxu0 0
    %724 = vmatprep.subr.bf16.mxu0 0
    %725 = vmatpush1.bf16.msra.mxu0 0
    %726 = vmatprep.subr.bf16.mxu0 0
    %727 = vmatpush1.bf16.msra.mxu0 0
    %728 = vmatprep.mubr.bf16.mxu0 0
    %729 = vmatmul.mubr.bf16.gmra.mrb[0].mxu0 %v654
    %v730 = vpop.f32.mrb[0].mxu0
    %v731 = vadd.f32 0.0, %v730
    %v732 = vpop.f32.mrb[0].mxu0
    %v733 = vadd.f32 0.0, %v732
    %v734 = vpop.f32.mrb[0].mxu0
    %v735 = vpop.f32.mrb[0].mxu0
    %736 = vdwg.mxu0
    %v737 = vadd.f32 %v245, %v690
    %v738 = vadd.f32 %v247, %v692
    %v739 = vadd.f32 %v318, %v731
    %v740 = vadd.f32 %v320, %v733
    %v741 = vxor.u32 %v737, 2147483648
    %v742 = vmul.f32 %v741, 1.442695
    %v743 = vpow.pop %v742
    %v744 = vadd.f32 %v743, 1.0
    %v745 = vrcp.pop %v744
    %v746 = vmul.f32 1.0, %v745
    %v747 = vxor.u32 %v738, 2147483648
    %v748 = vmul.f32 %v747, 1.442695
    %v749 = vpow.pop %v748
    %v750 = vadd.f32 %v749, 1.0
    %v751 = vrcp.pop %v750
    %v752 = vmul.f32 1.0, %v751
    %v753 = vtanh.pop %v739
    %v754 = vxor.u32 %v740, 2147483648
    %v755 = vmul.f32 %v754, 1.442695
    %v756 = vpow.pop %v755
    %v757 = vadd.f32 %v756, 1.0
    %v758 = vrcp.pop %v757
    %v759 = vmul.f32 1.0, %v758
    %v760 = vmul.f32 %v752, %v651
    %v761 = vmul.f32 %v746, %v753
    %v762 = vadd.f32 %v760, %v761
    %v763 = vtanh.pop %v762
    %v764 = vmul.f32 %v759, %v763
    %v765 = vpack.c.bf16 %v764, %v764
    %766 = vmatprep.subr.bf16.mxu0 %v481
    %767 = vmatpush1.bf16.msra.mxu0 %v480
    %768 = vmatprep.subr.bf16.mxu0 %v485
    %769 = vmatpush1.bf16.msra.mxu0 %v484
    %770 = vmatprep.subr.bf16.mxu0 %v489
    %771 = vmatpush1.bf16.msra.mxu0 %v488
    %772 = vmatprep.subr.bf16.mxu0 %v493
    %773 = vmatpush1.bf16.msra.mxu0 %v492
    %774 = vmatprep.subr.bf16.mxu0 %v497
    %775 = vmatpush1.bf16.msra.mxu0 %v496
    %776 = vmatprep.subr.bf16.mxu0 %v501
    %777 = vmatpush1.bf16.msra.mxu0 %v500
    %778 = vmatprep.subr.bf16.mxu0 %v505
    %779 = vmatpush1.bf16.msra.mxu0 %v504
    %780 = vmatprep.subr.bf16.mxu0 %v509
    %781 = vmatpush1.bf16.msra.mxu0 %v508
    %782 = vmatprep.subr.bf16.mxu0 0
    %783 = vmatpush1.bf16.msra.mxu0 0
    %784 = vmatprep.subr.bf16.mxu0 0
    %785 = vmatpush1.bf16.msra.mxu0 0
    %786 = vmatprep.subr.bf16.mxu0 0
    %787 = vmatpush1.bf16.msra.mxu0 0
    %788 = vmatprep.subr.bf16.mxu0 0
    %789 = vmatpush1.bf16.msra.mxu0 0
    %790 = vmatprep.subr.bf16.mxu0 0
    %791 = vmatpush1.bf16.msra.mxu0 0
    %792 = vmatprep.subr.bf16.mxu0 0
    %793 = vmatpush1.bf16.msra.mxu0 0
    %794 = vmatprep.subr.bf16.mxu0 0
    %795 = vmatpush1.bf16.msra.mxu0 0
    %796 = vmatprep.subr.bf16.mxu0 0
    %797 = vmatpush1.bf16.msra.mxu0 0
    %798 = vmatprep.mubr.bf16.mxu0 0
    %799 = vmatmul.mubr.bf16.gmra.mrb[0].mxu0 %v765
    %v800 = vpop.f32.mrb[0].mxu0
    %v801 = vadd.f32 0.0, %v800
    %v802 = vpop.f32.mrb[0].mxu0
    %v803 = vadd.f32 0.0, %v802
    %v804 = vpop.f32.mrb[0].mxu0
    %v805 = vpop.f32.mrb[0].mxu0
    %806 = vdwg.mxu0
    %807 = vmatprep.subr.bf16.mxu0 %v483
    %808 = vmatpush1.bf16.msra.mxu0 %v482
    %809 = vmatprep.subr.bf16.mxu0 %v487
    %810 = vmatpush1.bf16.msra.mxu0 %v486
    %811 = vmatprep.subr.bf16.mxu0 %v491
    %812 = vmatpush1.bf16.msra.mxu0 %v490
    %813 = vmatprep.subr.bf16.mxu0 %v495
    %814 = vmatpush1.bf16.msra.mxu0 %v494
    %815 = vmatprep.subr.bf16.mxu0 %v499
    %816 = vmatpush1.bf16.msra.mxu0 %v498
    %817 = vmatprep.subr.bf16.mxu0 %v503
    %818 = vmatpush1.bf16.msra.mxu0 %v502
    %819 = vmatprep.subr.bf16.mxu0 %v507
    %820 = vmatpush1.bf16.msra.mxu0 %v506
    %821 = vmatprep.subr.bf16.mxu0 %v511
    %822 = vmatpush1.bf16.msra.mxu0 %v510
    %823 = vmatprep.subr.bf16.mxu0 0
    %824 = vmatpush1.bf16.msra.mxu0 0
    %825 = vmatprep.subr.bf16.mxu0 0
    %826 = vmatpush1.bf16.msra.mxu0 0
    %827 = vmatprep.subr.bf16.mxu0 0
    %828 = vmatpush1.bf16.msra.mxu0 0
    %829 = vmatprep.subr.bf16.mxu0 0
    %830 = vmatpush1.bf16.msra.mxu0 0
    %831 = vmatprep.subr.bf16.mxu0 0
    %832 = vmatpush1.bf16.msra.mxu0 0
    %833 = vmatprep.subr.bf16.mxu0 0
    %834 = vmatpush1.bf16.msra.mxu0 0
    %835 = vmatprep.subr.bf16.mxu0 0
    %836 = vmatpush1.bf16.msra.mxu0 0
    %837 = vmatprep.subr.bf16.mxu0 0
    %838 = vmatpush1.bf16.msra.mxu0 0
    %839 = vmatprep.mubr.bf16.mxu0 0
    %840 = vmatmul.mubr.bf16.gmra.mrb[0].mxu0 %v765
    %v841 = vpop.f32.mrb[0].mxu0
    %v842 = vadd.f32 0.0, %v841
    %v843 = vpop.f32.mrb[0].mxu0
    %v844 = vadd.f32 0.0, %v843
    %v845 = vpop.f32.mrb[0].mxu0
    %v846 = vpop.f32.mrb[0].mxu0
    %847 = vdwg.mxu0
    %v848 = vadd.f32 %v251, %v801
    %v849 = vadd.f32 %v253, %v803
    %v850 = vadd.f32 %v324, %v842
    %v851 = vadd.f32 %v326, %v844
    %v852 = vxor.u32 %v848, 2147483648
    %v853 = vmul.f32 %v852, 1.442695
    %v854 = vpow.pop %v853
    %v855 = vadd.f32 %v854, 1.0
    %v856 = vrcp.pop %v855
    %v857 = vmul.f32 1.0, %v856
    %v858 = vxor.u32 %v849, 2147483648
    %v859 = vmul.f32 %v858, 1.442695
    %v860 = vpow.pop %v859
    %v861 = vadd.f32 %v860, 1.0
    %v862 = vrcp.pop %v861
    %v863 = vmul.f32 1.0, %v862
    %v864 = vtanh.pop %v850
    %v865 = vxor.u32 %v851, 2147483648
    %v866 = vmul.f32 %v865, 1.442695
    %v867 = vpow.pop %v866
    %v868 = vadd.f32 %v867, 1.0
    %v869 = vrcp.pop %v868
    %v870 = vmul.f32 1.0, %v869
    %v871 = vmul.f32 %v863, %v762
    %v872 = vmul.f32 %v857, %v864
    %v873 = vadd.f32 %v871, %v872
    %v874 = vtanh.pop %v873
    %v875 = vmul.f32 %v870, %v874
    %v876 = vpack.c.bf16 %v875, %v875
    %877 = vmatprep.subr.bf16.mxu0 %v481
    %878 = vmatpush1.bf16.msra.mxu0 %v480
    %879 = vmatprep.subr.bf16.mxu0 %v485
    %880 = vmatpush1.bf16.msra.mxu0 %v484
    %881 = vmatprep.subr.bf16.mxu0 %v489
    %882 = vmatpush1.bf16.msra.mxu0 %v488
    %883 = vmatprep.subr.bf16.mxu0 %v493
    %884 = vmatpush1.bf16.msra.mxu0 %v492
    %885 = vmatprep.subr.bf16.mxu0 %v497
    %886 = vmatpush1.bf16.msra.mxu0 %v496
    %887 = vmatprep.subr.bf16.mxu0 %v501
    %888 = vmatpush1.bf16.msra.mxu0 %v500
    %889 = vmatprep.subr.bf16.mxu0 %v505
    %890 = vmatpush1.bf16.msra.mxu0 %v504
    %891 = vmatprep.subr.bf16.mxu0 %v509
    %892 = vmatpush1.bf16.msra.mxu0 %v508
    %893 = vmatprep.subr.bf16.mxu0 0
    %894 = vmatpush1.bf16.msra.mxu0 0
    %895 = vmatprep.subr.bf16.mxu0 0
    %896 = vmatpush1.bf16.msra.mxu0 0
    %897 = vmatprep.subr.bf16.mxu0 0
    %898 = vmatpush1.bf16.msra.mxu0 0
    %899 = vmatprep.subr.bf16.mxu0 0
    %900 = vmatpush1.bf16.msra.mxu0 0
    %901 = vmatprep.subr.bf16.mxu0 0
    %902 = vmatpush1.bf16.msra.mxu0 0
    %903 = vmatprep.subr.bf16.mxu0 0
    %904 = vmatpush1.bf16.msra.mxu0 0
    %905 = vmatprep.subr.bf16.mxu0 0
    %906 = vmatpush1.bf16.msra.mxu0 0
    %907 = vmatprep.subr.bf16.mxu0 0
    %908 = vmatpush1.bf16.msra.mxu0 0
    %909 = vmatprep.mubr.bf16.mxu0 0
    %910 = vmatmul.mubr.bf16.gmra.mrb[0].mxu0 %v876
    %v911 = vpop.f32.mrb[0].mxu0
    %v912 = vadd.f32 0.0, %v911
    %v913 = vpop.f32.mrb[0].mxu0
    %v914 = vadd.f32 0.0, %v913
    %v915 = vpop.f32.mrb[0].mxu0
    %v916 = vpop.f32.mrb[0].mxu0
    %917 = vdwg.mxu0
    %918 = vmatprep.subr.bf16.mxu0 %v483
    %919 = vmatpush1.bf16.msra.mxu0 %v482
    %920 = vmatprep.subr.bf16.mxu0 %v487
    %921 = vmatpush1.bf16.msra.mxu0 %v486
    %922 = vmatprep.subr.bf16.mxu0 %v491
    %923 = vmatpush1.bf16.msra.mxu0 %v490
    %924 = vmatprep.subr.bf16.mxu0 %v495
    %925 = vmatpush1.bf16.msra.mxu0 %v494
    %926 = vmatprep.subr.bf16.mxu0 %v499
    %927 = vmatpush1.bf16.msra.mxu0 %v498
    %928 = vmatprep.subr.bf16.mxu0 %v503
    %929 = vmatpush1.bf16.msra.mxu0 %v502
    %930 = vmatprep.subr.bf16.mxu0 %v507
    %931 = vmatpush1.bf16.msra.mxu0 %v506
    %932 = vmatprep.subr.bf16.mxu0 %v511
    %933 = vmatpush1.bf16.msra.mxu0 %v510
    %934 = vmatprep.subr.bf16.mxu0 0
    %935 = vmatpush1.bf16.msra.mxu0 0
    %936 = vmatprep.subr.bf16.mxu0 0
    %937 = vmatpush1.bf16.msra.mxu0 0
    %938 = vmatprep.subr.bf16.mxu0 0
    %939 = vmatpush1.bf16.msra.mxu0 0
    %940 = vmatprep.subr.bf16.mxu0 0
    %941 = vmatpush1.bf16.msra.mxu0 0
    %942 = vmatprep.subr.bf16.mxu0 0
    %943 = vmatpush1.bf16.msra.mxu0 0
    %944 = vmatprep.subr.bf16.mxu0 0
    %945 = vmatpush1.bf16.msra.mxu0 0
    %946 = vmatprep.subr.bf16.mxu0 0
    %947 = vmatpush1.bf16.msra.mxu0 0
    %948 = vmatprep.subr.bf16.mxu0 0
    %949 = vmatpush1.bf16.msra.mxu0 0
    %950 = vmatprep.mubr.bf16.mxu0 0
    %951 = vmatmul.mubr.bf16.gmra.mrb[0].mxu0 %v876
    %v952 = vpop.f32.mrb[0].mxu0
    %v953 = vadd.f32 0.0, %v952
    %v954 = vpop.f32.mrb[0].mxu0
    %v955 = vadd.f32 0.0, %v954
    %v956 = vpop.f32.mrb[0].mxu0
    %v957 = vpop.f32.mrb[0].mxu0
    %958 = vdwg.mxu0
    %v959 = vadd.f32 %v255, %v912
    %v960 = vadd.f32 %v257, %v914
    %v961 = vadd.f32 %v328, %v953
    %v962 = vadd.f32 %v330, %v955
    %v963 = vxor.u32 %v959, 2147483648
    %v964 = vmul.f32 %v963, 1.442695
    %v965 = vpow.pop %v964
    %v966 = vadd.f32 %v965, 1.0
    %v967 = vrcp.pop %v966
    %v968 = vmul.f32 1.0, %v967
    %v969 = vxor.u32 %v960, 2147483648
    %v970 = vmul.f32 %v969, 1.442695
    %v971 = vpow.pop %v970
    %v972 = vadd.f32 %v971, 1.0
    %v973 = vrcp.pop %v972
    %v974 = vmul.f32 1.0, %v973
    %v975 = vtanh.pop %v961
    %v976 = vxor.u32 %v962, 2147483648
    %v977 = vmul.f32 %v976, 1.442695
    %v978 = vpow.pop %v977
    %v979 = vadd.f32 %v978, 1.0
    %v980 = vrcp.pop %v979
    %v981 = vmul.f32 1.0, %v980
    %v982 = vmul.f32 %v974, %v873
    %v983 = vmul.f32 %v968, %v975
    %v984 = vadd.f32 %v982, %v983
    %v985 = vtanh.pop %v984
    %v986 = vmul.f32 %v981, %v985
    %v987 = vpack.c.bf16 %v986, %v986
    %988 = vmatprep.subr.bf16.mxu0 %v481
    %989 = vmatpush1.bf16.msra.mxu0 %v480
    %990 = vmatprep.subr.bf16.mxu0 %v485
    %991 = vmatpush1.bf16.msra.mxu0 %v484
    %992 = vmatprep.subr.bf16.mxu0 %v489
    %993 = vmatpush1.bf16.msra.mxu0 %v488
    %994 = vmatprep.subr.bf16.mxu0 %v493
    %995 = vmatpush1.bf16.msra.mxu0 %v492
    %996 = vmatprep.subr.bf16.mxu0 %v497
    %997 = vmatpush1.bf16.msra.mxu0 %v496
    %998 = vmatprep.subr.bf16.mxu0 %v501
    %999 = vmatpush1.bf16.msra.mxu0 %v500
    %1000 = vmatprep.subr.bf16.mxu0 %v505
    %1001 = vmatpush1.bf16.msra.mxu0 %v504
    %1002 = vmatprep.subr.bf16.mxu0 %v509
    %1003 = vmatpush1.bf16.msra.mxu0 %v508
    %1004 = vmatprep.subr.bf16.mxu0 0
    %1005 = vmatpush1.bf16.msra.mxu0 0
    %1006 = vmatprep.subr.bf16.mxu0 0
    %1007 = vmatpush1.bf16.msra.mxu0 0
    %1008 = vmatprep.subr.bf16.mxu0 0
    %1009 = vmatpush1.bf16.msra.mxu0 0
    %1010 = vmatprep.subr.bf16.mxu0 0
    %1011 = vmatpush1.bf16.msra.mxu0 0
    %1012 = vmatprep.subr.bf16.mxu0 0
    %1013 = vmatpush1.bf16.msra.mxu0 0
    %1014 = vmatprep.subr.bf16.mxu0 0
    %1015 = vmatpush1.bf16.msra.mxu0 0
    %1016 = vmatprep.subr.bf16.mxu0 0
    %1017 = vmatpush1.bf16.msra.mxu0 0
    %1018 = vmatprep.subr.bf16.mxu0 0
    %1019 = vmatpush1.bf16.msra.mxu0 0
    %1020 = vmatprep.mubr.bf16.mxu0 0
    %1021 = vmatmul.mubr.bf16.gmra.mrb[0].mxu0 %v987
    %v1022 = vpop.f32.mrb[0].mxu0
    %v1023 = vadd.f32 0.0, %v1022
    %v1024 = vpop.f32.mrb[0].mxu0
    %v1025 = vadd.f32 0.0, %v1024
    %v1026 = vpop.f32.mrb[0].mxu0
    %v1027 = vpop.f32.mrb[0].mxu0
    %1028 = vdwg.mxu0
    %1029 = vmatprep.subr.bf16.mxu0 %v483
    %1030 = vmatpush1.bf16.msra.mxu0 %v482
    %1031 = vmatprep.subr.bf16.mxu0 %v487
    %1032 = vmatpush1.bf16.msra.mxu0 %v486
    %1033 = vmatprep.subr.bf16.mxu0 %v491
    %1034 = vmatpush1.bf16.msra.mxu0 %v490
    %1035 = vmatprep.subr.bf16.mxu0 %v495
    %1036 = vmatpush1.bf16.msra.mxu0 %v494
    %1037 = vmatprep.subr.bf16.mxu0 %v499
    %1038 = vmatpush1.bf16.msra.mxu0 %v498
    %1039 = vmatprep.subr.bf16.mxu0 %v503
    %1040 = vmatpush1.bf16.msra.mxu0 %v502
    %1041 = vmatprep.subr.bf16.mxu0 %v507
    %1042 = vmatpush1.bf16.msra.mxu0 %v506
    %1043 = vmatprep.subr.bf16.mxu0 %v511
    %1044 = vmatpush1.bf16.msra.mxu0 %v510
    %1045 = vmatprep.subr.bf16.mxu0 0
    %1046 = vmatpush1.bf16.msra.mxu0 0
    %1047 = vmatprep.subr.bf16.mxu0 0
    %1048 = vmatpush1.bf16.msra.mxu0 0
    %1049 = vmatprep.subr.bf16.mxu0 0
    %1050 = vmatpush1.bf16.msra.mxu0 0
    %1051 = vmatprep.subr.bf16.mxu0 0
    %1052 = vmatpush1.bf16.msra.mxu0 0
    %1053 = vmatprep.subr.bf16.mxu0 0
    %1054 = vmatpush1.bf16.msra.mxu0 0
    %1055 = vmatprep.subr.bf16.mxu0 0
    %1056 = vmatpush1.bf16.msra.mxu0 0
    %1057 = vmatprep.subr.bf16.mxu0 0
    %1058 = vmatpush1.bf16.msra.mxu0 0
    %1059 = vmatprep.subr.bf16.mxu0 0
    %1060 = vmatpush1.bf16.msra.mxu0 0
    %1061 = vmatprep.mubr.bf16.mxu0 0
    %1062 = vmatmul.mubr.bf16.gmra.mrb[0].mxu0 %v987
    %v1063 = vpop.f32.mrb[0].mxu0
    %v1064 = vadd.f32 0.0, %v1063
    %v1065 = vpop.f32.mrb[0].mxu0
    %v1066 = vadd.f32 0.0, %v1065
    %v1067 = vpop.f32.mrb[0].mxu0
    %v1068 = vpop.f32.mrb[0].mxu0
    %1069 = vdwg.mxu0
    %v1070 = vadd.f32 %v261, %v1023
    %v1071 = vadd.f32 %v263, %v1025
    %v1072 = vadd.f32 %v334, %v1064
    %v1073 = vadd.f32 %v336, %v1066
    %v1074 = vxor.u32 %v1070, 2147483648
    %v1075 = vmul.f32 %v1074, 1.442695
    %v1076 = vpow.pop %v1075
    %v1077 = vadd.f32 %v1076, 1.0
    %v1078 = vrcp.pop %v1077
    %v1079 = vmul.f32 1.0, %v1078
    %v1080 = vxor.u32 %v1071, 2147483648
    %v1081 = vmul.f32 %v1080, 1.442695
    %v1082 = vpow.pop %v1081
    %v1083 = vadd.f32 %v1082, 1.0
    %v1084 = vrcp.pop %v1083
    %v1085 = vmul.f32 1.0, %v1084
    %v1086 = vtanh.pop %v1072
    %v1087 = vxor.u32 %v1073, 2147483648
    %v1088 = vmul.f32 %v1087, 1.442695
    %v1089 = vpow.pop %v1088
    %v1090 = vadd.f32 %v1089, 1.0
    %v1091 = vrcp.pop %v1090
    %v1092 = vmul.f32 1.0, %v1091
    %v1093 = vmul.f32 %v1085, %v984
    %v1094 = vmul.f32 %v1079, %v1086
    %v1095 = vadd.f32 %v1093, %v1094
    %v1096 = vtanh.pop %v1095
    %v1097 = vmul.f32 %v1092, %v1096
    %v1098 = vpack.c.bf16 %v1097, %v1097
    %1099 = vmatprep.subr.bf16.mxu0 %v481
    %1100 = vmatpush1.bf16.msra.mxu0 %v480
    %1101 = vmatprep.subr.bf16.mxu0 %v485
    %1102 = vmatpush1.bf16.msra.mxu0 %v484
    %1103 = vmatprep.subr.bf16.mxu0 %v489
    %1104 = vmatpush1.bf16.msra.mxu0 %v488
    %1105 = vmatprep.subr.bf16.mxu0 %v493
    %1106 = vmatpush1.bf16.msra.mxu0 %v492
    %1107 = vmatprep.subr.bf16.mxu0 %v497
    %1108 = vmatpush1.bf16.msra.mxu0 %v496
    %1109 = vmatprep.subr.bf16.mxu0 %v501
    %1110 = vmatpush1.bf16.msra.mxu0 %v500
    %1111 = vmatprep.subr.bf16.mxu0 %v505
    %1112 = vmatpush1.bf16.msra.mxu0 %v504
    %1113 = vmatprep.subr.bf16.mxu0 %v509
    %1114 = vmatpush1.bf16.msra.mxu0 %v508
    %1115 = vmatprep.subr.bf16.mxu0 0
    %1116 = vmatpush1.bf16.msra.mxu0 0
    %1117 = vmatprep.subr.bf16.mxu0 0
    %1118 = vmatpush1.bf16.msra.mxu0 0
    %1119 = vmatprep.subr.bf16.mxu0 0
    %1120 = vmatpush1.bf16.msra.mxu0 0
    %1121 = vmatprep.subr.bf16.mxu0 0
    %1122 = vmatpush1.bf16.msra.mxu0 0
    %1123 = vmatprep.subr.bf16.mxu0 0
    %1124 = vmatpush1.bf16.msra.mxu0 0
    %1125 = vmatprep.subr.bf16.mxu0 0
    %1126 = vmatpush1.bf16.msra.mxu0 0
    %1127 = vmatprep.subr.bf16.mxu0 0
    %1128 = vmatpush1.bf16.msra.mxu0 0
    %1129 = vmatprep.subr.bf16.mxu0 0
    %1130 = vmatpush1.bf16.msra.mxu0 0
    %1131 = vmatprep.mubr.bf16.mxu0 0
    %1132 = vmatmul.mubr.bf16.gmra.mrb[0].mxu0 %v1098
    %v1133 = vpop.f32.mrb[0].mxu0
    %v1134 = vadd.f32 0.0, %v1133
    %v1135 = vpop.f32.mrb[0].mxu0
    %v1136 = vadd.f32 0.0, %v1135
    %v1137 = vpop.f32.mrb[0].mxu0
    %v1138 = vpop.f32.mrb[0].mxu0
    %1139 = vdwg.mxu0
    %1140 = vmatprep.subr.bf16.mxu0 %v483
    %1141 = vmatpush1.bf16.msra.mxu0 %v482
    %1142 = vmatprep.subr.bf16.mxu0 %v487
    %1143 = vmatpush1.bf16.msra.mxu0 %v486
    %1144 = vmatprep.subr.bf16.mxu0 %v491
    %1145 = vmatpush1.bf16.msra.mxu0 %v490
    %1146 = vmatprep.subr.bf16.mxu0 %v495
    %1147 = vmatpush1.bf16.msra.mxu0 %v494
    %1148 = vmatprep.subr.bf16.mxu0 %v499
    %1149 = vmatpush1.bf16.msra.mxu0 %v498
    %1150 = vmatprep.subr.bf16.mxu0 %v503
    %1151 = vmatpush1.bf16.msra.mxu0 %v502
    %1152 = vmatprep.subr.bf16.mxu0 %v507
    %1153 = vmatpush1.bf16.msra.mxu0 %v506
    %1154 = vmatprep.subr.bf16.mxu0 %v511
    %1155 = vmatpush1.bf16.msra.mxu0 %v510
    %1156 = vmatprep.subr.bf16.mxu0 0
    %1157 = vmatpush1.bf16.msra.mxu0 0
    %1158 = vmatprep.subr.bf16.mxu0 0
    %1159 = vmatpush1.bf16.msra.mxu0 0
    %1160 = vmatprep.subr.bf16.mxu0 0
    %1161 = vmatpush1.bf16.msra.mxu0 0
    %1162 = vmatprep.subr.bf16.mxu0 0
    %1163 = vmatpush1.bf16.msra.mxu0 0
    %1164 = vmatprep.subr.bf16.mxu0 0
    %1165 = vmatpush1.bf16.msra.mxu0 0
    %1166 = vmatprep.subr.bf16.mxu0 0
    %1167 = vmatpush1.bf16.msra.mxu0 0
    %1168 = vmatprep.subr.bf16.mxu0 0
    %1169 = vmatpush1.bf16.msra.mxu0 0
    %1170 = vmatprep.subr.bf16.mxu0 0
    %1171 = vmatpush1.bf16.msra.mxu0 0
    %1172 = vmatprep.mubr.bf16.mxu0 0
    %1173 = vmatmul.mubr.bf16.gmra.mrb[0].mxu0 %v1098
    %v1174 = vpop.f32.mrb[0].mxu0
    %v1175 = vadd.f32 0.0, %v1174
    %v1176 = vpop.f32.mrb[0].mxu0
    %v1177 = vadd.f32 0.0, %v1176
    %v1178 = vpop.f32.mrb[0].mxu0
    %v1179 = vpop.f32.mrb[0].mxu0
    %1180 = vdwg.mxu0
    %v1181 = vadd.f32 %v265, %v1134
    %v1182 = vadd.f32 %v267, %v1136
    %v1183 = vadd.f32 %v338, %v1175
    %v1184 = vadd.f32 %v340, %v1177
    %v1185 = vxor.u32 %v1181, 2147483648
    %v1186 = vmul.f32 %v1185, 1.442695
    %v1187 = vpow.pop %v1186
    %v1188 = vadd.f32 %v1187, 1.0
    %v1189 = vrcp.pop %v1188
    %v1190 = vmul.f32 1.0, %v1189
    %v1191 = vxor.u32 %v1182, 2147483648
    %v1192 = vmul.f32 %v1191, 1.442695
    %v1193 = vpow.pop %v1192
    %v1194 = vadd.f32 %v1193, 1.0
    %v1195 = vrcp.pop %v1194
    %v1196 = vmul.f32 1.0, %v1195
    %v1197 = vtanh.pop %v1183
    %v1198 = vxor.u32 %v1184, 2147483648
    %v1199 = vmul.f32 %v1198, 1.442695
    %v1200 = vpow.pop %v1199
    %v1201 = vadd.f32 %v1200, 1.0
    %v1202 = vrcp.pop %v1201
    %v1203 = vmul.f32 1.0, %v1202
    %v1204 = vmul.f32 %v1196, %v1095
    %v1205 = vmul.f32 %v1190, %v1197
    %v1206 = vadd.f32 %v1204, %v1205
    %v1207 = vtanh.pop %v1206
    %v1208 = vmul.f32 %v1203, %v1207
    %v1209 = vpack.c.bf16 %v1208, %v1208
    %1210 = vmatprep.subr.bf16.mxu0 %v481
    %1211 = vmatpush1.bf16.msra.mxu0 %v480
    %1212 = vmatprep.subr.bf16.mxu0 %v485
    %1213 = vmatpush1.bf16.msra.mxu0 %v484
    %1214 = vmatprep.subr.bf16.mxu0 %v489
    %1215 = vmatpush1.bf16.msra.mxu0 %v488
    %1216 = vmatprep.subr.bf16.mxu0 %v493
    %1217 = vmatpush1.bf16.msra.mxu0 %v492
    %1218 = vmatprep.subr.bf16.mxu0 %v497
    %1219 = vmatpush1.bf16.msra.mxu0 %v496
    %1220 = vmatprep.subr.bf16.mxu0 %v501
    %1221 = vmatpush1.bf16.msra.mxu0 %v500
    %1222 = vmatprep.subr.bf16.mxu0 %v505
    %1223 = vmatpush1.bf16.msra.mxu0 %v504
    %1224 = vmatprep.subr.bf16.mxu0 %v509
    %1225 = vmatpush1.bf16.msra.mxu0 %v508
    %1226 = vmatprep.subr.bf16.mxu0 0
    %1227 = vmatpush1.bf16.msra.mxu0 0
    %1228 = vmatprep.subr.bf16.mxu0 0
    %1229 = vmatpush1.bf16.msra.mxu0 0
    %1230 = vmatprep.subr.bf16.mxu0 0
    %1231 = vmatpush1.bf16.msra.mxu0 0
    %1232 = vmatprep.subr.bf16.mxu0 0
    %1233 = vmatpush1.bf16.msra.mxu0 0
    %1234 = vmatprep.subr.bf16.mxu0 0
    %1235 = vmatpush1.bf16.msra.mxu0 0
    %1236 = vmatprep.subr.bf16.mxu0 0
    %1237 = vmatpush1.bf16.msra.mxu0 0
    %1238 = vmatprep.subr.bf16.mxu0 0
    %1239 = vmatpush1.bf16.msra.mxu0 0
    %1240 = vmatprep.subr.bf16.mxu0 0
    %1241 = vmatpush1.bf16.msra.mxu0 0
    %1242 = vmatprep.mubr.bf16.mxu0 0
    %1243 = vmatmul.mubr.bf16.gmra.mrb[0].mxu0 %v1209
    %v1244 = vpop.f32.mrb[0].mxu0
    %v1245 = vadd.f32 0.0, %v1244
    %v1246 = vpop.f32.mrb[0].mxu0
    %v1247 = vadd.f32 0.0, %v1246
    %v1248 = vpop.f32.mrb[0].mxu0
    %v1249 = vpop.f32.mrb[0].mxu0
    %1250 = vdwg.mxu0
    %1251 = vmatprep.subr.bf16.mxu0 %v483
    %1252 = vmatpush1.bf16.msra.mxu0 %v482
    %1253 = vmatprep.subr.bf16.mxu0 %v487
    %1254 = vmatpush1.bf16.msra.mxu0 %v486
    %1255 = vmatprep.subr.bf16.mxu0 %v491
    %1256 = vmatpush1.bf16.msra.mxu0 %v490
    %1257 = vmatprep.subr.bf16.mxu0 %v495
    %1258 = vmatpush1.bf16.msra.mxu0 %v494
    %1259 = vmatprep.subr.bf16.mxu0 %v499
    %1260 = vmatpush1.bf16.msra.mxu0 %v498
    %1261 = vmatprep.subr.bf16.mxu0 %v503
    %1262 = vmatpush1.bf16.msra.mxu0 %v502
    %1263 = vmatprep.subr.bf16.mxu0 %v507
    %1264 = vmatpush1.bf16.msra.mxu0 %v506
    %1265 = vmatprep.subr.bf16.mxu0 %v511
    %1266 = vmatpush1.bf16.msra.mxu0 %v510
    %1267 = vmatprep.subr.bf16.mxu0 0
    %1268 = vmatpush1.bf16.msra.mxu0 0
    %1269 = vmatprep.subr.bf16.mxu0 0
    %1270 = vmatpush1.bf16.msra.mxu0 0
    %1271 = vmatprep.subr.bf16.mxu0 0
    %1272 = vmatpush1.bf16.msra.mxu0 0
    %1273 = vmatprep.subr.bf16.mxu0 0
    %1274 = vmatpush1.bf16.msra.mxu0 0
    %1275 = vmatprep.subr.bf16.mxu0 0
    %1276 = vmatpush1.bf16.msra.mxu0 0
    %1277 = vmatprep.subr.bf16.mxu0 0
    %1278 = vmatpush1.bf16.msra.mxu0 0
    %1279 = vmatprep.subr.bf16.mxu0 0
    %1280 = vmatpush1.bf16.msra.mxu0 0
    %1281 = vmatprep.subr.bf16.mxu0 0
    %1282 = vmatpush1.bf16.msra.mxu0 0
    %1283 = vmatprep.mubr.bf16.mxu0 0
    %1284 = vmatmul.mubr.bf16.gmra.mrb[0].mxu0 %v1209
    %v1285 = vpop.f32.mrb[0].mxu0
    %v1286 = vadd.f32 0.0, %v1285
    %v1287 = vpop.f32.mrb[0].mxu0
    %v1288 = vadd.f32 0.0, %v1287
    %v1289 = vpop.f32.mrb[0].mxu0
    %v1290 = vpop.f32.mrb[0].mxu0
    %1291 = vdwg.mxu0
    %v1292 = vadd.f32 %v271, %v1245
    %v1293 = vadd.f32 %v273, %v1247
    %v1294 = vadd.f32 %v344, %v1286
    %v1295 = vadd.f32 %v346, %v1288
    %v1296 = vxor.u32 %v1292, 2147483648
    %v1297 = vmul.f32 %v1296, 1.442695
    %v1298 = vpow.pop %v1297
    %v1299 = vadd.f32 %v1298, 1.0
    %v1300 = vrcp.pop %v1299
    %v1301 = vmul.f32 1.0, %v1300
    %v1302 = vxor.u32 %v1293, 2147483648
    %v1303 = vmul.f32 %v1302, 1.442695
    %v1304 = vpow.pop %v1303
    %v1305 = vadd.f32 %v1304, 1.0
    %v1306 = vrcp.pop %v1305
    %v1307 = vmul.f32 1.0, %v1306
    %v1308 = vtanh.pop %v1294
    %v1309 = vxor.u32 %v1295, 2147483648
    %v1310 = vmul.f32 %v1309, 1.442695
    %v1311 = vpow.pop %v1310
    %v1312 = vadd.f32 %v1311, 1.0
    %v1313 = vrcp.pop %v1312
    %v1314 = vmul.f32 1.0, %v1313
    %v1315 = vmul.f32 %v1307, %v1206
    %v1316 = vmul.f32 %v1301, %v1308
    %v1317 = vadd.f32 %v1315, %v1316
    %v1318 = vtanh.pop %v1317
    %v1319 = vmul.f32 %v1314, %v1318
    %v1320 = vpack.c.bf16 %v1319, %v1319
    %1321 = vmatprep.subr.bf16.mxu0 %v481
    %1322 = vmatpush1.bf16.msra.mxu0 %v480
    %1323 = vmatprep.subr.bf16.mxu0 %v485
    %1324 = vmatpush1.bf16.msra.mxu0 %v484
    %1325 = vmatprep.subr.bf16.mxu0 %v489
    %1326 = vmatpush1.bf16.msra.mxu0 %v488
    %1327 = vmatprep.subr.bf16.mxu0 %v493
    %1328 = vmatpush1.bf16.msra.mxu0 %v492
    %1329 = vmatprep.subr.bf16.mxu0 %v497
    %1330 = vmatpush1.bf16.msra.mxu0 %v496
    %1331 = vmatprep.subr.bf16.mxu0 %v501
    %1332 = vmatpush1.bf16.msra.mxu0 %v500
    %1333 = vmatprep.subr.bf16.mxu0 %v505
    %1334 = vmatpush1.bf16.msra.mxu0 %v504
    %1335 = vmatprep.subr.bf16.mxu0 %v509
    %1336 = vmatpush1.bf16.msra.mxu0 %v508
    %1337 = vmatprep.subr.bf16.mxu0 0
    %1338 = vmatpush1.bf16.msra.mxu0 0
    %1339 = vmatprep.subr.bf16.mxu0 0
    %1340 = vmatpush1.bf16.msra.mxu0 0
    %1341 = vmatprep.subr.bf16.mxu0 0
    %1342 = vmatpush1.bf16.msra.mxu0 0
    %1343 = vmatprep.subr.bf16.mxu0 0
    %1344 = vmatpush1.bf16.msra.mxu0 0
    %1345 = vmatprep.subr.bf16.mxu0 0
    %1346 = vmatpush1.bf16.msra.mxu0 0
    %1347 = vmatprep.subr.bf16.mxu0 0
    %1348 = vmatpush1.bf16.msra.mxu0 0
    %1349 = vmatprep.subr.bf16.mxu0 0
    %1350 = vmatpush1.bf16.msra.mxu0 0
    %1351 = vmatprep.subr.bf16.mxu0 0
    %1352 = vmatpush1.bf16.msra.mxu0 0
    %1353 = vmatprep.mubr.bf16.mxu0 0
    %1354 = vmatmul.mubr.bf16.gmra.mrb[0].mxu0 %v1320
    %v1355 = vpop.f32.mrb[0].mxu0
    %v1356 = vadd.f32 0.0, %v1355
    %v1357 = vpop.f32.mrb[0].mxu0
    %v1358 = vadd.f32 0.0, %v1357
    %v1359 = vpop.f32.mrb[0].mxu0
    %v1360 = vpop.f32.mrb[0].mxu0
    %1361 = vdwg.mxu0
    %1362 = vmatprep.subr.bf16.mxu0 %v483
    %1363 = vmatpush1.bf16.msra.mxu0 %v482
    %1364 = vmatprep.subr.bf16.mxu0 %v487
    %1365 = vmatpush1.bf16.msra.mxu0 %v486
    %1366 = vmatprep.subr.bf16.mxu0 %v491
    %1367 = vmatpush1.bf16.msra.mxu0 %v490
    %1368 = vmatprep.subr.bf16.mxu0 %v495
    %1369 = vmatpush1.bf16.msra.mxu0 %v494
    %1370 = vmatprep.subr.bf16.mxu0 %v499
    %1371 = vmatpush1.bf16.msra.mxu0 %v498
    %1372 = vmatprep.subr.bf16.mxu0 %v503
    %1373 = vmatpush1.bf16.msra.mxu0 %v502
    %1374 = vmatprep.subr.bf16.mxu0 %v507
    %1375 = vmatpush1.bf16.msra.mxu0 %v506
    %1376 = vmatprep.subr.bf16.mxu0 %v511
    %1377 = vmatpush1.bf16.msra.mxu0 %v510
    %1378 = vmatprep.subr.bf16.mxu0 0
    %1379 = vmatpush1.bf16.msra.mxu0 0
    %1380 = vmatprep.subr.bf16.mxu0 0
    %1381 = vmatpush1.bf16.msra.mxu0 0
    %1382 = vmatprep.subr.bf16.mxu0 0
    %1383 = vmatpush1.bf16.msra.mxu0 0
    %1384 = vmatprep.subr.bf16.mxu0 0
    %1385 = vmatpush1.bf16.msra.mxu0 0
    %1386 = vmatprep.subr.bf16.mxu0 0
    %1387 = vmatpush1.bf16.msra.mxu0 0
    %1388 = vmatprep.subr.bf16.mxu0 0
    %1389 = vmatpush1.bf16.msra.mxu0 0
    %1390 = vmatprep.subr.bf16.mxu0 0
    %1391 = vmatpush1.bf16.msra.mxu0 0
    %1392 = vmatprep.subr.bf16.mxu0 0
    %1393 = vmatpush1.bf16.msra.mxu0 0
    %1394 = vmatprep.mubr.bf16.mxu0 0
    %1395 = vmatmul.mubr.bf16.gmra.mrb[0].mxu0 %v1320
    %v1396 = vpop.f32.mrb[0].mxu0
    %v1397 = vadd.f32 0.0, %v1396
    %v1398 = vpop.f32.mrb[0].mxu0
    %v1399 = vadd.f32 0.0, %v1398
    %v1400 = vpop.f32.mrb[0].mxu0
    %v1401 = vpop.f32.mrb[0].mxu0
    %1402 = vdwg.mxu0
    %v1403 = vadd.f32 %v275, %v1356
    %v1404 = vadd.f32 %v277, %v1358
    %v1405 = vadd.f32 %v348, %v1397
    %v1406 = vadd.f32 %v350, %v1399
    %v1407 = vxor.u32 %v1403, 2147483648
    %v1408 = vmul.f32 %v1407, 1.442695
    %v1409 = vpow.pop %v1408
    %v1410 = vadd.f32 %v1409, 1.0
    %v1411 = vrcp.pop %v1410
    %v1412 = vmul.f32 1.0, %v1411
    %v1413 = vxor.u32 %v1404, 2147483648
    %v1414 = vmul.f32 %v1413, 1.442695
    %v1415 = vpow.pop %v1414
    %v1416 = vadd.f32 %v1415, 1.0
    %v1417 = vrcp.pop %v1416
    %v1418 = vmul.f32 1.0, %v1417
    %v1419 = vtanh.pop %v1405
    %v1420 = vxor.u32 %v1406, 2147483648
    %v1421 = vmul.f32 %v1420, 1.442695
    %v1422 = vpow.pop %v1421
    %v1423 = vadd.f32 %v1422, 1.0
    %v1424 = vrcp.pop %v1423
    %v1425 = vmul.f32 1.0, %v1424
    %v1426 = vmul.f32 %v1418, %v1317
    %v1427 = vmul.f32 %v1412, %v1419
    %v1428 = vadd.f32 %v1426, %v1427
    %v1429 = vtanh.pop %v1428
    %v1430 = vmul.f32 %v1425, %v1429
    %v1431 = vld [vmem:[#allocation7] sm:$0xff]
    %v1432 = vld [vmem:[#allocation7 + $0x8] sm:$0xff]
    %v1433 = vld [vmem:[#allocation7 + $0x10] sm:$0xff]
    %v1434 = vld [vmem:[#allocation7 + $0x18] sm:$0xff]
    %v1435 = vld [vmem:[%s4] sm:$0xf]
    %v1437 = vlaneseq
    %v1438 = vshrl.u32 %v1437, 7
    %v1439 = vsub.s32 0, %v1438
    %v1440 = vrot.slane %v1435, %v1439
    %v1441 = vlaneseq
    %v1442 = vshrl.u32 %v1441, 7
    %v1443 = vsub.s32 2, %v1442
    %v1444 = vrot.slane %v1435, %v1443
    %v1445 = vlaneseq
    %v1446 = vshrl.u32 %v1445, 7
    %v1447 = vsub.s32 3, %v1446
    %v1448 = vrot.slane %v1435, %v1447
    %v1456 = vunpack.c.l.b16 %v1431
    %v1457 = vunpack.c.h.b16 %v1431
    %v1458 = vunpack.c.l.b16 %v1432
    %v1459 = vunpack.c.h.b16 %v1432
    %v1460 = vunpack.c.l.b16 %v1433
    %v1461 = vunpack.c.h.b16 %v1433
    %v1462 = vunpack.c.l.b16 %v1434
    %v1463 = vunpack.c.h.b16 %v1434
    %v1464 = vpack.c.b16 %v1460, %v1456
    %v1465 = vpack.c.b16 %v1461, %v1457
    %v1466 = vpack.c.b16 %v1462, %v1458
    %v1467 = vpack.c.b16 %v1463, %v1459
    %v1473 = vsel %vm193, %v126, 0
    %1475 = vmatprep.subr.bf16.mxu0 %v1465
    %1476 = vmatpush1.bf16.msra.mxu0 %v1464
    %1477 = vmatprep.subr.bf16.mxu0 0
    %1478 = vmatpush1.bf16.msra.mxu0 0
    %1479 = vmatprep.subr.bf16.mxu0 0
    %1480 = vmatpush1.bf16.msra.mxu0 0
    %1481 = vmatprep.subr.bf16.mxu0 0
    %1482 = vmatpush1.bf16.msra.mxu0 0
    %1483 = vmatprep.subr.bf16.mxu0 0
    %1484 = vmatpush1.bf16.msra.mxu0 0
    %1485 = vmatprep.subr.bf16.mxu0 0
    %1486 = vmatpush1.bf16.msra.mxu0 0
    %1487 = vmatprep.subr.bf16.mxu0 0
    %1488 = vmatpush1.bf16.msra.mxu0 0
    %1489 = vmatprep.subr.bf16.mxu0 0
    %1490 = vmatpush1.bf16.msra.mxu0 0
    %1491 = vmatprep.subr.bf16.mxu0 0
    %1492 = vmatpush1.bf16.msra.mxu0 0
    %1493 = vmatprep.subr.bf16.mxu0 0
    %1494 = vmatpush1.bf16.msra.mxu0 0
    %1495 = vmatprep.subr.bf16.mxu0 0
    %1496 = vmatpush1.bf16.msra.mxu0 0
    %1497 = vmatprep.subr.bf16.mxu0 0
    %1498 = vmatpush1.bf16.msra.mxu0 0
    %1499 = vmatprep.subr.bf16.mxu0 0
    %1500 = vmatpush1.bf16.msra.mxu0 0
    %1501 = vmatprep.subr.bf16.mxu0 0
    %1502 = vmatpush1.bf16.msra.mxu0 0
    %1503 = vmatprep.subr.bf16.mxu0 0
    %1504 = vmatpush1.bf16.msra.mxu0 0
    %1505 = vmatprep.subr.bf16.mxu0 0
    %1506 = vmatpush1.bf16.msra.mxu0 0
    %1507 = vmatprep.mubr.bf16.mxu0 0
    %1508 = vmatmul.mubr.bf16.gmra.mrb[0].mxu0 %v1473
    %v1509 = vpop.f32.mrb[0].mxu0
    %v1510 = vadd.f32 %v1440, %v1509
    %v1511 = vpop.f32.mrb[0].mxu0
    %v1512 = vpop.f32.mrb[0].mxu0
    %v1513 = vpop.f32.mrb[0].mxu0
    %1514 = vdwg.mxu0
    %1515 = vmatprep.subr.bf16.mxu0 %v1467
    %1516 = vmatpush1.bf16.msra.mxu0 %v1466
    %1517 = vmatprep.subr.bf16.mxu0 0
    %1518 = vmatpush1.bf16.msra.mxu0 0
    %1519 = vmatprep.subr.bf16.mxu0 0
    %1520 = vmatpush1.bf16.msra.mxu0 0
    %1521 = vmatprep.subr.bf16.mxu0 0
    %1522 = vmatpush1.bf16.msra.mxu0 0
    %1523 = vmatprep.subr.bf16.mxu0 0
    %1524 = vmatpush1.bf16.msra.mxu0 0
    %1525 = vmatprep.subr.bf16.mxu0 0
    %1526 = vmatpush1.bf16.msra.mxu0 0
    %1527 = vmatprep.subr.bf16.mxu0 0
    %1528 = vmatpush1.bf16.msra.mxu0 0
    %1529 = vmatprep.subr.bf16.mxu0 0
    %1530 = vmatpush1.bf16.msra.mxu0 0
    %1531 = vmatprep.subr.bf16.mxu0 0
    %1532 = vmatpush1.bf16.msra.mxu0 0
    %1533 = vmatprep.subr.bf16.mxu0 0
    %1534 = vmatpush1.bf16.msra.mxu0 0
    %1535 = vmatprep.subr.bf16.mxu0 0
    %1536 = vmatpush1.bf16.msra.mxu0 0
    %1537 = vmatprep.subr.bf16.mxu0 0
    %1538 = vmatpush1.bf16.msra.mxu0 0
    %1539 = vmatprep.subr.bf16.mxu0 0
    %1540 = vmatpush1.bf16.msra.mxu0 0
    %1541 = vmatprep.subr.bf16.mxu0 0
    %1542 = vmatpush1.bf16.msra.mxu0 0
    %1543 = vmatprep.subr.bf16.mxu0 0
    %1544 = vmatpush1.bf16.msra.mxu0 0
    %1545 = vmatprep.subr.bf16.mxu0 0
    %1546 = vmatpush1.bf16.msra.mxu0 0
    %1547 = vmatprep.mubr.bf16.mxu0 0
    %1548 = vmatmul.mubr.bf16.gmra.mrb[0].mxu0 %v1473
    %v1549 = vpop.f32.mrb[0].mxu0
    %v1550 = vadd.f32 %v1444, %v1549
    %v1551 = vpop.f32.mrb[0].mxu0
    %v1552 = vadd.f32 %v1448, %v1551
    %v1553 = vpop.f32.mrb[0].mxu0
    %v1554 = vpop.f32.mrb[0].mxu0
    %1555 = vdwg.mxu0
    %v1556 = vxor.u32 %v1510, 2147483648
    %v1557 = vmul.f32 %v1556, 1.442695
    %v1558 = vpow.pop %v1557
    %v1559 = vadd.f32 %v1558, 1.0
    %v1560 = vrcp.pop %v1559
    %v1561 = vmul.f32 1.0, %v1560
    %v1562 = vtanh.pop %v1550
    %v1563 = vxor.u32 %v1552, 2147483648
    %v1564 = vmul.f32 %v1563, 1.442695
    %v1565 = vpow.pop %v1564
    %v1566 = vadd.f32 %v1565, 1.0
    %v1567 = vrcp.pop %v1566
    %v1568 = vmul.f32 1.0, %v1567
    %v1569 = vmul.f32 %v1561, %v1562
    %v1570 = vtanh.pop %v1569
    %v1571 = vmul.f32 %v1568, %v1570
    %v1572 = vpack.c.bf16 %v1430, %v1430
    %v1573 = vld [vmem:[#allocation10] sm:$0xf]
    %v1574 = vld [vmem:[#allocation10 + $0x4] sm:$0xf]
    %v1575 = vld [vmem:[#allocation10 + $0x8] sm:$0xf]
    %v1576 = vld [vmem:[#allocation10 + $0xc] sm:$0xf]
    %v1577 = vld [vmem:[#allocation10 + $0x10] sm:$0xf]
    %v1578 = vld [vmem:[#allocation10 + $0x14] sm:$0xf]
    %v1579 = vld [vmem:[#allocation10 + $0x18] sm:$0xf]
    %v1580 = vld [vmem:[#allocation10 + $0x1c] sm:$0xf]
    %v1581 = vld [vmem:[#allocation10 + $0x20] sm:$0xf]
    %v1582 = vld [vmem:[#allocation10 + $0x24] sm:$0xf]
    %v1583 = vld [vmem:[#allocation10 + $0x28] sm:$0xf]
    %v1584 = vld [vmem:[#allocation10 + $0x2c] sm:$0xf]
    %v1585 = vld [vmem:[#allocation10 + $0x30] sm:$0xf]
    %v1586 = vld [vmem:[#allocation10 + $0x34] sm:$0xf]
    %v1587 = vld [vmem:[#allocation10 + $0x38] sm:$0xf]
    %v1588 = vld [vmem:[#allocation10 + $0x3c] sm:$0xf]
    %v1589 = vpack.c.bf16 %v1571, %v1571
    %v1590 = vld [vmem:[#allocation11] sm:$0xf]
    %v1591 = vld [vmem:[#allocation11 + $0x4] sm:$0xf]
    %v1592 = vld [vmem:[#allocation11 + $0x8] sm:$0xf]
    %v1593 = vld [vmem:[#allocation11 + $0xc] sm:$0xf]
    %v1594 = vld [vmem:[#allocation11 + $0x10] sm:$0xf]
    %v1595 = vld [vmem:[#allocation11 + $0x14] sm:$0xf]
    %v1596 = vld [vmem:[#allocation11 + $0x18] sm:$0xf]
    %v1597 = vld [vmem:[#allocation11 + $0x1c] sm:$0xf]
    %v1598 = vld [vmem:[#allocation11 + $0x20] sm:$0xf]
    %v1599 = vld [vmem:[#allocation11 + $0x24] sm:$0xf]
    %v1600 = vld [vmem:[#allocation11 + $0x28] sm:$0xf]
    %v1601 = vld [vmem:[#allocation11 + $0x2c] sm:$0xf]
    %v1602 = vld [vmem:[#allocation11 + $0x30] sm:$0xf]
    %v1603 = vld [vmem:[#allocation11 + $0x34] sm:$0xf]
    %v1604 = vld [vmem:[#allocation11 + $0x38] sm:$0xf]
    %v1605 = vld [vmem:[#allocation11 + $0x3c] sm:$0xf]
    %v1622 = vunpack.c.l.b16 %v1590
    %v1623 = vunpack.c.l.b16 %v1591
    %v1624 = vunpack.c.l.b16 %v1592
    %v1625 = vunpack.c.l.b16 %v1593
    %v1626 = vunpack.c.l.b16 %v1594
    %v1627 = vunpack.c.l.b16 %v1595
    %v1628 = vunpack.c.l.b16 %v1596
    %v1629 = vunpack.c.l.b16 %v1597
    %v1630 = vunpack.c.l.b16 %v1598
    %v1631 = vunpack.c.l.b16 %v1599
    %v1632 = vunpack.c.l.b16 %v1600
    %v1633 = vunpack.c.l.b16 %v1601
    %v1634 = vunpack.c.l.b16 %v1602
    %v1635 = vunpack.c.l.b16 %v1603
    %v1636 = vunpack.c.l.b16 %v1604
    %v1637 = vunpack.c.l.b16 %v1605
    %v1638 = vpack.c.b16 %v1623, %v1622
    %v1639 = vpack.c.b16 %v1625, %v1624
    %v1640 = vpack.c.b16 %v1627, %v1626
    %v1641 = vpack.c.b16 %v1629, %v1628
    %v1642 = vpack.c.b16 %v1631, %v1630
    %v1643 = vpack.c.b16 %v1633, %v1632
    %v1644 = vpack.c.b16 %v1635, %v1634
    %v1645 = vpack.c.b16 %v1637, %v1636
    %1654 = vmatprep.subr.bf16.mxu0 0
    %1655 = vmatpush1.bf16.msra.mxu0 %v1638
    %1656 = vmatprep.subr.bf16.mxu0 0
    %1657 = vmatpush1.bf16.msra.mxu0 %v1639
    %1658 = vmatprep.subr.bf16.mxu0 0
    %1659 = vmatpush1.bf16.msra.mxu0 %v1640
    %1660 = vmatprep.subr.bf16.mxu0 0
    %1661 = vmatpush1.bf16.msra.mxu0 %v1641
    %1662 = vmatprep.subr.bf16.mxu0 0
    %1663 = vmatpush1.bf16.msra.mxu0 %v1642
    %1664 = vmatprep.subr.bf16.mxu0 0
    %1665 = vmatpush1.bf16.msra.mxu0 %v1643
    %1666 = vmatprep.subr.bf16.mxu0 0
    %1667 = vmatpush1.bf16.msra.mxu0 %v1644
    %1668 = vmatprep.subr.bf16.mxu0 0
    %1669 = vmatpush1.bf16.msra.mxu0 %v1645
    %1670 = vmatprep.subr.bf16.mxu0 0
    %1671 = vmatpush1.bf16.msra.mxu0 0
    %1672 = vmatprep.subr.bf16.mxu0 0
    %1673 = vmatpush1.bf16.msra.mxu0 0
    %1674 = vmatprep.subr.bf16.mxu0 0
    %1675 = vmatpush1.bf16.msra.mxu0 0
    %1676 = vmatprep.subr.bf16.mxu0 0
    %1677 = vmatpush1.bf16.msra.mxu0 0
    %1678 = vmatprep.subr.bf16.mxu0 0
    %1679 = vmatpush1.bf16.msra.mxu0 0
    %1680 = vmatprep.subr.bf16.mxu0 0
    %1681 = vmatpush1.bf16.msra.mxu0 0
    %1682 = vmatprep.subr.bf16.mxu0 0
    %1683 = vmatpush1.bf16.msra.mxu0 0
    %1684 = vmatprep.subr.bf16.mxu0 0
    %1685 = vmatpush1.bf16.msra.mxu0 0
    %1686 = vmatprep.mubr.bf16.mxu0 0
    %1687 = vmatmul.mubr.bf16.gmra.mrb[0].mxu0 %v1589
    %v1688 = vpop.f32.mrb[0].mxu0
    %v1689 = vadd.f32 0.0, %v1688
    %v1690 = vpop.f32.mrb[0].mxu0
    %v1691 = vpop.f32.mrb[0].mxu0
    %v1692 = vpop.f32.mrb[0].mxu0
    %1693 = vdwg.mxu0
    %v1710 = vunpack.c.l.b16 %v1573
    %v1711 = vunpack.c.l.b16 %v1574
    %v1712 = vunpack.c.l.b16 %v1575
    %v1713 = vunpack.c.l.b16 %v1576
    %v1714 = vunpack.c.l.b16 %v1577
    %v1715 = vunpack.c.l.b16 %v1578
    %v1716 = vunpack.c.l.b16 %v1579
    %v1717 = vunpack.c.l.b16 %v1580
    %v1718 = vunpack.c.l.b16 %v1581
    %v1719 = vunpack.c.l.b16 %v1582
    %v1720 = vunpack.c.l.b16 %v1583
    %v1721 = vunpack.c.l.b16 %v1584
    %v1722 = vunpack.c.l.b16 %v1585
    %v1723 = vunpack.c.l.b16 %v1586
    %v1724 = vunpack.c.l.b16 %v1587
    %v1725 = vunpack.c.l.b16 %v1588
    %v1726 = vpack.c.b16 %v1711, %v1710
    %v1727 = vpack.c.b16 %v1713, %v1712
    %v1728 = vpack.c.b16 %v1715, %v1714
    %v1729 = vpack.c.b16 %v1717, %v1716
    %v1730 = vpack.c.b16 %v1719, %v1718
    %v1731 = vpack.c.b16 %v1721, %v1720
    %v1732 = vpack.c.b16 %v1723, %v1722
    %v1733 = vpack.c.b16 %v1725, %v1724
    %1742 = vmatprep.subr.bf16.mxu0 0
    %1743 = vmatpush1.bf16.msra.mxu0 %v1726
    %1744 = vmatprep.subr.bf16.mxu0 0
    %1745 = vmatpush1.bf16.msra.mxu0 %v1727
    %1746 = vmatprep.subr.bf16.mxu0 0
    %1747 = vmatpush1.bf16.msra.mxu0 %v1728
    %1748 = vmatprep.subr.bf16.mxu0 0
    %1749 = vmatpush1.bf16.msra.mxu0 %v1729
    %1750 = vmatprep.subr.bf16.mxu0 0
    %1751 = vmatpush1.bf16.msra.mxu0 %v1730
    %1752 = vmatprep.subr.bf16.mxu0 0
    %1753 = vmatpush1.bf16.msra.mxu0 %v1731
    %1754 = vmatprep.subr.bf16.mxu0 0
    %1755 = vmatpush1.bf16.msra.mxu0 %v1732
    %1756 = vmatprep.subr.bf16.mxu0 0
    %1757 = vmatpush1.bf16.msra.mxu0 %v1733
    %1758 = vmatprep.subr.bf16.mxu0 0
    %1759 = vmatpush1.bf16.msra.mxu0 0
    %1760 = vmatprep.subr.bf16.mxu0 0
    %1761 = vmatpush1.bf16.msra.mxu0 0
    %1762 = vmatprep.subr.bf16.mxu0 0
    %1763 = vmatpush1.bf16.msra.mxu0 0
    %1764 = vmatprep.subr.bf16.mxu0 0
    %1765 = vmatpush1.bf16.msra.mxu0 0
    %1766 = vmatprep.subr.bf16.mxu0 0
    %1767 = vmatpush1.bf16.msra.mxu0 0
    %1768 = vmatprep.subr.bf16.mxu0 0
    %1769 = vmatpush1.bf16.msra.mxu0 0
    %1770 = vmatprep.subr.bf16.mxu0 0
    %1771 = vmatpush1.bf16.msra.mxu0 0
    %1772 = vmatprep.subr.bf16.mxu0 0
    %1773 = vmatpush1.bf16.msra.mxu0 0
    %1774 = vmatprep.mubr.bf16.mxu0 0
    %1775 = vmatmul.mubr.bf16.gmra.mrb[0].mxu0 %v1572
    %v1776 = vpop.f32.mrb[0].mxu0
    %v1777 = vadd.f32 %v1689, %v1776
    %v1778 = vpop.f32.mrb[0].mxu0
    %v1779 = vpop.f32.mrb[0].mxu0
    %v1780 = vpop.f32.mrb[0].mxu0
    %1781 = vdwg.mxu0
    %v1782 = vld [vmem:[%s8] sm:$0x1]
    %v1784 = vlaneseq
    %v1785 = vshrl.u32 %v1784, 7
    %v1786 = vsub.s32 0, %v1785
    %v1787 = vrot.slane %v1782, %v1786
    %v1789 = vadd.f32 %v1777, %v1787
    %1790 = vst [vmem:[#allocation13] sm:$0xff] %v1789
    %v1791 = vxor.u32 %v1789, 2147483648
    %v1792 = vmul.f32 %v1791, 1.442695
    %v1793 = vpow.pop %v1792
    %v1794 = vadd.f32 %v1793, 1.0
    %v1795 = vrcp.pop %v1794
    %v1796 = vmul.f32 1.0, %v1795
    %1797 = vst [vmem:[#allocation14] sm:$0xff] %v1796
    // Predicated region
    $region62: #{tpu_custom_call.1} parent=1 // pred_check
      _
    $region63: #{tpu_custom_call.1} parent=1 // pred_check_branch
      %1799 = sbr.rel (0) target = $region65
    $region64: #{tpu_custom_call.1} parent=1 // pred_region
      %s1801 = ssub.s32 128, 128
      %1802 = vsyncadd [#allocation4], %s1801
      %s1804 = sshll.u32 [#allocation13], 4
      %s1805 = int_to_ptr.vmem [resolvable:$true] %s1804
      %1807 = dma.vmem_to_hbm [thread:$0]  %s1805, 128, %s9, [#allocation4]
    $region65: #{tpu_custom_call.1} parent=1 // pred_fallthru
      _
    // Predicated region
    $region66: #{tpu_custom_call.1} parent=1 // pred_check
      _
    $region67: #{tpu_custom_call.1} parent=1 // pred_check_branch
      %1809 = sbr.rel (0) target = $region69
    $region68: #{tpu_custom_call.1} parent=1 // pred_region
      %s1811 = ssub.s32 128, 128
      %1812 = vsyncadd [#allocation15], %s1811
      %s1814 = sshll.u32 [#allocation14], 4
      %s1815 = int_to_ptr.vmem [resolvable:$true] %s1814
      %1817 = dma.vmem_to_hbm [thread:$0]  %s1815, 128, %s10, [#allocation15]
    $region69: #{tpu_custom_call.1} parent=1 // pred_fallthru
      _
    // Predicated region
    $region70: #{tpu_custom_call.1} parent=1 // pred_check
      _
    $region71: #{tpu_custom_call.1} parent=1 // pred_check_branch
      %1819 = sbr.rel (0) target = $region73
    $region72: #{tpu_custom_call.1} parent=1 // pred_region
      %1820 = dma.done [#allocation4], 128
    $region73: #{tpu_custom_call.1} parent=1 // pred_fallthru
      _
    // Predicated region
    $region74: #{tpu_custom_call.1} parent=1 // pred_check
      _
    $region75: #{tpu_custom_call.1} parent=1 // pred_check_branch
      %1822 = sbr.rel (0) target = $region77
    $region76: #{tpu_custom_call.1} parent=1 // pred_region
      %1823 = dma.done [#allocation15], 128
    $region77: #{tpu_custom_call.1} parent=1 // pred_fallthru
      _
    %1824 = vsyncpa [#allocation3], 1
    %1825 = vsyncpa [#allocation6], 1
    %1826 = vsyncpa [#allocation9], 1
    %1827 = vsyncpa [#allocation12], 1
    %1828 = vsyncpa [#allocation4], 1
    %1829 = vsyncpa [#allocation15], 1

</llo_original>
